<compile_context>
chip_gen: v6e
topology: v6e:2x2x1
jax: 0.10.0
libtpu: 0.0.40
codegen_flags: <defaults>
</compile_context>

<pallas_src>
import functools

import jax
import jax.numpy as jnp
from jax.experimental import pallas as pl
from jax.experimental.pallas import tpu as pltpu


# ----------------------------------------------------------------------------
# Fused kernel: one grid step == TB images, whole network
# ----------------------------------------------------------------------------
def tiny_vgg_kernel(x_ref, wc_ref, bc_ref, gm_ref, wl_ref, bl_ref, o_ref,
                    act_a, act_b, slab_ref,
                    *, CP, RS, HWP, PAD, SEGW, N, TB, NCLS, NCLSP, mm_dtype):
    """Whole TinyVGG forward for one batch tile of TB images.

    x_ref : (1, CP, WTOT)      TB images laid out on the lane axis; per-image
                               window [PAD + b*SEGW, ... + HWP); gutters, gaps
                               and halos are zero (host-packed)
    wc_ref: (4, CP, 9*CP)      conv weights, column (ky*3+kx)*CP + c_in
    bc_ref: (4, CP, 1)         conv biases
    gm_ref: (1, N)             valid-column mask over the compute window
    wl_ref: (HWP, CP*NCLS)     classifier weight scattered on the stride-4
                               lattice; column c*NCLS + o belongs to channel c
    bl_ref: (1, NCLSP)         classifier bias (lane-padded)
    o_ref : (1, TB, NCLSP)     lane-dense logits block
    act_a, act_b : (CP, WTOT)  persistent ping-pong activation buffers
    slab_ref     : (9*CP, N)   persistent 9-tap slab (matmul RHS, f32)
    """
    f32 = jnp.float32
    halo = jnp.zeros((CP, PAD), f32)

    # Re-zero the halo columns of both activation buffers every step so the
    # shifted tap reads outside [PAD, PAD+N) always see zeros.  Cheap, and
    # safe when the "parallel" grid axis is split across TensorCores.
    for buf in (act_a, act_b):
        buf[:, 0:PAD] = halo
        buf[:, PAD + N:PAD + N + PAD] = halo

    def conv(layer, step, read):
        # 3x3 "same" conv as ONE (CP, 9*CP) @ (9*CP, N) matmul; `step` dilates
        # the taps for activations living on a sparse lattice after pooling.
        t = 0
        for ky in (-1, 0, 1):
            for kx in (-1, 0, 1):
                off = PAD + ky * step * RS + kx * step
                slab_ref[t * CP:(t + 1) * CP, :] = read(off)
                t += 1
        y = jnp.dot(wc_ref[layer], slab_ref[...].astype(mm_dtype),
                    preferred_element_type=f32)                    # (CP, N)
        return jnp.maximum(y + bc_ref[layer], 0.0) * gm_ref[...]   # bias+ReLU

    def pool(src, step):
        # 2x2 / stride-2 max pool, in place on the lane grid; meaningful
        # values end up on a lattice of stride 2*step.
        m = src[:, PAD:PAD + N]
        for off in (step, step * RS, step * RS + step):
            m = jnp.maximum(m, src[:, PAD + off:PAD + off + N])
        return m * gm_ref[...]

    read_x = lambda off: x_ref[0, :, off:off + N]
    read_a = lambda off: act_a[:, off:off + N]
    read_b = lambda off: act_b[:, off:off + N]

    # vggBlock1 (dense 28x28 lattice)
    act_a[:, PAD:PAD + N] = conv(0, 1, read_x)
    act_b[:, PAD:PAD + N] = conv(1, 1, read_a)
    act_a[:, PAD:PAD + N] = pool(act_b, 1)           # -> stride-2 lattice
    # vggBlock2 (dilated taps on the stride-2 lattice)
    act_b[:, PAD:PAD + N] = conv(2, 2, read_a)
    act_a[:, PAD:PAD + N] = conv(3, 2, read_b)
    act_b[:, PAD:PAD + N] = pool(act_a, 2)           # -> stride-4 lattice

    # classifier: per image, (CP, HWP) @ (HWP, CP*NCLS); column c*NCLS+o of
    # the scattered weight belongs to channel c, so the logits are the sum of
    # the CP diagonal (1, NCLS) blocks.  All TB rows are packed into one
    # lane-dense (TB, NCLSP) block and stored once.
    wlv = wl_ref[...]
    row_id = jax.lax.broadcasted_iota(jnp.int32, (TB, 1), 0)
    lane_pad = jnp.zeros((1, NCLSP - NCLS), f32)
    blk = jnp.zeros((TB, NCLSP), f32)
    for b in range(TB):
        base = PAD + b * SEGW
        feat = act_b[:, base:base + HWP].astype(mm_dtype)
        m = jnp.dot(feat, wlv, preferred_element_type=f32)        # (CP, CP*NCLS)
        row = m[0:1, 0:NCLS]
        for c in range(1, CP):
            row = row + m[c:c + 1, c * NCLS:(c + 1) * NCLS]
        row = jnp.concatenate([row, lane_pad], axis=1)            # (1, NCLSP)
        blk = blk + jnp.where(row_id == b, 1.0, 0.0) * row
    o_ref[0] = blk + bl_ref[...]


# ----------------------------------------------------------------------------
# Wrapper: host-side packing + single pallas_call
# ----------------------------------------------------------------------------
def _round_up(v, m):
    return -(-v // m) * m


def tiny_vgg_forward(x_nchw, params, *, tb=None, mm_dtype=jnp.bfloat16):
    B, Cin, H, W = x_nchw.shape
    hidden = params["w1"].shape[-1]
    NCLS = params["wl"].shape[-1]
    assert H % 4 == 0 and W % 4 == 0
    f32 = jnp.float32

    CP = _round_up(max(hidden, Cin, 8), 8)   # channels padded to sublanes
    RS = W + 4                               # row stride (W + 4-col zero gutter)
    HWP = H * RS
    PAD = 128                                # inter-image / outer zero halo
    SEGW = HWP + PAD                         # per-image lane segment
    NCLSP = 128                              # lane-dense logits width
    assert 2 * RS + 2 <= PAD                 # max dilated tap reach fits halo

    if tb is None:                           # images per grid step; keep >= 2
        tb = max(1, min(8, (B + 1) // 2))    # grid steps so both v7x TCs work
    nbt = -(-B // tb)
    Bp = nbt * tb
    N = tb * SEGW                            # matmul N width per grid step
    WTOT = N + 2 * PAD

    # input: NCHW -> (nbt, CP, WTOT); gutters, inter-image gaps, halos = 0
    xk = jnp.pad(x_nchw.astype(f32),
                 ((0, Bp - B), (0, CP - Cin), (0, 0), (0, RS - W)))
    xk = xk.reshape(Bp, CP, HWP)
    xk = jnp.pad(xk, ((0, 0), (0, 0), (0, SEGW - HWP)))
    xk = xk.reshape(nbt, tb, CP, SEGW).transpose(0, 2, 1, 3)
    xk = xk.reshape(nbt, CP, tb * SEGW)
    xk = jnp.pad(xk, ((0, 0), (0, 0), (PAD, PAD)))

    # conv weights: (3,3,ci,co) -> (CP, 9*CP); column (ky*3+kx)*CP + ci
    def prep_w(w):
        ci, co = w.shape[2], w.shape[3]
        wp = jnp.pad(w.astype(f32), ((0, 0), (0, 0), (0, CP - ci), (0, CP - co)))
        return jnp.transpose(wp, (3, 0, 1, 2)).reshape(CP, 9 * CP)

    def prep_b(b):
        return jnp.pad(b.astype(f32), (0, CP - b.shape[0])).reshape(CP, 1)

    wc = jnp.stack([prep_w(params[k]) for k in ("w1", "w2", "w3", "w4")]
                   ).astype(mm_dtype)                              # (4,CP,9CP)
    bc = jnp.stack([prep_b(params[k]) for k in ("b1", "b2", "b3", "b4")])

    # valid-column mask over the compute window [PAD, PAD+N)
    j = jnp.arange(N, dtype=jnp.int32)
    jl = j % SEGW
    gm = ((jl < HWP) & (jl % RS < W)).astype(f32).reshape(1, N)

    # classifier weight: PyTorch (c, i, j) flatten scattered to lane 4*i*RS+4*j
    Ho, Wo = H // 4, W // 4
    wl = params["wl"].astype(f32).reshape(hidden, Ho, Wo, NCLS)
    wl = jnp.pad(jnp.transpose(wl, (1, 2, 0, 3)),
                 ((0, 0), (0, 0), (0, CP - hidden), (0, 0)))       # (Ho,Wo,CP,O)
    rows = (4 * jnp.arange(Ho)[:, None] * RS
            + 4 * jnp.arange(Wo)[None, :]).reshape(-1)
    wl_s = jnp.zeros((HWP, CP, NCLS), f32).at[rows].set(
        wl.reshape(Ho * Wo, CP, NCLS)).reshape(HWP, CP * NCLS).astype(mm_dtype)

    bl = jnp.pad(params["bl"].astype(f32), (0, NCLSP - NCLS)).reshape(1, NCLSP)

    kernel = functools.partial(
        tiny_vgg_kernel, CP=CP, RS=RS, HWP=HWP, PAD=PAD, SEGW=SEGW, N=N,
        TB=tb, NCLS=NCLS, NCLSP=NCLSP, mm_dtype=mm_dtype)

    out = pl.pallas_call(
        kernel,
        out_shape=jax.ShapeDtypeStruct((nbt, tb, NCLSP), f32),
        grid=(nbt,),
        in_specs=[
            pl.BlockSpec((1, CP, WTOT), lambda i: (i, 0, 0)),
            pl.BlockSpec((4, CP, 9 * CP), lambda i: (0, 0, 0)),
            pl.BlockSpec((4, CP, 1), lambda i: (0, 0, 0)),
            pl.BlockSpec((1, N), lambda i: (0, 0)),
            pl.BlockSpec((HWP, CP * NCLS), lambda i: (0, 0)),
            pl.BlockSpec((1, NCLSP), lambda i: (0, 0)),
        ],
        out_specs=pl.BlockSpec((1, tb, NCLSP), lambda i: (i, 0, 0)),
        scratch_shapes=[
            pltpu.VMEM((CP, WTOT), f32),     # activation ping
            pltpu.VMEM((CP, WTOT), f32),     # activation pong
            pltpu.VMEM((9 * CP, N), f32),    # 9-tap conv slab (K = 9*CP)
        ],
        compiler_params=pltpu.CompilerParams(
            dimension_semantics=("parallel",)),
    )(xk, wc, bc, gm, wl_s, bl)
    return out.reshape(Bp, NCLSP)[:B, :NCLS]


# ----------------------------------------------------------------------------
# Pure-JAX reference (high precision) + deterministic init
# ----------------------------------------------------------------------------
def reference_forward(x_nchw, params):
    prec = jax.lax.Precision.HIGHEST

    def conv(a, w_hwio, b):
        w_oihw = jnp.transpose(w_hwio, (3, 2, 0, 1))
        y = jax.lax.conv_general_dilated(
            a, w_oihw, (1, 1), ((1, 1), (1, 1)),
            dimension_numbers=("NCHW", "OIHW", "NCHW"), precision=prec)
        return y + b.reshape(1, -1, 1, 1)

    def pool(a):
        return jax.lax.reduce_window(a, -jnp.inf, jax.lax.max,
                                     (1, 1, 2, 2), (1, 1, 2, 2), "VALID")

    a = jax.nn.relu(conv(x_nchw, params["w1"], params["b1"]))
    a = jax.nn.relu(conv(a, params["w2"], params["b2"]))
    a = pool(a)
    a = jax.nn.relu(conv(a, params["w3"], params["b3"]))
    a = jax.nn.relu(conv(a, params["w4"], params["b4"]))
    a = pool(a)
    feat = a.reshape(a.shape[0], -1)            # NCHW flatten == PyTorch
    return jnp.dot(feat, params["wl"], precision=prec) + params["bl"]


def init_params(key, in_ch, hidden, n_classes):
    ks = jax.random.split(key, 10)

    def conv_init(kw, kb, ci, co):
        bound = 1.0 / (ci * 9) ** 0.5
        w = jax.random.uniform(kw, (3, 3, ci, co), jnp.float32, -bound, bound)
        b = jax.random.uniform(kb, (co,), jnp.float32, -bound, bound)
        return w, b

    p = {}
    p["w1"], p["b1"] = conv_init(ks[0], ks[1], in_ch, hidden)
    p["w2"], p["b2"] = conv_init(ks[2], ks[3], hidden, hidden)
    p["w3"], p["b3"] = conv_init(ks[4], ks[5], hidden, hidden)
    p["w4"], p["b4"] = conv_init(ks[6], ks[7], hidden, hidden)
    fan_in = hidden * 7 * 7
    bound = 1.0 / fan_in ** 0.5
    p["wl"] = jax.random.uniform(ks[8], (fan_in, n_classes), jnp.float32,
                                 -bound, bound)
    p["bl"] = jax.random.uniform(ks[9], (n_classes,), jnp.float32,
                                 -bound, bound)
    return p


if __name__ == "__main__":
    key = jax.random.PRNGKey(0)
    kx, kx2, kp = jax.random.split(key, 3)

    Cin, hidden, n_classes = 3, 8, 10
    H = W = 28  # classifier's hidden*7*7 in_features implies 28x28 inputs

    params = init_params(kp, Cin, hidden, n_classes)

    # 1) f32 matmul operands, TB=1 path (grid=2): tight check vs. reference.
    B1 = 2
    x1 = jax.random.normal(kx, (B1, Cin, H, W), jnp.float32)
    out32 = jax.block_until_ready(
        tiny_vgg_forward(x1, params, mm_dtype=jnp.float32))
    assert out32.shape == (B1, n_classes), out32.shape
    ref1 = reference_forward(x1, params)
    err32 = float(jnp.max(jnp.abs(out32 - ref1)))
    assert jnp.allclose(out32, ref1, atol=2e-3, rtol=2e-3), (
        "f32 path max abs err %e" % err32)

    # 2) default bf16 matmul operands (v6e/v7x MXU native, f32 accumulation),
    #    batched TB=3 path with batch padding (B=5 -> grid=2).
    B2 = 5
    x2 = jax.random.normal(kx2, (B2, Cin, H, W), jnp.float32)
    outbf = jax.block_until_ready(tiny_vgg_forward(x2, params))
    assert outbf.shape == (B2, n_classes), outbf.shape
    ref2 = reference_forward(x2, params)
    errbf = float(jnp.max(jnp.abs(outbf - ref2)))
    assert jnp.allclose(outbf, ref2, atol=3e-2, rtol=3e-2), (
        "bf16 path max abs err %e" % errbf)

    print("KERNEL_OK")
</pallas_src>

<mosaic_0001>
module attributes {stable_mosaic.version = 11 : i64} {
  func.func @tiny_vgg_kernel(%arg0: i32, %arg1: memref<1x8x1280xf32, #tpu.memory_space<vmem>>, %arg2: memref<4x8x72xf32, #tpu.memory_space<vmem>>, %arg3: memref<4x8x1xf32, #tpu.memory_space<vmem>>, %arg4: memref<1x1024xf32, #tpu.memory_space<vmem>>, %arg5: memref<896x80xf32, #tpu.memory_space<vmem>>, %arg6: memref<1x128xf32, #tpu.memory_space<vmem>>, %arg7: memref<1x1x128xf32, #tpu.memory_space<vmem>>, %arg8: memref<8x1280xf32, #tpu.memory_space<vmem>>, %arg9: memref<8x1280xf32, #tpu.memory_space<vmem>>, %arg10: memref<72x1024xf32, #tpu.memory_space<vmem>>) attributes {dimension_semantics = [#tpu.dimension_semantics<parallel>], iteration_bounds = array<i64: 2>, scalar_prefetch = 0 : i64, scratch_operands = 3 : i64, tpu.core_type = #tpu.core_type<tc>, window_params = [{transform_indices = @transform_0, window_bounds = array<i64: 1, 8, 1280>}, {pipeline_mode = #tpu.pipeline_mode<synchronous>, transform_indices = @transform_1, window_bounds = array<i64: 4, 8, 72>}, {pipeline_mode = #tpu.pipeline_mode<synchronous>, transform_indices = @transform_2, window_bounds = array<i64: 4, 8, 1>}, {pipeline_mode = #tpu.pipeline_mode<synchronous>, transform_indices = @transform_3, window_bounds = array<i64: 1, 1024>}, {pipeline_mode = #tpu.pipeline_mode<synchronous>, transform_indices = @transform_4, window_bounds = array<i64: 896, 80>}, {pipeline_mode = #tpu.pipeline_mode<synchronous>, transform_indices = @transform_5, window_bounds = array<i64: 1, 128>}, {transform_indices = @transform_6, window_bounds = array<i64: 1, 1, 128>}]} {
    %cst = arith.constant 0.000000e+00 : f32
    %0 = vector.broadcast %cst : f32 to vector<8x128xf32>
    %c0 = arith.constant 0 : index
    %c0_0 = arith.constant 0 : index
    %1 = vector.load %arg8[%c0, %c0_0] : memref<8x1280xf32, #tpu.memory_space<vmem>>, vector<8x128xf32>
    tpu.vector_store %arg8[%c0, %c0_0], %0 {strides = array<i32>} : memref<8x1280xf32, #tpu.memory_space<vmem>>, vector<8x128xf32>,
    %c0_1 = arith.constant 0 : index
    %c1152 = arith.constant 1152 : index
    %2 = vector.load %arg8[%c0_1, %c1152] : memref<8x1280xf32, #tpu.memory_space<vmem>>, vector<8x128xf32>
    tpu.vector_store %arg8[%c0_1, %c1152], %0 {strides = array<i32>} : memref<8x1280xf32, #tpu.memory_space<vmem>>, vector<8x128xf32>,
    %c0_2 = arith.constant 0 : index
    %c0_3 = arith.constant 0 : index
    %3 = vector.load %arg9[%c0_2, %c0_3] : memref<8x1280xf32, #tpu.memory_space<vmem>>, vector<8x128xf32>
    tpu.vector_store %arg9[%c0_2, %c0_3], %0 {strides = array<i32>} : memref<8x1280xf32, #tpu.memory_space<vmem>>, vector<8x128xf32>,
    %c0_4 = arith.constant 0 : index
    %c1152_5 = arith.constant 1152 : index
    %4 = vector.load %arg9[%c0_4, %c1152_5] : memref<8x1280xf32, #tpu.memory_space<vmem>>, vector<8x128xf32>
    tpu.vector_store %arg9[%c0_4, %c1152_5], %0 {strides = array<i32>} : memref<8x1280xf32, #tpu.memory_space<vmem>>, vector<8x128xf32>,
    %c0_6 = arith.constant 0 : index
    %c0_7 = arith.constant 0 : index
    %c95 = arith.constant 95 : index
    %5 = vector.load %arg1[%c0_6, %c0_7, %c95] : memref<1x8x1280xf32, #tpu.memory_space<vmem>>, vector<1x8x1024xf32>
    %6 = vector.shape_cast %5 : vector<1x8x1024xf32> to vector<8x1024xf32>
    %c0_8 = arith.constant 0 : index
    %c0_9 = arith.constant 0 : index
    %7 = vector.load %arg10[%c0_8, %c0_9] : memref<72x1024xf32, #tpu.memory_space<vmem>>, vector<8x1024xf32>
    tpu.vector_store %arg10[%c0_8, %c0_9], %6 {strides = array<i32>} : memref<72x1024xf32, #tpu.memory_space<vmem>>, vector<8x1024xf32>,
    %c0_10 = arith.constant 0 : index
    %c0_11 = arith.constant 0 : index
    %c96 = arith.constant 96 : index
    %8 = vector.load %arg1[%c0_10, %c0_11, %c96] : memref<1x8x1280xf32, #tpu.memory_space<vmem>>, vector<1x8x1024xf32>
    %9 = vector.shape_cast %8 : vector<1x8x1024xf32> to vector<8x1024xf32>
    %c8 = arith.constant 8 : index
    %c0_12 = arith.constant 0 : index
    %10 = vector.load %arg10[%c8, %c0_12] : memref<72x1024xf32, #tpu.memory_space<vmem>>, vector<8x1024xf32>
    tpu.vector_store %arg10[%c8, %c0_12], %9 {strides = array<i32>} : memref<72x1024xf32, #tpu.memory_space<vmem>>, vector<8x1024xf32>,
    %c0_13 = arith.constant 0 : index
    %c0_14 = arith.constant 0 : index
    %c97 = arith.constant 97 : index
    %11 = vector.load %arg1[%c0_13, %c0_14, %c97] : memref<1x8x1280xf32, #tpu.memory_space<vmem>>, vector<1x8x1024xf32>
    %12 = vector.shape_cast %11 : vector<1x8x1024xf32> to vector<8x1024xf32>
    %c16 = arith.constant 16 : index
    %c0_15 = arith.constant 0 : index
    %13 = vector.load %arg10[%c16, %c0_15] : memref<72x1024xf32, #tpu.memory_space<vmem>>, vector<8x1024xf32>
    tpu.vector_store %arg10[%c16, %c0_15], %12 {strides = array<i32>} : memref<72x1024xf32, #tpu.memory_space<vmem>>, vector<8x1024xf32>,
    %c0_16 = arith.constant 0 : index
    %c0_17 = arith.constant 0 : index
    %c127 = arith.constant 127 : index
    %14 = vector.load %arg1[%c0_16, %c0_17, %c127] : memref<1x8x1280xf32, #tpu.memory_space<vmem>>, vector<1x8x1024xf32>
    %15 = vector.shape_cast %14 : vector<1x8x1024xf32> to vector<8x1024xf32>
    %c24 = arith.constant 24 : index
    %c0_18 = arith.constant 0 : index
    %16 = vector.load %arg10[%c24, %c0_18] : memref<72x1024xf32, #tpu.memory_space<vmem>>, vector<8x1024xf32>
    tpu.vector_store %arg10[%c24, %c0_18], %15 {strides = array<i32>} : memref<72x1024xf32, #tpu.memory_space<vmem>>, vector<8x1024xf32>,
    %c0_19 = arith.constant 0 : index
    %c0_20 = arith.constant 0 : index
    %c128 = arith.constant 128 : index
    %17 = vector.load %arg1[%c0_19, %c0_20, %c128] : memref<1x8x1280xf32, #tpu.memory_space<vmem>>, vector<1x8x1024xf32>
    %18 = vector.shape_cast %17 : vector<1x8x1024xf32> to vector<8x1024xf32>
    %c32 = arith.constant 32 : index
    %c0_21 = arith.constant 0 : index
    %19 = vector.load %arg10[%c32, %c0_21] : memref<72x1024xf32, #tpu.memory_space<vmem>>, vector<8x1024xf32>
    tpu.vector_store %arg10[%c32, %c0_21], %18 {strides = array<i32>} : memref<72x1024xf32, #tpu.memory_space<vmem>>, vector<8x1024xf32>,
    %c0_22 = arith.constant 0 : index
    %c0_23 = arith.constant 0 : index
    %c129 = arith.constant 129 : index
    %20 = vector.load %arg1[%c0_22, %c0_23, %c129] : memref<1x8x1280xf32, #tpu.memory_space<vmem>>, vector<1x8x1024xf32>
    %21 = vector.shape_cast %20 : vector<1x8x1024xf32> to vector<8x1024xf32>
    %c40 = arith.constant 40 : index
    %c0_24 = arith.constant 0 : index
    %22 = vector.load %arg10[%c40, %c0_24] : memref<72x1024xf32, #tpu.memory_space<vmem>>, vector<8x1024xf32>
    tpu.vector_store %arg10[%c40, %c0_24], %21 {strides = array<i32>} : memref<72x1024xf32, #tpu.memory_space<vmem>>, vector<8x1024xf32>,
    %c0_25 = arith.constant 0 : index
    %c0_26 = arith.constant 0 : index
    %c159 = arith.constant 159 : index
    %23 = vector.load %arg1[%c0_25, %c0_26, %c159] : memref<1x8x1280xf32, #tpu.memory_space<vmem>>, vector<1x8x1024xf32>
    %24 = vector.shape_cast %23 : vector<1x8x1024xf32> to vector<8x1024xf32>
    %c48 = arith.constant 48 : index
    %c0_27 = arith.constant 0 : index
    %25 = vector.load %arg10[%c48, %c0_27] : memref<72x1024xf32, #tpu.memory_space<vmem>>, vector<8x1024xf32>
    tpu.vector_store %arg10[%c48, %c0_27], %24 {strides = array<i32>} : memref<72x1024xf32, #tpu.memory_space<vmem>>, vector<8x1024xf32>,
    %c0_28 = arith.constant 0 : index
    %c0_29 = arith.constant 0 : index
    %c160 = arith.constant 160 : index
    %26 = vector.load %arg1[%c0_28, %c0_29, %c160] : memref<1x8x1280xf32, #tpu.memory_space<vmem>>, vector<1x8x1024xf32>
    %27 = vector.shape_cast %26 : vector<1x8x1024xf32> to vector<8x1024xf32>
    %c56 = arith.constant 56 : index
    %c0_30 = arith.constant 0 : index
    %28 = vector.load %arg10[%c56, %c0_30] : memref<72x1024xf32, #tpu.memory_space<vmem>>, vector<8x1024xf32>
    tpu.vector_store %arg10[%c56, %c0_30], %27 {strides = array<i32>} : memref<72x1024xf32, #tpu.memory_space<vmem>>, vector<8x1024xf32>,
    %c0_31 = arith.constant 0 : index
    %c0_32 = arith.constant 0 : index
    %c161 = arith.constant 161 : index
    %29 = vector.load %arg1[%c0_31, %c0_32, %c161] : memref<1x8x1280xf32, #tpu.memory_space<vmem>>, vector<1x8x1024xf32>
    %30 = vector.shape_cast %29 : vector<1x8x1024xf32> to vector<8x1024xf32>
    %c64 = arith.constant 64 : index
    %c0_33 = arith.constant 0 : index
    %31 = vector.load %arg10[%c64, %c0_33] : memref<72x1024xf32, #tpu.memory_space<vmem>>, vector<8x1024xf32>
    tpu.vector_store %arg10[%c64, %c0_33], %30 {strides = array<i32>} : memref<72x1024xf32, #tpu.memory_space<vmem>>, vector<8x1024xf32>,
    %c0_34 = arith.constant 0 : index
    %c0_35 = arith.constant 0 : index
    %c0_36 = arith.constant 0 : index
    %32 = vector.load %arg2[%c0_34, %c0_35, %c0_36] : memref<4x8x72xf32, #tpu.memory_space<vmem>>, vector<1x8x72xf32>
    %33 = vector.shape_cast %32 : vector<1x8x72xf32> to vector<8x72xf32>
    %c0_37 = arith.constant 0 : index
    %c0_38 = arith.constant 0 : index
    %34 = vector.load %arg10[%c0_37, %c0_38] : memref<72x1024xf32, #tpu.memory_space<vmem>>, vector<72x1024xf32>
    %cst_39 = arith.constant dense<0.000000e+00> : vector<8x1024xf32>
    %35 = tpu.matmul %33, %34, %cst_39 {dimension_numbers = #tpu.dot_dimension_numbers<[1], [0], [0], [1], [0, 0, 1, 1], [], []>} : vector<8x72xf32>, vector<72x1024xf32>, vector<8x1024xf32> -> vector<8x1024xf32>
    %c0_40 = arith.constant 0 : index
    %c0_41 = arith.constant 0 : index
    %c0_42 = arith.constant 0 : index
    %36 = vector.load %arg3[%c0_40, %c0_41, %c0_42] : memref<4x8x1xf32, #tpu.memory_space<vmem>>, vector<1x8x1xf32>
    %37 = vector.shape_cast %36 : vector<1x8x1xf32> to vector<8x1xf32>
    %38 = vector.broadcast %37 : vector<8x1xf32> to vector<8x1024xf32>
    %39 = arith.addf %35, %38 : vector<8x1024xf32>
    %cst_43 = arith.constant 0.000000e+00 : f32
    %40 = vector.broadcast %cst_43 : f32 to vector<8x1024xf32>
    %41 = arith.maximumf %39, %40 : vector<8x1024xf32>
    %c0_44 = arith.constant 0 : index
    %c0_45 = arith.constant 0 : index
    %42 = vector.load %arg4[%c0_44, %c0_45] : memref<1x1024xf32, #tpu.memory_space<vmem>>, vector<1x1024xf32>
    %43 = vector.broadcast %42 : vector<1x1024xf32> to vector<8x1024xf32>
    %44 = arith.mulf %41, %43 : vector<8x1024xf32>
    %c0_46 = arith.constant 0 : index
    %c128_47 = arith.constant 128 : index
    %45 = vector.load %arg8[%c0_46, %c128_47] : memref<8x1280xf32, #tpu.memory_space<vmem>>, vector<8x1024xf32>
    tpu.vector_store %arg8[%c0_46, %c128_47], %44 {strides = array<i32>} : memref<8x1280xf32, #tpu.memory_space<vmem>>, vector<8x1024xf32>,
    %c0_48 = arith.constant 0 : index
    %c95_49 = arith.constant 95 : index
    %46 = vector.load %arg8[%c0_48, %c95_49] : memref<8x1280xf32, #tpu.memory_space<vmem>>, vector<8x1024xf32>
    %c0_50 = arith.constant 0 : index
    %c0_51 = arith.constant 0 : index
    %47 = vector.load %arg10[%c0_50, %c0_51] : memref<72x1024xf32, #tpu.memory_space<vmem>>, vector<8x1024xf32>
    tpu.vector_store %arg10[%c0_50, %c0_51], %46 {strides = array<i32>} : memref<72x1024xf32, #tpu.memory_space<vmem>>, vector<8x1024xf32>,
    %c0_52 = arith.constant 0 : index
    %c96_53 = arith.constant 96 : index
    %48 = vector.load %arg8[%c0_52, %c96_53] : memref<8x1280xf32, #tpu.memory_space<vmem>>, vector<8x1024xf32>
    %c8_54 = arith.constant 8 : index
    %c0_55 = arith.constant 0 : index
    %49 = vector.load %arg10[%c8_54, %c0_55] : memref<72x1024xf32, #tpu.memory_space<vmem>>, vector<8x1024xf32>
    tpu.vector_store %arg10[%c8_54, %c0_55], %48 {strides = array<i32>} : memref<72x1024xf32, #tpu.memory_space<vmem>>, vector<8x1024xf32>,
    %c0_56 = arith.constant 0 : index
    %c97_57 = arith.constant 97 : index
    %50 = vector.load %arg8[%c0_56, %c97_57] : memref<8x1280xf32, #tpu.memory_space<vmem>>, vector<8x1024xf32>
    %c16_58 = arith.constant 16 : index
    %c0_59 = arith.constant 0 : index
    %51 = vector.load %arg10[%c16_58, %c0_59] : memref<72x1024xf32, #tpu.memory_space<vmem>>, vector<8x1024xf32>
    tpu.vector_store %arg10[%c16_58, %c0_59], %50 {strides = array<i32>} : memref<72x1024xf32, #tpu.memory_space<vmem>>, vector<8x1024xf32>,
    %c0_60 = arith.constant 0 : index
    %c127_61 = arith.constant 127 : index
    %52 = vector.load %arg8[%c0_60, %c127_61] : memref<8x1280xf32, #tpu.memory_space<vmem>>, vector<8x1024xf32>
    %c24_62 = arith.constant 24 : index
    %c0_63 = arith.constant 0 : index
    %53 = vector.load %arg10[%c24_62, %c0_63] : memref<72x1024xf32, #tpu.memory_space<vmem>>, vector<8x1024xf32>
    tpu.vector_store %arg10[%c24_62, %c0_63], %52 {strides = array<i32>} : memref<72x1024xf32, #tpu.memory_space<vmem>>, vector<8x1024xf32>,
    %c0_64 = arith.constant 0 : index
    %c128_65 = arith.constant 128 : index
    %54 = vector.load %arg8[%c0_64, %c128_65] : memref<8x1280xf32, #tpu.memory_space<vmem>>, vector<8x1024xf32>
    %c32_66 = arith.constant 32 : index
    %c0_67 = arith.constant 0 : index
    %55 = vector.load %arg10[%c32_66, %c0_67] : memref<72x1024xf32, #tpu.memory_space<vmem>>, vector<8x1024xf32>
    tpu.vector_store %arg10[%c32_66, %c0_67], %54 {strides = array<i32>} : memref<72x1024xf32, #tpu.memory_space<vmem>>, vector<8x1024xf32>,
    %c0_68 = arith.constant 0 : index
    %c129_69 = arith.constant 129 : index
    %56 = vector.load %arg8[%c0_68, %c129_69] : memref<8x1280xf32, #tpu.memory_space<vmem>>, vector<8x1024xf32>
    %c40_70 = arith.constant 40 : index
    %c0_71 = arith.constant 0 : index
    %57 = vector.load %arg10[%c40_70, %c0_71] : memref<72x1024xf32, #tpu.memory_space<vmem>>, vector<8x1024xf32>
    tpu.vector_store %arg10[%c40_70, %c0_71], %56 {strides = array<i32>} : memref<72x1024xf32, #tpu.memory_space<vmem>>, vector<8x1024xf32>,
    %c0_72 = arith.constant 0 : index
    %c159_73 = arith.constant 159 : index
    %58 = vector.load %arg8[%c0_72, %c159_73] : memref<8x1280xf32, #tpu.memory_space<vmem>>, vector<8x1024xf32>
    %c48_74 = arith.constant 48 : index
    %c0_75 = arith.constant 0 : index
    %59 = vector.load %arg10[%c48_74, %c0_75] : memref<72x1024xf32, #tpu.memory_space<vmem>>, vector<8x1024xf32>
    tpu.vector_store %arg10[%c48_74, %c0_75], %58 {strides = array<i32>} : memref<72x1024xf32, #tpu.memory_space<vmem>>, vector<8x1024xf32>,
    %c0_76 = arith.constant 0 : index
    %c160_77 = arith.constant 160 : index
    %60 = vector.load %arg8[%c0_76, %c160_77] : memref<8x1280xf32, #tpu.memory_space<vmem>>, vector<8x1024xf32>
    %c56_78 = arith.constant 56 : index
    %c0_79 = arith.constant 0 : index
    %61 = vector.load %arg10[%c56_78, %c0_79] : memref<72x1024xf32, #tpu.memory_space<vmem>>, vector<8x1024xf32>
    tpu.vector_store %arg10[%c56_78, %c0_79], %60 {strides = array<i32>} : memref<72x1024xf32, #tpu.memory_space<vmem>>, vector<8x1024xf32>,
    %c0_80 = arith.constant 0 : index
    %c161_81 = arith.constant 161 : index
    %62 = vector.load %arg8[%c0_80, %c161_81] : memref<8x1280xf32, #tpu.memory_space<vmem>>, vector<8x1024xf32>
    %c64_82 = arith.constant 64 : index
    %c0_83 = arith.constant 0 : index
    %63 = vector.load %arg10[%c64_82, %c0_83] : memref<72x1024xf32, #tpu.memory_space<vmem>>, vector<8x1024xf32>
    tpu.vector_store %arg10[%c64_82, %c0_83], %62 {strides = array<i32>} : memref<72x1024xf32, #tpu.memory_space<vmem>>, vector<8x1024xf32>,
    %c1 = arith.constant 1 : index
    %c0_84 = arith.constant 0 : index
    %c0_85 = arith.constant 0 : index
    %64 = vector.load %arg2[%c1, %c0_84, %c0_85] : memref<4x8x72xf32, #tpu.memory_space<vmem>>, vector<1x8x72xf32>
    %65 = vector.shape_cast %64 : vector<1x8x72xf32> to vector<8x72xf32>
    %c0_86 = arith.constant 0 : index
    %c0_87 = arith.constant 0 : index
    %66 = vector.load %arg10[%c0_86, %c0_87] : memref<72x1024xf32, #tpu.memory_space<vmem>>, vector<72x1024xf32>
    %cst_88 = arith.constant dense<0.000000e+00> : vector<8x1024xf32>
    %67 = tpu.matmul %65, %66, %cst_88 {dimension_numbers = #tpu.dot_dimension_numbers<[1], [0], [0], [1], [0, 0, 1, 1], [], []>} : vector<8x72xf32>, vector<72x1024xf32>, vector<8x1024xf32> -> vector<8x1024xf32>
    %c1_89 = arith.constant 1 : index
    %c0_90 = arith.constant 0 : index
    %c0_91 = arith.constant 0 : index
    %68 = vector.load %arg3[%c1_89, %c0_90, %c0_91] : memref<4x8x1xf32, #tpu.memory_space<vmem>>, vector<1x8x1xf32>
    %69 = vector.shape_cast %68 : vector<1x8x1xf32> to vector<8x1xf32>
    %70 = vector.broadcast %69 : vector<8x1xf32> to vector<8x1024xf32>
    %71 = arith.addf %67, %70 : vector<8x1024xf32>
    %cst_92 = arith.constant 0.000000e+00 : f32
    %72 = vector.broadcast %cst_92 : f32 to vector<8x1024xf32>
    %73 = arith.maximumf %71, %72 : vector<8x1024xf32>
    %c0_93 = arith.constant 0 : index
    %c0_94 = arith.constant 0 : index
    %74 = vector.load %arg4[%c0_93, %c0_94] : memref<1x1024xf32, #tpu.memory_space<vmem>>, vector<1x1024xf32>
    %75 = vector.broadcast %74 : vector<1x1024xf32> to vector<8x1024xf32>
    %76 = arith.mulf %73, %75 : vector<8x1024xf32>
    %c0_95 = arith.constant 0 : index
    %c128_96 = arith.constant 128 : index
    %77 = vector.load %arg9[%c0_95, %c128_96] : memref<8x1280xf32, #tpu.memory_space<vmem>>, vector<8x1024xf32>
    tpu.vector_store %arg9[%c0_95, %c128_96], %76 {strides = array<i32>} : memref<8x1280xf32, #tpu.memory_space<vmem>>, vector<8x1024xf32>,
    %c0_97 = arith.constant 0 : index
    %c128_98 = arith.constant 128 : index
    %78 = vector.load %arg9[%c0_97, %c128_98] : memref<8x1280xf32, #tpu.memory_space<vmem>>, vector<8x1024xf32>
    %c0_99 = arith.constant 0 : index
    %c129_100 = arith.constant 129 : index
    %79 = vector.load %arg9[%c0_99, %c129_100] : memref<8x1280xf32, #tpu.memory_space<vmem>>, vector<8x1024xf32>
    %80 = arith.maximumf %78, %79 : vector<8x1024xf32>
    %c0_101 = arith.constant 0 : index
    %c160_102 = arith.constant 160 : index
    %81 = vector.load %arg9[%c0_101, %c160_102] : memref<8x1280xf32, #tpu.memory_space<vmem>>, vector<8x1024xf32>
    %82 = arith.maximumf %80, %81 : vector<8x1024xf32>
    %c0_103 = arith.constant 0 : index
    %c161_104 = arith.constant 161 : index
    %83 = vector.load %arg9[%c0_103, %c161_104] : memref<8x1280xf32, #tpu.memory_space<vmem>>, vector<8x1024xf32>
    %84 = arith.maximumf %82, %83 : vector<8x1024xf32>
    %c0_105 = arith.constant 0 : index
    %c0_106 = arith.constant 0 : index
    %85 = vector.load %arg4[%c0_105, %c0_106] : memref<1x1024xf32, #tpu.memory_space<vmem>>, vector<1x1024xf32>
    %86 = vector.broadcast %85 : vector<1x1024xf32> to vector<8x1024xf32>
    %87 = arith.mulf %84, %86 : vector<8x1024xf32>
    %c0_107 = arith.constant 0 : index
    %c128_108 = arith.constant 128 : index
    %88 = vector.load %arg8[%c0_107, %c128_108] : memref<8x1280xf32, #tpu.memory_space<vmem>>, vector<8x1024xf32>
    tpu.vector_store %arg8[%c0_107, %c128_108], %87 {strides = array<i32>} : memref<8x1280xf32, #tpu.memory_space<vmem>>, vector<8x1024xf32>,
    %c0_109 = arith.constant 0 : index
    %c62 = arith.constant 62 : index
    %89 = vector.load %arg8[%c0_109, %c62] : memref<8x1280xf32, #tpu.memory_space<vmem>>, vector<8x1024xf32>
    %c0_110 = arith.constant 0 : index
    %c0_111 = arith.constant 0 : index
    %90 = vector.load %arg10[%c0_110, %c0_111] : memref<72x1024xf32, #tpu.memory_space<vmem>>, vector<8x1024xf32>
    tpu.vector_store %arg10[%c0_110, %c0_111], %89 {strides = array<i32>} : memref<72x1024xf32, #tpu.memory_space<vmem>>, vector<8x1024xf32>,
    %c0_112 = arith.constant 0 : index
    %c64_113 = arith.constant 64 : index
    %91 = vector.load %arg8[%c0_112, %c64_113] : memref<8x1280xf32, #tpu.memory_space<vmem>>, vector<8x1024xf32>
    %c8_114 = arith.constant 8 : index
    %c0_115 = arith.constant 0 : index
    %92 = vector.load %arg10[%c8_114, %c0_115] : memref<72x1024xf32, #tpu.memory_space<vmem>>, vector<8x1024xf32>
    tpu.vector_store %arg10[%c8_114, %c0_115], %91 {strides = array<i32>} : memref<72x1024xf32, #tpu.memory_space<vmem>>, vector<8x1024xf32>,
    %c0_116 = arith.constant 0 : index
    %c66 = arith.constant 66 : index
    %93 = vector.load %arg8[%c0_116, %c66] : memref<8x1280xf32, #tpu.memory_space<vmem>>, vector<8x1024xf32>
    %c16_117 = arith.constant 16 : index
    %c0_118 = arith.constant 0 : index
    %94 = vector.load %arg10[%c16_117, %c0_118] : memref<72x1024xf32, #tpu.memory_space<vmem>>, vector<8x1024xf32>
    tpu.vector_store %arg10[%c16_117, %c0_118], %93 {strides = array<i32>} : memref<72x1024xf32, #tpu.memory_space<vmem>>, vector<8x1024xf32>,
    %c0_119 = arith.constant 0 : index
    %c126 = arith.constant 126 : index
    %95 = vector.load %arg8[%c0_119, %c126] : memref<8x1280xf32, #tpu.memory_space<vmem>>, vector<8x1024xf32>
    %c24_120 = arith.constant 24 : index
    %c0_121 = arith.constant 0 : index
    %96 = vector.load %arg10[%c24_120, %c0_121] : memref<72x1024xf32, #tpu.memory_space<vmem>>, vector<8x1024xf32>
    tpu.vector_store %arg10[%c24_120, %c0_121], %95 {strides = array<i32>} : memref<72x1024xf32, #tpu.memory_space<vmem>>, vector<8x1024xf32>,
    %c0_122 = arith.constant 0 : index
    %c128_123 = arith.constant 128 : index
    %97 = vector.load %arg8[%c0_122, %c128_123] : memref<8x1280xf32, #tpu.memory_space<vmem>>, vector<8x1024xf32>
    %c32_124 = arith.constant 32 : index
    %c0_125 = arith.constant 0 : index
    %98 = vector.load %arg10[%c32_124, %c0_125] : memref<72x1024xf32, #tpu.memory_space<vmem>>, vector<8x1024xf32>
    tpu.vector_store %arg10[%c32_124, %c0_125], %97 {strides = array<i32>} : memref<72x1024xf32, #tpu.memory_space<vmem>>, vector<8x1024xf32>,
    %c0_126 = arith.constant 0 : index
    %c130 = arith.constant 130 : index
    %99 = vector.load %arg8[%c0_126, %c130] : memref<8x1280xf32, #tpu.memory_space<vmem>>, vector<8x1024xf32>
    %c40_127 = arith.constant 40 : index
    %c0_128 = arith.constant 0 : index
    %100 = vector.load %arg10[%c40_127, %c0_128] : memref<72x1024xf32, #tpu.memory_space<vmem>>, vector<8x1024xf32>
    tpu.vector_store %arg10[%c40_127, %c0_128], %99 {strides = array<i32>} : memref<72x1024xf32, #tpu.memory_space<vmem>>, vector<8x1024xf32>,
    %c0_129 = arith.constant 0 : index
    %c190 = arith.constant 190 : index
    %101 = vector.load %arg8[%c0_129, %c190] : memref<8x1280xf32, #tpu.memory_space<vmem>>, vector<8x1024xf32>
    %c48_130 = arith.constant 48 : index
    %c0_131 = arith.constant 0 : index
    %102 = vector.load %arg10[%c48_130, %c0_131] : memref<72x1024xf32, #tpu.memory_space<vmem>>, vector<8x1024xf32>
    tpu.vector_store %arg10[%c48_130, %c0_131], %101 {strides = array<i32>} : memref<72x1024xf32, #tpu.memory_space<vmem>>, vector<8x1024xf32>,
    %c0_132 = arith.constant 0 : index
    %c192 = arith.constant 192 : index
    %103 = vector.load %arg8[%c0_132, %c192] : memref<8x1280xf32, #tpu.memory_space<vmem>>, vector<8x1024xf32>
    %c56_133 = arith.constant 56 : index
    %c0_134 = arith.constant 0 : index
    %104 = vector.load %arg10[%c56_133, %c0_134] : memref<72x1024xf32, #tpu.memory_space<vmem>>, vector<8x1024xf32>
    tpu.vector_store %arg10[%c56_133, %c0_134], %103 {strides = array<i32>} : memref<72x1024xf32, #tpu.memory_space<vmem>>, vector<8x1024xf32>,
    %c0_135 = arith.constant 0 : index
    %c194 = arith.constant 194 : index
    %105 = vector.load %arg8[%c0_135, %c194] : memref<8x1280xf32, #tpu.memory_space<vmem>>, vector<8x1024xf32>
    %c64_136 = arith.constant 64 : index
    %c0_137 = arith.constant 0 : index
    %106 = vector.load %arg10[%c64_136, %c0_137] : memref<72x1024xf32, #tpu.memory_space<vmem>>, vector<8x1024xf32>
    tpu.vector_store %arg10[%c64_136, %c0_137], %105 {strides = array<i32>} : memref<72x1024xf32, #tpu.memory_space<vmem>>, vector<8x1024xf32>,
    %c2 = arith.constant 2 : index
    %c0_138 = arith.constant 0 : index
    %c0_139 = arith.constant 0 : index
    %107 = vector.load %arg2[%c2, %c0_138, %c0_139] : memref<4x8x72xf32, #tpu.memory_space<vmem>>, vector<1x8x72xf32>
    %108 = vector.shape_cast %107 : vector<1x8x72xf32> to vector<8x72xf32>
    %c0_140 = arith.constant 0 : index
    %c0_141 = arith.constant 0 : index
    %109 = vector.load %arg10[%c0_140, %c0_141] : memref<72x1024xf32, #tpu.memory_space<vmem>>, vector<72x1024xf32>
    %cst_142 = arith.constant dense<0.000000e+00> : vector<8x1024xf32>
    %110 = tpu.matmul %108, %109, %cst_142 {dimension_numbers = #tpu.dot_dimension_numbers<[1], [0], [0], [1], [0, 0, 1, 1], [], []>} : vector<8x72xf32>, vector<72x1024xf32>, vector<8x1024xf32> -> vector<8x1024xf32>
    %c2_143 = arith.constant 2 : index
    %c0_144 = arith.constant 0 : index
    %c0_145 = arith.constant 0 : index
    %111 = vector.load %arg3[%c2_143, %c0_144, %c0_145] : memref<4x8x1xf32, #tpu.memory_space<vmem>>, vector<1x8x1xf32>
    %112 = vector.shape_cast %111 : vector<1x8x1xf32> to vector<8x1xf32>
    %113 = vector.broadcast %112 : vector<8x1xf32> to vector<8x1024xf32>
    %114 = arith.addf %110, %113 : vector<8x1024xf32>
    %cst_146 = arith.constant 0.000000e+00 : f32
    %115 = vector.broadcast %cst_146 : f32 to vector<8x1024xf32>
    %116 = arith.maximumf %114, %115 : vector<8x1024xf32>
    %c0_147 = arith.constant 0 : index
    %c0_148 = arith.constant 0 : index
    %117 = vector.load %arg4[%c0_147, %c0_148] : memref<1x1024xf32, #tpu.memory_space<vmem>>, vector<1x1024xf32>
    %118 = vector.broadcast %117 : vector<1x1024xf32> to vector<8x1024xf32>
    %119 = arith.mulf %116, %118 : vector<8x1024xf32>
    %c0_149 = arith.constant 0 : index
    %c128_150 = arith.constant 128 : index
    %120 = vector.load %arg9[%c0_149, %c128_150] : memref<8x1280xf32, #tpu.memory_space<vmem>>, vector<8x1024xf32>
    tpu.vector_store %arg9[%c0_149, %c128_150], %119 {strides = array<i32>} : memref<8x1280xf32, #tpu.memory_space<vmem>>, vector<8x1024xf32>,
    %c0_151 = arith.constant 0 : index
    %c62_152 = arith.constant 62 : index
    %121 = vector.load %arg9[%c0_151, %c62_152] : memref<8x1280xf32, #tpu.memory_space<vmem>>, vector<8x1024xf32>
    %c0_153 = arith.constant 0 : index
    %c0_154 = arith.constant 0 : index
    %122 = vector.load %arg10[%c0_153, %c0_154] : memref<72x1024xf32, #tpu.memory_space<vmem>>, vector<8x1024xf32>
    tpu.vector_store %arg10[%c0_153, %c0_154], %121 {strides = array<i32>} : memref<72x1024xf32, #tpu.memory_space<vmem>>, vector<8x1024xf32>,
    %c0_155 = arith.constant 0 : index
    %c64_156 = arith.constant 64 : index
    %123 = vector.load %arg9[%c0_155, %c64_156] : memref<8x1280xf32, #tpu.memory_space<vmem>>, vector<8x1024xf32>
    %c8_157 = arith.constant 8 : index
    %c0_158 = arith.constant 0 : index
    %124 = vector.load %arg10[%c8_157, %c0_158] : memref<72x1024xf32, #tpu.memory_space<vmem>>, vector<8x1024xf32>
    tpu.vector_store %arg10[%c8_157, %c0_158], %123 {strides = array<i32>} : memref<72x1024xf32, #tpu.memory_space<vmem>>, vector<8x1024xf32>,
    %c0_159 = arith.constant 0 : index
    %c66_160 = arith.constant 66 : index
    %125 = vector.load %arg9[%c0_159, %c66_160] : memref<8x1280xf32, #tpu.memory_space<vmem>>, vector<8x1024xf32>
    %c16_161 = arith.constant 16 : index
    %c0_162 = arith.constant 0 : index
    %126 = vector.load %arg10[%c16_161, %c0_162] : memref<72x1024xf32, #tpu.memory_space<vmem>>, vector<8x1024xf32>
    tpu.vector_store %arg10[%c16_161, %c0_162], %125 {strides = array<i32>} : memref<72x1024xf32, #tpu.memory_space<vmem>>, vector<8x1024xf32>,
    %c0_163 = arith.constant 0 : index
    %c126_164 = arith.constant 126 : index
    %127 = vector.load %arg9[%c0_163, %c126_164] : memref<8x1280xf32, #tpu.memory_space<vmem>>, vector<8x1024xf32>
    %c24_165 = arith.constant 24 : index
    %c0_166 = arith.constant 0 : index
    %128 = vector.load %arg10[%c24_165, %c0_166] : memref<72x1024xf32, #tpu.memory_space<vmem>>, vector<8x1024xf32>
    tpu.vector_store %arg10[%c24_165, %c0_166], %127 {strides = array<i32>} : memref<72x1024xf32, #tpu.memory_space<vmem>>, vector<8x1024xf32>,
    %c0_167 = arith.constant 0 : index
    %c128_168 = arith.constant 128 : index
    %129 = vector.load %arg9[%c0_167, %c128_168] : memref<8x1280xf32, #tpu.memory_space<vmem>>, vector<8x1024xf32>
    %c32_169 = arith.constant 32 : index
    %c0_170 = arith.constant 0 : index
    %130 = vector.load %arg10[%c32_169, %c0_170] : memref<72x1024xf32, #tpu.memory_space<vmem>>, vector<8x1024xf32>
    tpu.vector_store %arg10[%c32_169, %c0_170], %129 {strides = array<i32>} : memref<72x1024xf32, #tpu.memory_space<vmem>>, vector<8x1024xf32>,
    %c0_171 = arith.constant 0 : index
    %c130_172 = arith.constant 130 : index
    %131 = vector.load %arg9[%c0_171, %c130_172] : memref<8x1280xf32, #tpu.memory_space<vmem>>, vector<8x1024xf32>
    %c40_173 = arith.constant 40 : index
    %c0_174 = arith.constant 0 : index
    %132 = vector.load %arg10[%c40_173, %c0_174] : memref<72x1024xf32, #tpu.memory_space<vmem>>, vector<8x1024xf32>
    tpu.vector_store %arg10[%c40_173, %c0_174], %131 {strides = array<i32>} : memref<72x1024xf32, #tpu.memory_space<vmem>>, vector<8x1024xf32>,
    %c0_175 = arith.constant 0 : index
    %c190_176 = arith.constant 190 : index
    %133 = vector.load %arg9[%c0_175, %c190_176] : memref<8x1280xf32, #tpu.memory_space<vmem>>, vector<8x1024xf32>
    %c48_177 = arith.constant 48 : index
    %c0_178 = arith.constant 0 : index
    %134 = vector.load %arg10[%c48_177, %c0_178] : memref<72x1024xf32, #tpu.memory_space<vmem>>, vector<8x1024xf32>
    tpu.vector_store %arg10[%c48_177, %c0_178], %133 {strides = array<i32>} : memref<72x1024xf32, #tpu.memory_space<vmem>>, vector<8x1024xf32>,
    %c0_179 = arith.constant 0 : index
    %c192_180 = arith.constant 192 : index
    %135 = vector.load %arg9[%c0_179, %c192_180] : memref<8x1280xf32, #tpu.memory_space<vmem>>, vector<8x1024xf32>
    %c56_181 = arith.constant 56 : index
    %c0_182 = arith.constant 0 : index
    %136 = vector.load %arg10[%c56_181, %c0_182] : memref<72x1024xf32, #tpu.memory_space<vmem>>, vector<8x1024xf32>
    tpu.vector_store %arg10[%c56_181, %c0_182], %135 {strides = array<i32>} : memref<72x1024xf32, #tpu.memory_space<vmem>>, vector<8x1024xf32>,
    %c0_183 = arith.constant 0 : index
    %c194_184 = arith.constant 194 : index
    %137 = vector.load %arg9[%c0_183, %c194_184] : memref<8x1280xf32, #tpu.memory_space<vmem>>, vector<8x1024xf32>
    %c64_185 = arith.constant 64 : index
    %c0_186 = arith.constant 0 : index
    %138 = vector.load %arg10[%c64_185, %c0_186] : memref<72x1024xf32, #tpu.memory_space<vmem>>, vector<8x1024xf32>
    tpu.vector_store %arg10[%c64_185, %c0_186], %137 {strides = array<i32>} : memref<72x1024xf32, #tpu.memory_space<vmem>>, vector<8x1024xf32>,
    %c3 = arith.constant 3 : index
    %c0_187 = arith.constant 0 : index
    %c0_188 = arith.constant 0 : index
    %139 = vector.load %arg2[%c3, %c0_187, %c0_188] : memref<4x8x72xf32, #tpu.memory_space<vmem>>, vector<1x8x72xf32>
    %140 = vector.shape_cast %139 : vector<1x8x72xf32> to vector<8x72xf32>
    %c0_189 = arith.constant 0 : index
    %c0_190 = arith.constant 0 : index
    %141 = vector.load %arg10[%c0_189, %c0_190] : memref<72x1024xf32, #tpu.memory_space<vmem>>, vector<72x1024xf32>
    %cst_191 = arith.constant dense<0.000000e+00> : vector<8x1024xf32>
    %142 = tpu.matmul %140, %141, %cst_191 {dimension_numbers = #tpu.dot_dimension_numbers<[1], [0], [0], [1], [0, 0, 1, 1], [], []>} : vector<8x72xf32>, vector<72x1024xf32>, vector<8x1024xf32> -> vector<8x1024xf32>
    %c3_192 = arith.constant 3 : index
    %c0_193 = arith.constant 0 : index
    %c0_194 = arith.constant 0 : index
    %143 = vector.load %arg3[%c3_192, %c0_193, %c0_194] : memref<4x8x1xf32, #tpu.memory_space<vmem>>, vector<1x8x1xf32>
    %144 = vector.shape_cast %143 : vector<1x8x1xf32> to vector<8x1xf32>
    %145 = vector.broadcast %144 : vector<8x1xf32> to vector<8x1024xf32>
    %146 = arith.addf %142, %145 : vector<8x1024xf32>
    %cst_195 = arith.constant 0.000000e+00 : f32
    %147 = vector.broadcast %cst_195 : f32 to vector<8x1024xf32>
    %148 = arith.maximumf %146, %147 : vector<8x1024xf32>
    %c0_196 = arith.constant 0 : index
    %c0_197 = arith.constant 0 : index
    %149 = vector.load %arg4[%c0_196, %c0_197] : memref<1x1024xf32, #tpu.memory_space<vmem>>, vector<1x1024xf32>
    %150 = vector.broadcast %149 : vector<1x1024xf32> to vector<8x1024xf32>
    %151 = arith.mulf %148, %150 : vector<8x1024xf32>
    %c0_198 = arith.constant 0 : index
    %c128_199 = arith.constant 128 : index
    %152 = vector.load %arg8[%c0_198, %c128_199] : memref<8x1280xf32, #tpu.memory_space<vmem>>, vector<8x1024xf32>
    tpu.vector_store %arg8[%c0_198, %c128_199], %151 {strides = array<i32>} : memref<8x1280xf32, #tpu.memory_space<vmem>>, vector<8x1024xf32>,
    %c0_200 = arith.constant 0 : index
    %c128_201 = arith.constant 128 : index
    %153 = vector.load %arg8[%c0_200, %c128_201] : memref<8x1280xf32, #tpu.memory_space<vmem>>, vector<8x1024xf32>
    %c0_202 = arith.constant 0 : index
    %c130_203 = arith.constant 130 : index
    %154 = vector.load %arg8[%c0_202, %c130_203] : memref<8x1280xf32, #tpu.memory_space<vmem>>, vector<8x1024xf32>
    %155 = arith.maximumf %153, %154 : vector<8x1024xf32>
    %c0_204 = arith.constant 0 : index
    %c192_205 = arith.constant 192 : index
    %156 = vector.load %arg8[%c0_204, %c192_205] : memref<8x1280xf32, #tpu.memory_space<vmem>>, vector<8x1024xf32>
    %157 = arith.maximumf %155, %156 : vector<8x1024xf32>
    %c0_206 = arith.constant 0 : index
    %c194_207 = arith.constant 194 : index
    %158 = vector.load %arg8[%c0_206, %c194_207] : memref<8x1280xf32, #tpu.memory_space<vmem>>, vector<8x1024xf32>
    %159 = arith.maximumf %157, %158 : vector<8x1024xf32>
    %c0_208 = arith.constant 0 : index
    %c0_209 = arith.constant 0 : index
    %160 = vector.load %arg4[%c0_208, %c0_209] : memref<1x1024xf32, #tpu.memory_space<vmem>>, vector<1x1024xf32>
    %161 = vector.broadcast %160 : vector<1x1024xf32> to vector<8x1024xf32>
    %162 = arith.mulf %159, %161 : vector<8x1024xf32>
    %c0_210 = arith.constant 0 : index
    %c128_211 = arith.constant 128 : index
    %163 = vector.load %arg9[%c0_210, %c128_211] : memref<8x1280xf32, #tpu.memory_space<vmem>>, vector<8x1024xf32>
    tpu.vector_store %arg9[%c0_210, %c128_211], %162 {strides = array<i32>} : memref<8x1280xf32, #tpu.memory_space<vmem>>, vector<8x1024xf32>,
    %c0_212 = arith.constant 0 : index
    %c0_213 = arith.constant 0 : index
    %164 = vector.load %arg5[%c0_212, %c0_213] : memref<896x80xf32, #tpu.memory_space<vmem>>, vector<896x80xf32>
    %165 = tpu.iota {dimensions = array<i32: 0>} : vector<1x1xi32>
    %cst_214 = arith.constant 0.000000e+00 : f32
    %166 = vector.broadcast %cst_214 : f32 to vector<1x118xf32>
    %cst_215 = arith.constant 0.000000e+00 : f32
    %167 = vector.broadcast %cst_215 : f32 to vector<1x128xf32>
    %c0_216 = arith.constant 0 : index
    %c128_217 = arith.constant 128 : index
    %168 = vector.load %arg9[%c0_216, %c128_217] : memref<8x1280xf32, #tpu.memory_space<vmem>>, vector<8x896xf32>
    %cst_218 = arith.constant dense<0.000000e+00> : vector<8x80xf32>
    %169 = tpu.matmul %168, %164, %cst_218 {dimension_numbers = #tpu.dot_dimension_numbers<[1], [0], [0], [1], [0, 0, 1, 1], [], []>} : vector<8x896xf32>, vector<896x80xf32>, vector<8x80xf32> -> vector<8x80xf32>
    %170 = vector.extract_strided_slice %169 {offsets = [0, 0], sizes = [1, 10], strides = [1, 1]} : vector<8x80xf32> to vector<1x10xf32>
    %171 = vector.extract_strided_slice %169 {offsets = [1, 10], sizes = [1, 10], strides = [1, 1]} : vector<8x80xf32> to vector<1x10xf32>
    %172 = arith.addf %170, %171 : vector<1x10xf32>
    %173 = vector.extract_strided_slice %169 {offsets = [2, 20], sizes = [1, 10], strides = [1, 1]} : vector<8x80xf32> to vector<1x10xf32>
    %174 = arith.addf %172, %173 : vector<1x10xf32>
    %175 = vector.extract_strided_slice %169 {offsets = [3, 30], sizes = [1, 10], strides = [1, 1]} : vector<8x80xf32> to vector<1x10xf32>
    %176 = arith.addf %174, %175 : vector<1x10xf32>
    %177 = vector.extract_strided_slice %169 {offsets = [4, 40], sizes = [1, 10], strides = [1, 1]} : vector<8x80xf32> to vector<1x10xf32>
    %178 = arith.addf %176, %177 : vector<1x10xf32>
    %179 = vector.extract_strided_slice %169 {offsets = [5, 50], sizes = [1, 10], strides = [1, 1]} : vector<8x80xf32> to vector<1x10xf32>
    %180 = arith.addf %178, %179 : vector<1x10xf32>
    %181 = vector.extract_strided_slice %169 {offsets = [6, 60], sizes = [1, 10], strides = [1, 1]} : vector<8x80xf32> to vector<1x10xf32>
    %182 = arith.addf %180, %181 : vector<1x10xf32>
    %183 = vector.extract_strided_slice %169 {offsets = [7, 70], sizes = [1, 10], strides = [1, 1]} : vector<8x80xf32> to vector<1x10xf32>
    %184 = arith.addf %182, %183 : vector<1x10xf32>
    %185 = tpu.concatenate %184, %166 in 1 : vector<1x10xf32>, vector<1x118xf32> -> vector<1x128xf32>
    %c0_i32 = arith.constant 0 : i32
    %186 = vector.broadcast %c0_i32 : i32 to vector<1x1xi32>
    %187 = arith.cmpi eq, %165, %186 : vector<1x1xi32>
    %cst_219 = arith.constant 1.000000e+00 : f32
    %cst_220 = arith.constant 0.000000e+00 : f32
    %188 = vector.broadcast %cst_219 : f32 to vector<1x1xf32>
    %189 = vector.broadcast %cst_220 : f32 to vector<1x1xf32>
    %190 = arith.select %187, %188, %189 : vector<1x1xi1>, vector<1x1xf32>
    %191 = vector.broadcast %190 : vector<1x1xf32> to vector<1x128xf32>
    %192 = arith.mulf %191, %185 : vector<1x128xf32>
    %193 = arith.addf %167, %192 : vector<1x128xf32>
    %c0_221 = arith.constant 0 : index
    %c0_222 = arith.constant 0 : index
    %194 = vector.load %arg6[%c0_221, %c0_222] : memref<1x128xf32, #tpu.memory_space<vmem>>, vector<1x128xf32>
    %195 = arith.addf %193, %194 : vector<1x128xf32>
    %c0_223 = arith.constant 0 : index
    %c0_224 = arith.constant 0 : index
    %c0_225 = arith.constant 0 : index
    %196 = vector.load %arg7[%c0_223, %c0_224, %c0_225] : memref<1x1x128xf32, #tpu.memory_space<vmem>>, vector<1x1x128xf32>
    %197 = vector.shape_cast %196 : vector<1x1x128xf32> to vector<1x128xf32>
    %198 = vector.shape_cast %195 : vector<1x128xf32> to vector<1x1x128xf32>
    tpu.vector_store %arg7[%c0_223, %c0_224, %c0_225], %198 {strides = array<i32>} : memref<1x1x128xf32, #tpu.memory_space<vmem>>, vector<1x1x128xf32>,
    return
  }
  func.func @transform_0(%arg0: i32) -> (i32, i32, i32) {
    %c0_i32 = arith.constant 0 : i32
    %c0_i32_0 = arith.constant 0 : i32
    %c0_i32_1 = arith.constant 0 : i32
    return %arg0, %c0_i32, %c0_i32_0 : i32, i32, i32
  }
  func.func @transform_1(%arg0: i32) -> (i32, i32, i32) {
    %c0_i32 = arith.constant 0 : i32
    %c0_i32_0 = arith.constant 0 : i32
    %c0_i32_1 = arith.constant 0 : i32
    %c0_i32_2 = arith.constant 0 : i32
    return %c0_i32, %c0_i32_0, %c0_i32_1 : i32, i32, i32
  }
  func.func @transform_2(%arg0: i32) -> (i32, i32, i32) {
    %c0_i32 = arith.constant 0 : i32
    %c0_i32_0 = arith.constant 0 : i32
    %c0_i32_1 = arith.constant 0 : i32
    %c0_i32_2 = arith.constant 0 : i32
    return %c0_i32, %c0_i32_0, %c0_i32_1 : i32, i32, i32
  }
  func.func @transform_3(%arg0: i32) -> (i32, i32) {
    %c0_i32 = arith.constant 0 : i32
    %c0_i32_0 = arith.constant 0 : i32
    %c0_i32_1 = arith.constant 0 : i32
    return %c0_i32, %c0_i32_0 : i32, i32
  }
  func.func @transform_4(%arg0: i32) -> (i32, i32) {
    %c0_i32 = arith.constant 0 : i32
    %c0_i32_0 = arith.constant 0 : i32
    %c0_i32_1 = arith.constant 0 : i32
    return %c0_i32, %c0_i32_0 : i32, i32
  }
  func.func @transform_5(%arg0: i32) -> (i32, i32) {
    %c0_i32 = arith.constant 0 : i32
    %c0_i32_0 = arith.constant 0 : i32
    %c0_i32_1 = arith.constant 0 : i32
    return %c0_i32, %c0_i32_0 : i32, i32
  }
  func.func @transform_6(%arg0: i32) -> (i32, i32, i32) {
    %c0_i32 = arith.constant 0 : i32
    %c0_i32_0 = arith.constant 0 : i32
    %c0_i32_1 = arith.constant 0 : i32
    return %arg0, %c0_i32, %c0_i32_0 : i32, i32, i32
  }
}

</mosaic_0001>

<llo_original>
// kernel: tpu_custom_call.1
$region0: #{tpu_custom_call.1}
  #allocation0 [shape = 'u32[]', space=smem, size = 0x4, offset = 0x4, fixed_abs, tag = 'smem constant byte address 0x4 - core index']
  #allocation1 [shape = 'u32[144,128]{1,0:T(1,128)}', space=vmem, size = 0x12000, scoped, tag = 'internal scratch']
  #allocation2 [shape = 'f32[8,1280]{1,0:T(8,128)}', space=vmem, size = 0xa000, scoped, tag = 'scratch operand']
  #allocation3 [shape = 'f32[8,1280]{1,0:T(8,128)}', space=vmem, size = 0xa000, scoped, tag = 'scratch operand']
  #allocation4 [shape = 'f32[72,1024]{1,0:T(8,128)}', space=vmem, size = 0x48000, scoped, tag = 'scratch operand']
  %s0 = inlined_call_operand.vmem [shape: f32[2,8,1280], index: 0, kind: input, shape index: {}]
  %s1 = inlined_call_operand.vmem [shape: f32[4,8,72], index: 1, kind: input, shape index: {}]
  %s2 = inlined_call_operand.vmem [shape: f32[4,8,1], index: 2, kind: input, shape index: {}]
  %s3 = inlined_call_operand.vmem [shape: f32[1,1024], index: 3, kind: input, shape index: {}]
  %s4 = inlined_call_operand.vmem [shape: f32[896,80], index: 4, kind: input, shape index: {}]
  %s5 = inlined_call_operand.vmem [shape: f32[1,128], index: 5, kind: input, shape index: {}]
  %s6 = inlined_call_operand.hbm [shape: f32[2,1,128], index: 6, kind: output, shape index: {}]
  %s7 = sld [smem:[#allocation0]]
  $region57: #{tpu_custom_call.1} parent=0
    _
  %s9 = ssub.s32 1, %s7
  %s10 = scalar_select 0, %s9, %s7
  $region1: #{tpu_custom_call.1} parent=0
    #allocation5 [shape = 'u8[1024]{0}', space=vmem, size = 0x400, scoped, tag = 'output window, operand 0']
    #allocation6 [shape = 's32[2]{0}', space=sflag, size = 0x8, scoped, tag = 'scoped memory for tpu_custom_call.1']
    %11 = vsyncpa [#allocation6], 0
    %s12 = scalar_lea.sflag [#allocation6], 1
    %13 = vsyncpa %s12, 0
    loop: start=0, step=1, limit=4
    $region2: #{tpu_custom_call.1} parent=1 // loop_pre_header
      _
    $region3: #{tpu_custom_call.1} parent=1 // loop_header
      %s15 = sphi 0, %s19
      %p16 = scmp.ge.s32.totalorder %s15, 4
      %s25 = sphi 0, %s27
      %s28 = sphi 0, %s25
      %s29 = sphi 0, %s28
      %s45 = sphi 0, %s29
      %s49 = sphi 0, %s49
      %s51 = sphi 0, %s49
      %s52 = sphi 0, %s51
      %s66 = sphi 0, %s52
      %s70 = sphi 0, %s70
      %s72 = sphi 0, %s70
      %s73 = sphi 0, %s72
      %s87 = sphi 0, %s73
      %s91 = sphi 0, %s91
      %s93 = sphi 0, %s91
      %s94 = sphi 0, %s93
      %s108 = sphi 0, %s94
      %s112 = sphi 0, %s112
      %s114 = sphi 0, %s112
      %s115 = sphi 0, %s114
      %s129 = sphi 0, %s115
      %s133 = sphi 0, %s133
      %s135 = sphi 0, %s133
      %s136 = sphi 0, %s135
      %s150 = sphi 0, %s136
      %s156 = sphi 0, %s158
      %s159 = sphi 0, %s156
      %s160 = sphi 0, %s159
      %s176 = sphi 0, %s160
    $region4: #{tpu_custom_call.1} parent=1 // loop_header_branch
      %18 = sbr.rel (%p16) target = $region8
    $region5: #{tpu_custom_call.1} parent=1 // loop_body
      %s20 = ssub.s32 %s15, 1
      %s21 = ssub.s32 %s15, 2
      %s22 = sadd.s32 %s15, 1
      %s23 = ssub.s32 %s15, %s22
      %p24 = scmp.eq.s32.totalorder %s23, 0
      %s26 = sadd.s32 %s25, 1
      %s27 = scalar_select %p24, %s25, %s26
      %p30 = pneg %p24
      %p31 = scmp.eq.s32.totalorder %s15, 1
      %p32 = por %p30, %p31
      %p33 = scmp.ne.s32.totalorder %s25, %s28
      %p34 = scmp.eq.s32.totalorder %s15, 0
      %p35 = por %p33, %p34
      %p36 = scmp.ne.s32.totalorder %s25, %s28
      %p37 = scmp.eq.s32.totalorder %s20, 1
      %p38 = por %p36, %p37
      %p39 = scmp.ne.s32.totalorder %s28, %s29
      %p40 = scmp.eq.s32.totalorder %s20, 0
      %p41 = por %p39, %p40
      %p42 = scmp.ne.s32.totalorder %s28, %s29
      %p43 = scmp.eq.s32.totalorder %s21, 1
      %p44 = por %p42, %p43
      %p46 = scmp.ne.s32.totalorder %s29, %s45
      %p47 = scmp.eq.s32.totalorder %s21, 0
      %p48 = por %p46, %p47
      %s50 = sadd.s32 %s49, 1
      %p53 = scmp.eq.s32.totalorder %s15, 1
      %p54 = scmp.ne.s32.totalorder %s49, %s51
      %p55 = scmp.eq.s32.totalorder %s15, 0
      %p56 = por %p54, %p55
      %p57 = scmp.ne.s32.totalorder %s49, %s51
      %p58 = scmp.eq.s32.totalorder %s20, 1
      %p59 = por %p57, %p58
      %p60 = scmp.ne.s32.totalorder %s51, %s52
      %p61 = scmp.eq.s32.totalorder %s20, 0
      %p62 = por %p60, %p61
      %p63 = scmp.ne.s32.totalorder %s51, %s52
      %p64 = scmp.eq.s32.totalorder %s21, 1
      %p65 = por %p63, %p64
      %p67 = scmp.ne.s32.totalorder %s52, %s66
      %p68 = scmp.eq.s32.totalorder %s21, 0
      %p69 = por %p67, %p68
      %s71 = sadd.s32 %s70, 1
      %p74 = scmp.eq.s32.totalorder %s15, 1
      %p75 = scmp.ne.s32.totalorder %s70, %s72
      %p76 = scmp.eq.s32.totalorder %s15, 0
      %p77 = por %p75, %p76
      %p78 = scmp.ne.s32.totalorder %s70, %s72
      %p79 = scmp.eq.s32.totalorder %s20, 1
      %p80 = por %p78, %p79
      %p81 = scmp.ne.s32.totalorder %s72, %s73
      %p82 = scmp.eq.s32.totalorder %s20, 0
      %p83 = por %p81, %p82
      %p84 = scmp.ne.s32.totalorder %s72, %s73
      %p85 = scmp.eq.s32.totalorder %s21, 1
      %p86 = por %p84, %p85
      %p88 = scmp.ne.s32.totalorder %s73, %s87
      %p89 = scmp.eq.s32.totalorder %s21, 0
      %p90 = por %p88, %p89
      %s92 = sadd.s32 %s91, 1
      %p95 = scmp.eq.s32.totalorder %s15, 1
      %p96 = scmp.ne.s32.totalorder %s91, %s93
      %p97 = scmp.eq.s32.totalorder %s15, 0
      %p98 = por %p96, %p97
      %p99 = scmp.ne.s32.totalorder %s91, %s93
      %p100 = scmp.eq.s32.totalorder %s20, 1
      %p101 = por %p99, %p100
      %p102 = scmp.ne.s32.totalorder %s93, %s94
      %p103 = scmp.eq.s32.totalorder %s20, 0
      %p104 = por %p102, %p103
      %p105 = scmp.ne.s32.totalorder %s93, %s94
      %p106 = scmp.eq.s32.totalorder %s21, 1
      %p107 = por %p105, %p106
      %p109 = scmp.ne.s32.totalorder %s94, %s108
      %p110 = scmp.eq.s32.totalorder %s21, 0
      %p111 = por %p109, %p110
      %s113 = sadd.s32 %s112, 1
      %p116 = scmp.eq.s32.totalorder %s15, 1
      %p117 = scmp.ne.s32.totalorder %s112, %s114
      %p118 = scmp.eq.s32.totalorder %s15, 0
      %p119 = por %p117, %p118
      %p120 = scmp.ne.s32.totalorder %s112, %s114
      %p121 = scmp.eq.s32.totalorder %s20, 1
      %p122 = por %p120, %p121
      %p123 = scmp.ne.s32.totalorder %s114, %s115
      %p124 = scmp.eq.s32.totalorder %s20, 0
      %p125 = por %p123, %p124
      %p126 = scmp.ne.s32.totalorder %s114, %s115
      %p127 = scmp.eq.s32.totalorder %s21, 1
      %p128 = por %p126, %p127
      %p130 = scmp.ne.s32.totalorder %s115, %s129
      %p131 = scmp.eq.s32.totalorder %s21, 0
      %p132 = por %p130, %p131
      %s134 = sadd.s32 %s133, 1
      %p137 = scmp.eq.s32.totalorder %s15, 1
      %p138 = scmp.ne.s32.totalorder %s133, %s135
      %p139 = scmp.eq.s32.totalorder %s15, 0
      %p140 = por %p138, %p139
      %p141 = scmp.ne.s32.totalorder %s133, %s135
      %p142 = scmp.eq.s32.totalorder %s20, 1
      %p143 = por %p141, %p142
      %p144 = scmp.ne.s32.totalorder %s135, %s136
      %p145 = scmp.eq.s32.totalorder %s20, 0
      %p146 = por %p144, %p145
      %p147 = scmp.ne.s32.totalorder %s135, %s136
      %p148 = scmp.eq.s32.totalorder %s21, 1
      %p149 = por %p147, %p148
      %p151 = scmp.ne.s32.totalorder %s136, %s150
      %p152 = scmp.eq.s32.totalorder %s21, 0
      %p153 = por %p151, %p152
      %s154 = ssub.s32 %s15, %s22
      %p155 = scmp.eq.s32.totalorder %s154, 0
      %s157 = sadd.s32 %s156, 1
      %s158 = scalar_select %p155, %s156, %s157
      %p161 = pneg %p155
      %p162 = scmp.eq.s32.totalorder %s15, 1
      %p163 = por %p161, %p162
      %p164 = scmp.ne.s32.totalorder %s156, %s159
      %p165 = scmp.eq.s32.totalorder %s15, 0
      %p166 = por %p164, %p165
      %p167 = scmp.ne.s32.totalorder %s156, %s159
      %p168 = scmp.eq.s32.totalorder %s20, 1
      %p169 = por %p167, %p168
      %p170 = scmp.ne.s32.totalorder %s159, %s160
      %p171 = scmp.eq.s32.totalorder %s20, 0
      %p172 = por %p170, %p171
      %p173 = scmp.ne.s32.totalorder %s159, %s160
      %p174 = scmp.eq.s32.totalorder %s21, 1
      %p175 = por %p173, %p174
      %p177 = scmp.ne.s32.totalorder %s160, %s176
      %p178 = scmp.eq.s32.totalorder %s21, 0
      %p179 = por %p177, %p178
      %p180 = scmp.le.s32.totalorder 1, %s15
      %p181 = scmp.lt.s32.totalorder %s15, 3
      %p182 = pnand %p180, %p181
      %p183 = pneg %p182
      // Predicated region
      $region9: #{tpu_custom_call.1} parent=5 // pred_check
        _
      $region10: #{tpu_custom_call.1} parent=5 // pred_check_branch
        %185 = sbr.rel (%p182) target = $region12
      $region11: #{tpu_custom_call.1} parent=5 // pred_region
        %s186 = ssub.s32 %s15, 1
        // Predicated region
        $region13: #{tpu_custom_call.1} parent=11 // pred_check
          %p187 = pneg %p62
        $region14: #{tpu_custom_call.1} parent=11 // pred_check_branch
          %189 = sbr.rel (%p187) target = $region16
        $region15: #{tpu_custom_call.1} parent=11 // pred_region
          _
        $region16: #{tpu_custom_call.1} parent=11 // pred_fallthru
          _
        // Predicated region
        $region17: #{tpu_custom_call.1} parent=11 // pred_check
          %p190 = pneg %p83
        $region18: #{tpu_custom_call.1} parent=11 // pred_check_branch
          %192 = sbr.rel (%p190) target = $region20
        $region19: #{tpu_custom_call.1} parent=11 // pred_region
          _
        $region20: #{tpu_custom_call.1} parent=11 // pred_fallthru
          _
        // Predicated region
        $region21: #{tpu_custom_call.1} parent=11 // pred_check
          %p193 = pneg %p104
        $region22: #{tpu_custom_call.1} parent=11 // pred_check_branch
          %195 = sbr.rel (%p193) target = $region24
        $region23: #{tpu_custom_call.1} parent=11 // pred_region
          _
        $region24: #{tpu_custom_call.1} parent=11 // pred_fallthru
          _
        // Predicated region
        $region25: #{tpu_custom_call.1} parent=11 // pred_check
          %p196 = pneg %p125
        $region26: #{tpu_custom_call.1} parent=11 // pred_check_branch
          %198 = sbr.rel (%p196) target = $region28
        $region27: #{tpu_custom_call.1} parent=11 // pred_region
          _
        $region28: #{tpu_custom_call.1} parent=11 // pred_fallthru
          _
        // Predicated region
        $region29: #{tpu_custom_call.1} parent=11 // pred_check
          %p199 = pneg %p146
        $region30: #{tpu_custom_call.1} parent=11 // pred_check_branch
          %201 = sbr.rel (%p199) target = $region32
        $region31: #{tpu_custom_call.1} parent=11 // pred_region
          _
        $region32: #{tpu_custom_call.1} parent=11 // pred_fallthru
          _
      $region12: #{tpu_custom_call.1} parent=5 // pred_fallthru
        _
      %p202 = scmp.lt.s32.totalorder %s15, 2
      // Predicated region
      $region33: #{tpu_custom_call.1} parent=5 // pred_check
        %p203 = pneg %p202
      $region34: #{tpu_custom_call.1} parent=5 // pred_check_branch
        %205 = sbr.rel (%p203) target = $region36
      $region35: #{tpu_custom_call.1} parent=5 // pred_region
        // Predicated region
        $region37: #{tpu_custom_call.1} parent=35 // pred_check
          %p206 = pneg %p35
        $region38: #{tpu_custom_call.1} parent=35 // pred_check_branch
          %208 = sbr.rel (%p206) target = $region40
        $region39: #{tpu_custom_call.1} parent=35 // pred_region
          %p209 = scmp.lt.s32.totalorder %s15, 1
          %s210 = scalar_select %p209, %s15, 1
          %s211 = smul.addr %s210, 10
          %s212 = smul.addr %s211, 8
          %s213 = scalar_lea.vmem %s0, %s212
        $region40: #{tpu_custom_call.1} parent=35 // pred_fallthru
          _
      $region36: #{tpu_custom_call.1} parent=5 // pred_fallthru
        _
      %p214 = scmp.le.s32.totalorder 1, %s15
      %p215 = scmp.lt.s32.totalorder %s15, 3
      %p216 = pnand %p214, %p215
      %p217 = pneg %p216
      // Predicated region
      $region41: #{tpu_custom_call.1} parent=5 // pred_check
        _
      $region42: #{tpu_custom_call.1} parent=5 // pred_check_branch
        %219 = sbr.rel (%p216) target = $region44
      $region43: #{tpu_custom_call.1} parent=5 // pred_region
        %s220 = ssub.s32 %s15, 1
        %p221 = scmp.lt.s32.totalorder %s20, 1
        %s222 = scalar_select %p221, %s20, 1
        %s223 = smul.addr %s222, 10
        %s224 = smul.addr %s223, 8
        %s225 = scalar_lea.vmem %s0, %s224
        %p226 = pneg %p41
        %p227 = pneg %p38
        %p228 = pneg %p62
        %p229 = pneg %p59
        %p230 = pneg %p83
        %p231 = pneg %p80
        %p232 = pneg %p104
        %p233 = pneg %p101
        %p234 = pneg %p125
        %p235 = pneg %p122
        %p236 = pneg %p146
        %p237 = pneg %p143
        %p238 = pneg %p172
        %p239 = pneg %p169
        %s240 = sand.u32 %s159, 1
        %s241 = scalar_lea.sflag [#allocation6], %s240
        %s242 = sand.u32 %s159, 1
        %s243 = scalar_lea.vmem [#allocation5], %s242
        %p244 = scmp.lt.s32.totalorder %s20, 1
        %s245 = scalar_select %p244, %s20, 1
        %s246 = smul.addr %s245, 10
        %s247 = smul.addr %s246, 8
        %s248 = scalar_lea.vmem %s0, %s247
        %249 = vst [vmem:[#allocation2] sm:$0xff] 0.0
        %250 = vst [vmem:[#allocation2 + $0x48] sm:$0xff] 0.0
        %251 = vst [vmem:[#allocation3] sm:$0xff] 0.0
        %252 = vst [vmem:[#allocation3 + $0x48] sm:$0xff] 0.0
        %v253 = vld [vmem:[%s248] sm:$0xff]
        %v254 = vld [vmem:[%s248 + $0x8] sm:$0xff]
        %v255 = vld [vmem:[%s248 + $0x10] sm:$0xff]
        %v256 = vld [vmem:[%s248 + $0x18] sm:$0xff]
        %v257 = vld [vmem:[%s248 + $0x20] sm:$0xff]
        %v258 = vld [vmem:[%s248 + $0x28] sm:$0xff]
        %v259 = vld [vmem:[%s248 + $0x30] sm:$0xff]
        %v260 = vld [vmem:[%s248 + $0x38] sm:$0xff]
        %v261 = vld [vmem:[%s248 + $0x40] sm:$0xff]
        %271 = vrot.lane.b32.xlu0 %v253, 33
        %v272 = vpop.permute.xlu0 %271
        %273 = vrot.lane.b32.xlu0 %v254, 33
        %v274 = vpop.permute.xlu0 %273
        %275 = vrot.lane.b32.xlu0 %v255, 33
        %v276 = vpop.permute.xlu0 %275
        %277 = vrot.lane.b32.xlu0 %v256, 33
        %v278 = vpop.permute.xlu0 %277
        %279 = vrot.lane.b32.xlu0 %v257, 33
        %v280 = vpop.permute.xlu0 %279
        %281 = vrot.lane.b32.xlu0 %v258, 33
        %v282 = vpop.permute.xlu0 %281
        %283 = vrot.lane.b32.xlu0 %v259, 33
        %v284 = vpop.permute.xlu0 %283
        %285 = vrot.lane.b32.xlu0 %v260, 33
        %v286 = vpop.permute.xlu0 %285
        %287 = vrot.lane.b32.xlu0 %v261, 33
        %v288 = vpop.permute.xlu0 %287
        %vm289 = vcmask 269312
        %v290 = vsel %vm289, %v272, %v274
        %v291 = vsel %vm289, %v274, %v276
        %v292 = vsel %vm289, %v276, %v278
        %v293 = vsel %vm289, %v278, %v280
        %v294 = vsel %vm289, %v280, %v282
        %v295 = vsel %vm289, %v282, %v284
        %v296 = vsel %vm289, %v284, %v286
        %v297 = vsel %vm289, %v286, %v288
        %306 = vst [vmem:[#allocation4] sm:$0xff] %v290
        %307 = vst [vmem:[#allocation4 + $0x8] sm:$0xff] %v291
        %308 = vst [vmem:[#allocation4 + $0x10] sm:$0xff] %v292
        %309 = vst [vmem:[#allocation4 + $0x18] sm:$0xff] %v293
        %310 = vst [vmem:[#allocation4 + $0x20] sm:$0xff] %v294
        %311 = vst [vmem:[#allocation4 + $0x28] sm:$0xff] %v295
        %312 = vst [vmem:[#allocation4 + $0x30] sm:$0xff] %v296
        %313 = vst [vmem:[#allocation4 + $0x38] sm:$0xff] %v297
        %v314 = vld [vmem:[%s248] sm:$0xff]
        %v315 = vld [vmem:[%s248 + $0x8] sm:$0xff]
        %v316 = vld [vmem:[%s248 + $0x10] sm:$0xff]
        %v317 = vld [vmem:[%s248 + $0x18] sm:$0xff]
        %v318 = vld [vmem:[%s248 + $0x20] sm:$0xff]
        %v319 = vld [vmem:[%s248 + $0x28] sm:$0xff]
        %v320 = vld [vmem:[%s248 + $0x30] sm:$0xff]
        %v321 = vld [vmem:[%s248 + $0x38] sm:$0xff]
        %v322 = vld [vmem:[%s248 + $0x40] sm:$0xff]
        %332 = vrot.lane.b32.xlu0 %v314, 32
        %v333 = vpop.permute.xlu0 %332
        %334 = vrot.lane.b32.xlu0 %v315, 32
        %v335 = vpop.permute.xlu0 %334
        %336 = vrot.lane.b32.xlu0 %v316, 32
        %v337 = vpop.permute.xlu0 %336
        %338 = vrot.lane.b32.xlu0 %v317, 32
        %v339 = vpop.permute.xlu0 %338
        %340 = vrot.lane.b32.xlu0 %v318, 32
        %v341 = vpop.permute.xlu0 %340
        %342 = vrot.lane.b32.xlu0 %v319, 32
        %v343 = vpop.permute.xlu0 %342
        %344 = vrot.lane.b32.xlu0 %v320, 32
        %v345 = vpop.permute.xlu0 %344
        %346 = vrot.lane.b32.xlu0 %v321, 32
        %v347 = vpop.permute.xlu0 %346
        %348 = vrot.lane.b32.xlu0 %v322, 32
        %v349 = vpop.permute.xlu0 %348
        %vm350 = vcmask 261120
        %v351 = vsel %vm350, %v333, %v335
        %v352 = vsel %vm350, %v335, %v337
        %v353 = vsel %vm350, %v337, %v339
        %v354 = vsel %vm350, %v339, %v341
        %v355 = vsel %vm350, %v341, %v343
        %v356 = vsel %vm350, %v343, %v345
        %v357 = vsel %vm350, %v345, %v347
        %v358 = vsel %vm350, %v347, %v349
        %367 = vst [vmem:[#allocation4 + $0x40] sm:$0xff] %v351
        %368 = vst [vmem:[#allocation4 + $0x48] sm:$0xff] %v352
        %369 = vst [vmem:[#allocation4 + $0x50] sm:$0xff] %v353
        %370 = vst [vmem:[#allocation4 + $0x58] sm:$0xff] %v354
        %371 = vst [vmem:[#allocation4 + $0x60] sm:$0xff] %v355
        %372 = vst [vmem:[#allocation4 + $0x68] sm:$0xff] %v356
        %373 = vst [vmem:[#allocation4 + $0x70] sm:$0xff] %v357
        %374 = vst [vmem:[#allocation4 + $0x78] sm:$0xff] %v358
        %v375 = vld [vmem:[%s248] sm:$0xff]
        %v376 = vld [vmem:[%s248 + $0x8] sm:$0xff]
        %v377 = vld [vmem:[%s248 + $0x10] sm:$0xff]
        %v378 = vld [vmem:[%s248 + $0x18] sm:$0xff]
        %v379 = vld [vmem:[%s248 + $0x20] sm:$0xff]
        %v380 = vld [vmem:[%s248 + $0x28] sm:$0xff]
        %v381 = vld [vmem:[%s248 + $0x30] sm:$0xff]
        %v382 = vld [vmem:[%s248 + $0x38] sm:$0xff]
        %v383 = vld [vmem:[%s248 + $0x40] sm:$0xff]
        %393 = vrot.lane.b32.xlu0 %v375, 31
        %v394 = vpop.permute.xlu0 %393
        %395 = vrot.lane.b32.xlu0 %v376, 31
        %v396 = vpop.permute.xlu0 %395
        %397 = vrot.lane.b32.xlu0 %v377, 31
        %v398 = vpop.permute.xlu0 %397
        %399 = vrot.lane.b32.xlu0 %v378, 31
        %v400 = vpop.permute.xlu0 %399
        %401 = vrot.lane.b32.xlu0 %v379, 31
        %v402 = vpop.permute.xlu0 %401
        %403 = vrot.lane.b32.xlu0 %v380, 31
        %v404 = vpop.permute.xlu0 %403
        %405 = vrot.lane.b32.xlu0 %v381, 31
        %v406 = vpop.permute.xlu0 %405
        %407 = vrot.lane.b32.xlu0 %v382, 31
        %v408 = vpop.permute.xlu0 %407
        %409 = vrot.lane.b32.xlu0 %v383, 31
        %v410 = vpop.permute.xlu0 %409
        %vm411 = vcmask 252928
        %v412 = vsel %vm411, %v394, %v396
        %v413 = vsel %vm411, %v396, %v398
        %v414 = vsel %vm411, %v398, %v400
        %v415 = vsel %vm411, %v400, %v402
        %v416 = vsel %vm411, %v402, %v404
        %v417 = vsel %vm411, %v404, %v406
        %v418 = vsel %vm411, %v406, %v408
        %v419 = vsel %vm411, %v408, %v410
        %428 = vst [vmem:[#allocation4 + $0x80] sm:$0xff] %v412
        %429 = vst [vmem:[#allocation4 + $0x88] sm:$0xff] %v413
        %430 = vst [vmem:[#allocation4 + $0x90] sm:$0xff] %v414
        %431 = vst [vmem:[#allocation4 + $0x98] sm:$0xff] %v415
        %432 = vst [vmem:[#allocation4 + $0xa0] sm:$0xff] %v416
        %433 = vst [vmem:[#allocation4 + $0xa8] sm:$0xff] %v417
        %434 = vst [vmem:[#allocation4 + $0xb0] sm:$0xff] %v418
        %435 = vst [vmem:[#allocation4 + $0xb8] sm:$0xff] %v419
        %v436 = vld [vmem:[%s248] sm:$0xff]
        %v437 = vld [vmem:[%s248 + $0x8] sm:$0xff]
        %v438 = vld [vmem:[%s248 + $0x10] sm:$0xff]
        %v439 = vld [vmem:[%s248 + $0x18] sm:$0xff]
        %v440 = vld [vmem:[%s248 + $0x20] sm:$0xff]
        %v441 = vld [vmem:[%s248 + $0x28] sm:$0xff]
        %v442 = vld [vmem:[%s248 + $0x30] sm:$0xff]
        %v443 = vld [vmem:[%s248 + $0x38] sm:$0xff]
        %v444 = vld [vmem:[%s248 + $0x40] sm:$0xff]
        %454 = vrot.lane.b32.xlu0 %v436, 1
        %v455 = vpop.permute.xlu0 %454
        %456 = vrot.lane.b32.xlu0 %v437, 1
        %v457 = vpop.permute.xlu0 %456
        %458 = vrot.lane.b32.xlu0 %v438, 1
        %v459 = vpop.permute.xlu0 %458
        %460 = vrot.lane.b32.xlu0 %v439, 1
        %v461 = vpop.permute.xlu0 %460
        %462 = vrot.lane.b32.xlu0 %v440, 1
        %v463 = vpop.permute.xlu0 %462
        %464 = vrot.lane.b32.xlu0 %v441, 1
        %v465 = vpop.permute.xlu0 %464
        %466 = vrot.lane.b32.xlu0 %v442, 1
        %v467 = vpop.permute.xlu0 %466
        %468 = vrot.lane.b32.xlu0 %v443, 1
        %v469 = vpop.permute.xlu0 %468
        %470 = vrot.lane.b32.xlu0 %v444, 1
        %v471 = vpop.permute.xlu0 %470
        %vm472 = vcmask 7168
        %v473 = vsel %vm472, %v455, %v457
        %v474 = vsel %vm472, %v457, %v459
        %v475 = vsel %vm472, %v459, %v461
        %v476 = vsel %vm472, %v461, %v463
        %v477 = vsel %vm472, %v463, %v465
        %v478 = vsel %vm472, %v465, %v467
        %v479 = vsel %vm472, %v467, %v469
        %v480 = vsel %vm472, %v469, %v471
        %489 = vst [vmem:[#allocation4 + $0xc0] sm:$0xff] %v473
        %490 = vst [vmem:[#allocation4 + $0xc8] sm:$0xff] %v474
        %491 = vst [vmem:[#allocation4 + $0xd0] sm:$0xff] %v475
        %492 = vst [vmem:[#allocation4 + $0xd8] sm:$0xff] %v476
        %493 = vst [vmem:[#allocation4 + $0xe0] sm:$0xff] %v477
        %494 = vst [vmem:[#allocation4 + $0xe8] sm:$0xff] %v478
        %495 = vst [vmem:[#allocation4 + $0xf0] sm:$0xff] %v479
        %496 = vst [vmem:[#allocation4 + $0xf8] sm:$0xff] %v480
        %v497 = vld [vmem:[%s248 + $0x8] sm:$0xff]
        %v498 = vld [vmem:[%s248 + $0x10] sm:$0xff]
        %v499 = vld [vmem:[%s248 + $0x18] sm:$0xff]
        %v500 = vld [vmem:[%s248 + $0x20] sm:$0xff]
        %v501 = vld [vmem:[%s248 + $0x28] sm:$0xff]
        %v502 = vld [vmem:[%s248 + $0x30] sm:$0xff]
        %v503 = vld [vmem:[%s248 + $0x38] sm:$0xff]
        %v504 = vld [vmem:[%s248 + $0x40] sm:$0xff]
        %505 = vst [vmem:[#allocation4 + $0x100] sm:$0xff] %v497
        %506 = vst [vmem:[#allocation4 + $0x108] sm:$0xff] %v498
        %507 = vst [vmem:[#allocation4 + $0x110] sm:$0xff] %v499
        %508 = vst [vmem:[#allocation4 + $0x118] sm:$0xff] %v500
        %509 = vst [vmem:[#allocation4 + $0x120] sm:$0xff] %v501
        %510 = vst [vmem:[#allocation4 + $0x128] sm:$0xff] %v502
        %511 = vst [vmem:[#allocation4 + $0x130] sm:$0xff] %v503
        %512 = vst [vmem:[#allocation4 + $0x138] sm:$0xff] %v504
        %v513 = vld [vmem:[%s248 + $0x8] sm:$0xff]
        %v514 = vld [vmem:[%s248 + $0x10] sm:$0xff]
        %v515 = vld [vmem:[%s248 + $0x18] sm:$0xff]
        %v516 = vld [vmem:[%s248 + $0x20] sm:$0xff]
        %v517 = vld [vmem:[%s248 + $0x28] sm:$0xff]
        %v518 = vld [vmem:[%s248 + $0x30] sm:$0xff]
        %v519 = vld [vmem:[%s248 + $0x38] sm:$0xff]
        %v520 = vld [vmem:[%s248 + $0x40] sm:$0xff]
        %v521 = vld [vmem:[%s248 + $0x48] sm:$0xff]
        %531 = vrot.lane.b32.xlu0 %v513, 127
        %v532 = vpop.permute.xlu0 %531
        %533 = vrot.lane.b32.xlu0 %v514, 127
        %v534 = vpop.permute.xlu0 %533
        %535 = vrot.lane.b32.xlu0 %v515, 127
        %v536 = vpop.permute.xlu0 %535
        %537 = vrot.lane.b32.xlu0 %v516, 127
        %v538 = vpop.permute.xlu0 %537
        %539 = vrot.lane.b32.xlu0 %v517, 127
        %v540 = vpop.permute.xlu0 %539
        %541 = vrot.lane.b32.xlu0 %v518, 127
        %v542 = vpop.permute.xlu0 %541
        %543 = vrot.lane.b32.xlu0 %v519, 127
        %v544 = vpop.permute.xlu0 %543
        %545 = vrot.lane.b32.xlu0 %v520, 127
        %v546 = vpop.permute.xlu0 %545
        %547 = vrot.lane.b32.xlu0 %v521, 127
        %v548 = vpop.permute.xlu0 %547
        %vm549 = vcmask 1039360
        %v550 = vsel %vm549, %v532, %v534
        %v551 = vsel %vm549, %v534, %v536
        %v552 = vsel %vm549, %v536, %v538
        %v553 = vsel %vm549, %v538, %v540
        %v554 = vsel %vm549, %v540, %v542
        %v555 = vsel %vm549, %v542, %v544
        %v556 = vsel %vm549, %v544, %v546
        %v557 = vsel %vm549, %v546, %v548
        %566 = vst [vmem:[#allocation4 + $0x140] sm:$0xff] %v550
        %567 = vst [vmem:[#allocation4 + $0x148] sm:$0xff] %v551
        %568 = vst [vmem:[#allocation4 + $0x150] sm:$0xff] %v552
        %569 = vst [vmem:[#allocation4 + $0x158] sm:$0xff] %v553
        %570 = vst [vmem:[#allocation4 + $0x160] sm:$0xff] %v554
        %571 = vst [vmem:[#allocation4 + $0x168] sm:$0xff] %v555
        %572 = vst [vmem:[#allocation4 + $0x170] sm:$0xff] %v556
        %573 = vst [vmem:[#allocation4 + $0x178] sm:$0xff] %v557
        %v574 = vld [vmem:[%s248 + $0x8] sm:$0xff]
        %v575 = vld [vmem:[%s248 + $0x10] sm:$0xff]
        %v576 = vld [vmem:[%s248 + $0x18] sm:$0xff]
        %v577 = vld [vmem:[%s248 + $0x20] sm:$0xff]
        %v578 = vld [vmem:[%s248 + $0x28] sm:$0xff]
        %v579 = vld [vmem:[%s248 + $0x30] sm:$0xff]
        %v580 = vld [vmem:[%s248 + $0x38] sm:$0xff]
        %v581 = vld [vmem:[%s248 + $0x40] sm:$0xff]
        %v582 = vld [vmem:[%s248 + $0x48] sm:$0xff]
        %592 = vrot.lane.b32.xlu0 %v574, 97
        %v593 = vpop.permute.xlu0 %592
        %594 = vrot.lane.b32.xlu0 %v575, 97
        %v595 = vpop.permute.xlu0 %594
        %596 = vrot.lane.b32.xlu0 %v576, 97
        %v597 = vpop.permute.xlu0 %596
        %598 = vrot.lane.b32.xlu0 %v577, 97
        %v599 = vpop.permute.xlu0 %598
        %600 = vrot.lane.b32.xlu0 %v578, 97
        %v601 = vpop.permute.xlu0 %600
        %602 = vrot.lane.b32.xlu0 %v579, 97
        %v603 = vpop.permute.xlu0 %602
        %604 = vrot.lane.b32.xlu0 %v580, 97
        %v605 = vpop.permute.xlu0 %604
        %606 = vrot.lane.b32.xlu0 %v581, 97
        %v607 = vpop.permute.xlu0 %606
        %608 = vrot.lane.b32.xlu0 %v582, 97
        %v609 = vpop.permute.xlu0 %608
        %vm610 = vcmask 793600
        %v611 = vsel %vm610, %v593, %v595
        %v612 = vsel %vm610, %v595, %v597
        %v613 = vsel %vm610, %v597, %v599
        %v614 = vsel %vm610, %v599, %v601
        %v615 = vsel %vm610, %v601, %v603
        %v616 = vsel %vm610, %v603, %v605
        %v617 = vsel %vm610, %v605, %v607
        %v618 = vsel %vm610, %v607, %v609
        %627 = vst [vmem:[#allocation4 + $0x180] sm:$0xff] %v611
        %628 = vst [vmem:[#allocation4 + $0x188] sm:$0xff] %v612
        %629 = vst [vmem:[#allocation4 + $0x190] sm:$0xff] %v613
        %630 = vst [vmem:[#allocation4 + $0x198] sm:$0xff] %v614
        %631 = vst [vmem:[#allocation4 + $0x1a0] sm:$0xff] %v615
        %632 = vst [vmem:[#allocation4 + $0x1a8] sm:$0xff] %v616
        %633 = vst [vmem:[#allocation4 + $0x1b0] sm:$0xff] %v617
        %634 = vst [vmem:[#allocation4 + $0x1b8] sm:$0xff] %v618
        %v635 = vld [vmem:[%s248 + $0x8] sm:$0xff]
        %v636 = vld [vmem:[%s248 + $0x10] sm:$0xff]
        %v637 = vld [vmem:[%s248 + $0x18] sm:$0xff]
        %v638 = vld [vmem:[%s248 + $0x20] sm:$0xff]
        %v639 = vld [vmem:[%s248 + $0x28] sm:$0xff]
        %v640 = vld [vmem:[%s248 + $0x30] sm:$0xff]
        %v641 = vld [vmem:[%s248 + $0x38] sm:$0xff]
        %v642 = vld [vmem:[%s248 + $0x40] sm:$0xff]
        %v643 = vld [vmem:[%s248 + $0x48] sm:$0xff]
        %653 = vrot.lane.b32.xlu0 %v635, 96
        %v654 = vpop.permute.xlu0 %653
        %655 = vrot.lane.b32.xlu0 %v636, 96
        %v656 = vpop.permute.xlu0 %655
        %657 = vrot.lane.b32.xlu0 %v637, 96
        %v658 = vpop.permute.xlu0 %657
        %659 = vrot.lane.b32.xlu0 %v638, 96
        %v660 = vpop.permute.xlu0 %659
        %661 = vrot.lane.b32.xlu0 %v639, 96
        %v662 = vpop.permute.xlu0 %661
        %663 = vrot.lane.b32.xlu0 %v640, 96
        %v664 = vpop.permute.xlu0 %663
        %665 = vrot.lane.b32.xlu0 %v641, 96
        %v666 = vpop.permute.xlu0 %665
        %667 = vrot.lane.b32.xlu0 %v642, 96
        %v668 = vpop.permute.xlu0 %667
        %669 = vrot.lane.b32.xlu0 %v643, 96
        %v670 = vpop.permute.xlu0 %669
        %vm671 = vcmask 785408
        %v672 = vsel %vm671, %v654, %v656
        %v673 = vsel %vm671, %v656, %v658
        %v674 = vsel %vm671, %v658, %v660
        %v675 = vsel %vm671, %v660, %v662
        %v676 = vsel %vm671, %v662, %v664
        %v677 = vsel %vm671, %v664, %v666
        %v678 = vsel %vm671, %v666, %v668
        %v679 = vsel %vm671, %v668, %v670
        %688 = vst [vmem:[#allocation4 + $0x1c0] sm:$0xff] %v672
        %689 = vst [vmem:[#allocation4 + $0x1c8] sm:$0xff] %v673
        %690 = vst [vmem:[#allocation4 + $0x1d0] sm:$0xff] %v674
        %691 = vst [vmem:[#allocation4 + $0x1d8] sm:$0xff] %v675
        %692 = vst [vmem:[#allocation4 + $0x1e0] sm:$0xff] %v676
        %693 = vst [vmem:[#allocation4 + $0x1e8] sm:$0xff] %v677
        %694 = vst [vmem:[#allocation4 + $0x1f0] sm:$0xff] %v678
        %695 = vst [vmem:[#allocation4 + $0x1f8] sm:$0xff] %v679
        %v696 = vld [vmem:[%s248 + $0x8] sm:$0xff]
        %v697 = vld [vmem:[%s248 + $0x10] sm:$0xff]
        %v698 = vld [vmem:[%s248 + $0x18] sm:$0xff]
        %v699 = vld [vmem:[%s248 + $0x20] sm:$0xff]
        %v700 = vld [vmem:[%s248 + $0x28] sm:$0xff]
        %v701 = vld [vmem:[%s248 + $0x30] sm:$0xff]
        %v702 = vld [vmem:[%s248 + $0x38] sm:$0xff]
        %v703 = vld [vmem:[%s248 + $0x40] sm:$0xff]
        %v704 = vld [vmem:[%s248 + $0x48] sm:$0xff]
        %714 = vrot.lane.b32.xlu0 %v696, 95
        %v715 = vpop.permute.xlu0 %714
        %716 = vrot.lane.b32.xlu0 %v697, 95
        %v717 = vpop.permute.xlu0 %716
        %718 = vrot.lane.b32.xlu0 %v698, 95
        %v719 = vpop.permute.xlu0 %718
        %720 = vrot.lane.b32.xlu0 %v699, 95
        %v721 = vpop.permute.xlu0 %720
        %722 = vrot.lane.b32.xlu0 %v700, 95
        %v723 = vpop.permute.xlu0 %722
        %724 = vrot.lane.b32.xlu0 %v701, 95
        %v725 = vpop.permute.xlu0 %724
        %726 = vrot.lane.b32.xlu0 %v702, 95
        %v727 = vpop.permute.xlu0 %726
        %728 = vrot.lane.b32.xlu0 %v703, 95
        %v729 = vpop.permute.xlu0 %728
        %730 = vrot.lane.b32.xlu0 %v704, 95
        %v731 = vpop.permute.xlu0 %730
        %vm732 = vcmask 777216
        %v733 = vsel %vm732, %v715, %v717
        %v734 = vsel %vm732, %v717, %v719
        %v735 = vsel %vm732, %v719, %v721
        %v736 = vsel %vm732, %v721, %v723
        %v737 = vsel %vm732, %v723, %v725
        %v738 = vsel %vm732, %v725, %v727
        %v739 = vsel %vm732, %v727, %v729
        %v740 = vsel %vm732, %v729, %v731
        %749 = vst [vmem:[#allocation4 + $0x200] sm:$0xff] %v733
        %750 = vst [vmem:[#allocation4 + $0x208] sm:$0xff] %v734
        %751 = vst [vmem:[#allocation4 + $0x210] sm:$0xff] %v735
        %752 = vst [vmem:[#allocation4 + $0x218] sm:$0xff] %v736
        %753 = vst [vmem:[#allocation4 + $0x220] sm:$0xff] %v737
        %754 = vst [vmem:[#allocation4 + $0x228] sm:$0xff] %v738
        %755 = vst [vmem:[#allocation4 + $0x230] sm:$0xff] %v739
        %756 = vst [vmem:[#allocation4 + $0x238] sm:$0xff] %v740
        %v757 = vld [vmem:[%s1] sm:$0xff]
        %v758 = vld [vmem:[#allocation4] sm:$0xff]
        %v759 = vld [vmem:[#allocation4 + $0x8] sm:$0xff]
        %v760 = vld [vmem:[#allocation4 + $0x10] sm:$0xff]
        %v761 = vld [vmem:[#allocation4 + $0x18] sm:$0xff]
        %v762 = vld [vmem:[#allocation4 + $0x20] sm:$0xff]
        %v763 = vld [vmem:[#allocation4 + $0x28] sm:$0xff]
        %v764 = vld [vmem:[#allocation4 + $0x30] sm:$0xff]
        %v765 = vld [vmem:[#allocation4 + $0x38] sm:$0xff]
        %v766 = vld [vmem:[#allocation4 + $0x40] sm:$0xff]
        %v767 = vld [vmem:[#allocation4 + $0x48] sm:$0xff]
        %v768 = vld [vmem:[#allocation4 + $0x50] sm:$0xff]
        %v769 = vld [vmem:[#allocation4 + $0x58] sm:$0xff]
        %v770 = vld [vmem:[#allocation4 + $0x60] sm:$0xff]
        %v771 = vld [vmem:[#allocation4 + $0x68] sm:$0xff]
        %v772 = vld [vmem:[#allocation4 + $0x70] sm:$0xff]
        %v773 = vld [vmem:[#allocation4 + $0x78] sm:$0xff]
        %v774 = vld [vmem:[#allocation4 + $0x80] sm:$0xff]
        %v775 = vld [vmem:[#allocation4 + $0x88] sm:$0xff]
        %v776 = vld [vmem:[#allocation4 + $0x90] sm:$0xff]
        %v777 = vld [vmem:[#allocation4 + $0x98] sm:$0xff]
        %v778 = vld [vmem:[#allocation4 + $0xa0] sm:$0xff]
        %v779 = vld [vmem:[#allocation4 + $0xa8] sm:$0xff]
        %v780 = vld [vmem:[#allocation4 + $0xb0] sm:$0xff]
        %v781 = vld [vmem:[#allocation4 + $0xb8] sm:$0xff]
        %v782 = vld [vmem:[#allocation4 + $0xc0] sm:$0xff]
        %v783 = vld [vmem:[#allocation4 + $0xc8] sm:$0xff]
        %v784 = vld [vmem:[#allocation4 + $0xd0] sm:$0xff]
        %v785 = vld [vmem:[#allocation4 + $0xd8] sm:$0xff]
        %v786 = vld [vmem:[#allocation4 + $0xe0] sm:$0xff]
        %v787 = vld [vmem:[#allocation4 + $0xe8] sm:$0xff]
        %v788 = vld [vmem:[#allocation4 + $0xf0] sm:$0xff]
        %v789 = vld [vmem:[#allocation4 + $0xf8] sm:$0xff]
        %v790 = vld [vmem:[#allocation4 + $0x100] sm:$0xff]
        %v791 = vld [vmem:[#allocation4 + $0x108] sm:$0xff]
        %v792 = vld [vmem:[#allocation4 + $0x110] sm:$0xff]
        %v793 = vld [vmem:[#allocation4 + $0x118] sm:$0xff]
        %v794 = vld [vmem:[#allocation4 + $0x120] sm:$0xff]
        %v795 = vld [vmem:[#allocation4 + $0x128] sm:$0xff]
        %v796 = vld [vmem:[#allocation4 + $0x130] sm:$0xff]
        %v797 = vld [vmem:[#allocation4 + $0x138] sm:$0xff]
        %v798 = vld [vmem:[#allocation4 + $0x140] sm:$0xff]
        %v799 = vld [vmem:[#allocation4 + $0x148] sm:$0xff]
        %v800 = vld [vmem:[#allocation4 + $0x150] sm:$0xff]
        %v801 = vld [vmem:[#allocation4 + $0x158] sm:$0xff]
        %v802 = vld [vmem:[#allocation4 + $0x160] sm:$0xff]
        %v803 = vld [vmem:[#allocation4 + $0x168] sm:$0xff]
        %v804 = vld [vmem:[#allocation4 + $0x170] sm:$0xff]
        %v805 = vld [vmem:[#allocation4 + $0x178] sm:$0xff]
        %v806 = vld [vmem:[#allocation4 + $0x180] sm:$0xff]
        %v807 = vld [vmem:[#allocation4 + $0x188] sm:$0xff]
        %v808 = vld [vmem:[#allocation4 + $0x190] sm:$0xff]
        %v809 = vld [vmem:[#allocation4 + $0x198] sm:$0xff]
        %v810 = vld [vmem:[#allocation4 + $0x1a0] sm:$0xff]
        %v811 = vld [vmem:[#allocation4 + $0x1a8] sm:$0xff]
        %v812 = vld [vmem:[#allocation4 + $0x1b0] sm:$0xff]
        %v813 = vld [vmem:[#allocation4 + $0x1b8] sm:$0xff]
        %v814 = vld [vmem:[#allocation4 + $0x1c0] sm:$0xff]
        %v815 = vld [vmem:[#allocation4 + $0x1c8] sm:$0xff]
        %v816 = vld [vmem:[#allocation4 + $0x1d0] sm:$0xff]
        %v817 = vld [vmem:[#allocation4 + $0x1d8] sm:$0xff]
        %v818 = vld [vmem:[#allocation4 + $0x1e0] sm:$0xff]
        %v819 = vld [vmem:[#allocation4 + $0x1e8] sm:$0xff]
        %v820 = vld [vmem:[#allocation4 + $0x1f0] sm:$0xff]
        %v821 = vld [vmem:[#allocation4 + $0x1f8] sm:$0xff]
        %v822 = vld [vmem:[#allocation4 + $0x200] sm:$0xff]
        %v823 = vld [vmem:[#allocation4 + $0x208] sm:$0xff]
        %v824 = vld [vmem:[#allocation4 + $0x210] sm:$0xff]
        %v825 = vld [vmem:[#allocation4 + $0x218] sm:$0xff]
        %v826 = vld [vmem:[#allocation4 + $0x220] sm:$0xff]
        %v827 = vld [vmem:[#allocation4 + $0x228] sm:$0xff]
        %v828 = vld [vmem:[#allocation4 + $0x230] sm:$0xff]
        %v829 = vld [vmem:[#allocation4 + $0x238] sm:$0xff]
        %v830 = vld [vmem:[%s2] sm:$0xff]
        %832 = vset.pattern.permute.xlu0 0
        %833 = vperm.xlu0 %832, %v830
        %v834 = vpop.permute.xlu0 %833
        %vm836 = vcmask 588800
        %v838 = vsel %vm836, %v757, 0
        %840 = vmatprep.subr.mxu0 0.0
        %841 = vmatpush1.msra.mxu0 0.0
        %842 = vmatprep.subr.mxu0 0.0
        %843 = vmatpush1.msra.mxu0 0.0
        %844 = vmatprep.subr.mxu0 0.0
        %845 = vmatpush1.msra.mxu0 0.0
        %846 = vmatprep.subr.mxu0 0.0
        %847 = vmatpush1.msra.mxu0 0.0
        %848 = vmatprep.subr.mxu0 0.0
        %849 = vmatpush1.msra.mxu0 0.0
        %850 = vmatprep.subr.mxu0 0.0
        %851 = vmatpush1.msra.mxu0 0.0
        %852 = vmatprep.subr.mxu0 0.0
        %853 = vmatpush1.msra.mxu0 0.0
        %854 = vmatprep.subr.mxu0 %v823
        %855 = vmatpush1.msra.mxu0 %v822
        %856 = vmatprep.subr.mxu0 %v815
        %857 = vmatpush1.msra.mxu0 %v814
        %858 = vmatprep.subr.mxu0 %v807
        %859 = vmatpush1.msra.mxu0 %v806
        %860 = vmatprep.subr.mxu0 %v799
        %861 = vmatpush1.msra.mxu0 %v798
        %862 = vmatprep.subr.mxu0 %v791
        %863 = vmatpush1.msra.mxu0 %v790
        %864 = vmatprep.subr.mxu0 %v783
        %865 = vmatpush1.msra.mxu0 %v782
        %866 = vmatprep.subr.mxu0 %v775
        %867 = vmatpush1.msra.mxu0 %v774
        %868 = vmatprep.subr.mxu0 %v767
        %869 = vmatpush1.msra.mxu0 %v766
        %870 = vmatprep.subr.mxu0 %v759
        %871 = vmatpush1.msra.mxu0 %v758
        %872 = vmatprep.subr.mxu0 0.0
        %873 = vmatpush2.msra.mxu0 0.0
        %874 = vmatprep.subr.mxu0 0.0
        %875 = vmatpush2.msra.mxu0 0.0
        %876 = vmatprep.subr.mxu0 0.0
        %877 = vmatpush2.msra.mxu0 0.0
        %878 = vmatprep.subr.mxu0 0.0
        %879 = vmatpush2.msra.mxu0 0.0
        %880 = vmatprep.subr.mxu0 0.0
        %881 = vmatpush2.msra.mxu0 0.0
        %882 = vmatprep.subr.mxu0 0.0
        %883 = vmatpush2.msra.mxu0 0.0
        %884 = vmatprep.subr.mxu0 0.0
        %885 = vmatpush2.msra.mxu0 0.0
        %886 = vmatprep.subr.mxu0 0.0
        %887 = vmatpush2.msra.mxu0 0.0
        %888 = vmatprep.subr.mxu0 0.0
        %889 = vmatpush2.msra.mxu0 0.0
        %890 = vmatprep.subr.mxu0 0.0
        %891 = vmatpush2.msra.mxu0 0.0
        %892 = vmatprep.subr.mxu0 0.0
        %893 = vmatpush2.msra.mxu0 0.0
        %894 = vmatprep.subr.mxu0 0.0
        %895 = vmatpush2.msra.mxu0 0.0
        %896 = vmatprep.subr.mxu0 0.0
        %897 = vmatpush2.msra.mxu0 0.0
        %898 = vmatprep.subr.mxu0 0.0
        %899 = vmatpush2.msra.mxu0 0.0
        %900 = vmatprep.subr.mxu0 0.0
        %901 = vmatpush2.msra.mxu0 0.0
        %902 = vmatprep.subr.mxu0 0.0
        %903 = vmatpush2.msra.mxu0 0.0
        %904 = vmatprep.mubr.f32.mxu0 0.0
        %905 = vmatmul.mubr.f32.gmra.mxu0 %v838
        %v906 = vpop.f32.mrf.mxu0
        %v907 = vadd.f32 %v834, %v906
        %v908 = vpop.f32.mrf.mxu0
        %v909 = vadd.f32 %v834, %v908
        %910 = vdwg.mxu0
        %911 = vmatprep.subr.mxu0 0.0
        %912 = vmatpush1.msra.mxu0 0.0
        %913 = vmatprep.subr.mxu0 0.0
        %914 = vmatpush1.msra.mxu0 0.0
        %915 = vmatprep.subr.mxu0 0.0
        %916 = vmatpush1.msra.mxu0 0.0
        %917 = vmatprep.subr.mxu0 0.0
        %918 = vmatpush1.msra.mxu0 0.0
        %919 = vmatprep.subr.mxu0 0.0
        %920 = vmatpush1.msra.mxu0 0.0
        %921 = vmatprep.subr.mxu0 0.0
        %922 = vmatpush1.msra.mxu0 0.0
        %923 = vmatprep.subr.mxu0 0.0
        %924 = vmatpush1.msra.mxu0 0.0
        %925 = vmatprep.subr.mxu0 %v825
        %926 = vmatpush1.msra.mxu0 %v824
        %927 = vmatprep.subr.mxu0 %v817
        %928 = vmatpush1.msra.mxu0 %v816
        %929 = vmatprep.subr.mxu0 %v809
        %930 = vmatpush1.msra.mxu0 %v808
        %931 = vmatprep.subr.mxu0 %v801
        %932 = vmatpush1.msra.mxu0 %v800
        %933 = vmatprep.subr.mxu0 %v793
        %934 = vmatpush1.msra.mxu0 %v792
        %935 = vmatprep.subr.mxu0 %v785
        %936 = vmatpush1.msra.mxu0 %v784
        %937 = vmatprep.subr.mxu0 %v777
        %938 = vmatpush1.msra.mxu0 %v776
        %939 = vmatprep.subr.mxu0 %v769
        %940 = vmatpush1.msra.mxu0 %v768
        %941 = vmatprep.subr.mxu0 %v761
        %942 = vmatpush1.msra.mxu0 %v760
        %943 = vmatprep.subr.mxu0 0.0
        %944 = vmatpush2.msra.mxu0 0.0
        %945 = vmatprep.subr.mxu0 0.0
        %946 = vmatpush2.msra.mxu0 0.0
        %947 = vmatprep.subr.mxu0 0.0
        %948 = vmatpush2.msra.mxu0 0.0
        %949 = vmatprep.subr.mxu0 0.0
        %950 = vmatpush2.msra.mxu0 0.0
        %951 = vmatprep.subr.mxu0 0.0
        %952 = vmatpush2.msra.mxu0 0.0
        %953 = vmatprep.subr.mxu0 0.0
        %954 = vmatpush2.msra.mxu0 0.0
        %955 = vmatprep.subr.mxu0 0.0
        %956 = vmatpush2.msra.mxu0 0.0
        %957 = vmatprep.subr.mxu0 0.0
        %958 = vmatpush2.msra.mxu0 0.0
        %959 = vmatprep.subr.mxu0 0.0
        %960 = vmatpush2.msra.mxu0 0.0
        %961 = vmatprep.subr.mxu0 0.0
        %962 = vmatpush2.msra.mxu0 0.0
        %963 = vmatprep.subr.mxu0 0.0
        %964 = vmatpush2.msra.mxu0 0.0
        %965 = vmatprep.subr.mxu0 0.0
        %966 = vmatpush2.msra.mxu0 0.0
        %967 = vmatprep.subr.mxu0 0.0
        %968 = vmatpush2.msra.mxu0 0.0
        %969 = vmatprep.subr.mxu0 0.0
        %970 = vmatpush2.msra.mxu0 0.0
        %971 = vmatprep.subr.mxu0 0.0
        %972 = vmatpush2.msra.mxu0 0.0
        %973 = vmatprep.subr.mxu0 0.0
        %974 = vmatpush2.msra.mxu0 0.0
        %975 = vmatprep.mubr.f32.mxu0 0.0
        %976 = vmatmul.mubr.f32.gmra.mxu0 %v838
        %v977 = vpop.f32.mrf.mxu0
        %v978 = vadd.f32 %v834, %v977
        %v979 = vpop.f32.mrf.mxu0
        %v980 = vadd.f32 %v834, %v979
        %981 = vdwg.mxu0
        %982 = vmatprep.subr.mxu0 0.0
        %983 = vmatpush1.msra.mxu0 0.0
        %984 = vmatprep.subr.mxu0 0.0
        %985 = vmatpush1.msra.mxu0 0.0
        %986 = vmatprep.subr.mxu0 0.0
        %987 = vmatpush1.msra.mxu0 0.0
        %988 = vmatprep.subr.mxu0 0.0
        %989 = vmatpush1.msra.mxu0 0.0
        %990 = vmatprep.subr.mxu0 0.0
        %991 = vmatpush1.msra.mxu0 0.0
        %992 = vmatprep.subr.mxu0 0.0
        %993 = vmatpush1.msra.mxu0 0.0
        %994 = vmatprep.subr.mxu0 0.0
        %995 = vmatpush1.msra.mxu0 0.0
        %996 = vmatprep.subr.mxu0 %v827
        %997 = vmatpush1.msra.mxu0 %v826
        %998 = vmatprep.subr.mxu0 %v819
        %999 = vmatpush1.msra.mxu0 %v818
        %1000 = vmatprep.subr.mxu0 %v811
        %1001 = vmatpush1.msra.mxu0 %v810
        %1002 = vmatprep.subr.mxu0 %v803
        %1003 = vmatpush1.msra.mxu0 %v802
        %1004 = vmatprep.subr.mxu0 %v795
        %1005 = vmatpush1.msra.mxu0 %v794
        %1006 = vmatprep.subr.mxu0 %v787
        %1007 = vmatpush1.msra.mxu0 %v786
        %1008 = vmatprep.subr.mxu0 %v779
        %1009 = vmatpush1.msra.mxu0 %v778
        %1010 = vmatprep.subr.mxu0 %v771
        %1011 = vmatpush1.msra.mxu0 %v770
        %1012 = vmatprep.subr.mxu0 %v763
        %1013 = vmatpush1.msra.mxu0 %v762
        %1014 = vmatprep.subr.mxu0 0.0
        %1015 = vmatpush2.msra.mxu0 0.0
        %1016 = vmatprep.subr.mxu0 0.0
        %1017 = vmatpush2.msra.mxu0 0.0
        %1018 = vmatprep.subr.mxu0 0.0
        %1019 = vmatpush2.msra.mxu0 0.0
        %1020 = vmatprep.subr.mxu0 0.0
        %1021 = vmatpush2.msra.mxu0 0.0
        %1022 = vmatprep.subr.mxu0 0.0
        %1023 = vmatpush2.msra.mxu0 0.0
        %1024 = vmatprep.subr.mxu0 0.0
        %1025 = vmatpush2.msra.mxu0 0.0
        %1026 = vmatprep.subr.mxu0 0.0
        %1027 = vmatpush2.msra.mxu0 0.0
        %1028 = vmatprep.subr.mxu0 0.0
        %1029 = vmatpush2.msra.mxu0 0.0
        %1030 = vmatprep.subr.mxu0 0.0
        %1031 = vmatpush2.msra.mxu0 0.0
        %1032 = vmatprep.subr.mxu0 0.0
        %1033 = vmatpush2.msra.mxu0 0.0
        %1034 = vmatprep.subr.mxu0 0.0
        %1035 = vmatpush2.msra.mxu0 0.0
        %1036 = vmatprep.subr.mxu0 0.0
        %1037 = vmatpush2.msra.mxu0 0.0
        %1038 = vmatprep.subr.mxu0 0.0
        %1039 = vmatpush2.msra.mxu0 0.0
        %1040 = vmatprep.subr.mxu0 0.0
        %1041 = vmatpush2.msra.mxu0 0.0
        %1042 = vmatprep.subr.mxu0 0.0
        %1043 = vmatpush2.msra.mxu0 0.0
        %1044 = vmatprep.subr.mxu0 0.0
        %1045 = vmatpush2.msra.mxu0 0.0
        %1046 = vmatprep.mubr.f32.mxu0 0.0
        %1047 = vmatmul.mubr.f32.gmra.mxu0 %v838
        %v1048 = vpop.f32.mrf.mxu0
        %v1049 = vadd.f32 %v834, %v1048
        %v1050 = vpop.f32.mrf.mxu0
        %v1051 = vadd.f32 %v834, %v1050
        %1052 = vdwg.mxu0
        %1053 = vmatprep.subr.mxu0 0.0
        %1054 = vmatpush1.msra.mxu0 0.0
        %1055 = vmatprep.subr.mxu0 0.0
        %1056 = vmatpush1.msra.mxu0 0.0
        %1057 = vmatprep.subr.mxu0 0.0
        %1058 = vmatpush1.msra.mxu0 0.0
        %1059 = vmatprep.subr.mxu0 0.0
        %1060 = vmatpush1.msra.mxu0 0.0
        %1061 = vmatprep.subr.mxu0 0.0
        %1062 = vmatpush1.msra.mxu0 0.0
        %1063 = vmatprep.subr.mxu0 0.0
        %1064 = vmatpush1.msra.mxu0 0.0
        %1065 = vmatprep.subr.mxu0 0.0
        %1066 = vmatpush1.msra.mxu0 0.0
        %1067 = vmatprep.subr.mxu0 %v829
        %1068 = vmatpush1.msra.mxu0 %v828
        %1069 = vmatprep.subr.mxu0 %v821
        %1070 = vmatpush1.msra.mxu0 %v820
        %1071 = vmatprep.subr.mxu0 %v813
        %1072 = vmatpush1.msra.mxu0 %v812
        %1073 = vmatprep.subr.mxu0 %v805
        %1074 = vmatpush1.msra.mxu0 %v804
        %1075 = vmatprep.subr.mxu0 %v797
        %1076 = vmatpush1.msra.mxu0 %v796
        %1077 = vmatprep.subr.mxu0 %v789
        %1078 = vmatpush1.msra.mxu0 %v788
        %1079 = vmatprep.subr.mxu0 %v781
        %1080 = vmatpush1.msra.mxu0 %v780
        %1081 = vmatprep.subr.mxu0 %v773
        %1082 = vmatpush1.msra.mxu0 %v772
        %1083 = vmatprep.subr.mxu0 %v765
        %1084 = vmatpush1.msra.mxu0 %v764
        %1085 = vmatprep.subr.mxu0 0.0
        %1086 = vmatpush2.msra.mxu0 0.0
        %1087 = vmatprep.subr.mxu0 0.0
        %1088 = vmatpush2.msra.mxu0 0.0
        %1089 = vmatprep.subr.mxu0 0.0
        %1090 = vmatpush2.msra.mxu0 0.0
        %1091 = vmatprep.subr.mxu0 0.0
        %1092 = vmatpush2.msra.mxu0 0.0
        %1093 = vmatprep.subr.mxu0 0.0
        %1094 = vmatpush2.msra.mxu0 0.0
        %1095 = vmatprep.subr.mxu0 0.0
        %1096 = vmatpush2.msra.mxu0 0.0
        %1097 = vmatprep.subr.mxu0 0.0
        %1098 = vmatpush2.msra.mxu0 0.0
        %1099 = vmatprep.subr.mxu0 0.0
        %1100 = vmatpush2.msra.mxu0 0.0
        %1101 = vmatprep.subr.mxu0 0.0
        %1102 = vmatpush2.msra.mxu0 0.0
        %1103 = vmatprep.subr.mxu0 0.0
        %1104 = vmatpush2.msra.mxu0 0.0
        %1105 = vmatprep.subr.mxu0 0.0
        %1106 = vmatpush2.msra.mxu0 0.0
        %1107 = vmatprep.subr.mxu0 0.0
        %1108 = vmatpush2.msra.mxu0 0.0
        %1109 = vmatprep.subr.mxu0 0.0
        %1110 = vmatpush2.msra.mxu0 0.0
        %1111 = vmatprep.subr.mxu0 0.0
        %1112 = vmatpush2.msra.mxu0 0.0
        %1113 = vmatprep.subr.mxu0 0.0
        %1114 = vmatpush2.msra.mxu0 0.0
        %1115 = vmatprep.subr.mxu0 0.0
        %1116 = vmatpush2.msra.mxu0 0.0
        %1117 = vmatprep.mubr.f32.mxu0 0.0
        %1118 = vmatmul.mubr.f32.gmra.mxu0 %v838
        %v1119 = vpop.f32.mrf.mxu0
        %v1120 = vadd.f32 %v834, %v1119
        %v1121 = vpop.f32.mrf.mxu0
        %v1122 = vadd.f32 %v834, %v1121
        %1123 = vdwg.mxu0
        %v1124 = vmax.f32 %v907, 0.0
        %v1125 = vmax.f32 %v909, 0.0
        %v1126 = vmax.f32 %v978, 0.0
        %v1127 = vmax.f32 %v980, 0.0
        %v1128 = vmax.f32 %v1049, 0.0
        %v1129 = vmax.f32 %v1051, 0.0
        %v1130 = vmax.f32 %v1120, 0.0
        %v1131 = vmax.f32 %v1122, 0.0
        %v1132 = vld [vmem:[%s3] sm:$0xff]
        %v1134 = vlaneseq
        %v1135 = vshrl.u32 %v1134, 7
        %v1136 = vsub.s32 0, %v1135
        %v1137 = vrot.slane %v1132, %v1136
        %v1138 = vlaneseq
        %v1139 = vshrl.u32 %v1138, 7
        %v1140 = vsub.s32 1, %v1139
        %v1141 = vrot.slane %v1132, %v1140
        %v1142 = vlaneseq
        %v1143 = vshrl.u32 %v1142, 7
        %v1144 = vsub.s32 2, %v1143
        %v1145 = vrot.slane %v1132, %v1144
        %v1146 = vlaneseq
        %v1147 = vshrl.u32 %v1146, 7
        %v1148 = vsub.s32 3, %v1147
        %v1149 = vrot.slane %v1132, %v1148
        %v1150 = vlaneseq
        %v1151 = vshrl.u32 %v1150, 7
        %v1152 = vsub.s32 4, %v1151
        %v1153 = vrot.slane %v1132, %v1152
        %v1154 = vlaneseq
        %v1155 = vshrl.u32 %v1154, 7
        %v1156 = vsub.s32 5, %v1155
        %v1157 = vrot.slane %v1132, %v1156
        %v1158 = vlaneseq
        %v1159 = vshrl.u32 %v1158, 7
        %v1160 = vsub.s32 6, %v1159
        %v1161 = vrot.slane %v1132, %v1160
        %v1162 = vlaneseq
        %v1163 = vshrl.u32 %v1162, 7
        %v1164 = vsub.s32 7, %v1163
        %v1165 = vrot.slane %v1132, %v1164
        %v1174 = vmul.f32 %v1124, %v1137
        %v1175 = vmul.f32 %v1125, %v1141
        %v1176 = vmul.f32 %v1126, %v1145
        %v1177 = vmul.f32 %v1127, %v1149
        %v1178 = vmul.f32 %v1128, %v1153
        %v1179 = vmul.f32 %v1129, %v1157
        %v1180 = vmul.f32 %v1130, %v1161
        %v1181 = vmul.f32 %v1131, %v1165
        %1182 = vst [vmem:[#allocation2 + $0x8] sm:$0xff] %v1174
        %1183 = vst [vmem:[#allocation2 + $0x10] sm:$0xff] %v1175
        %1184 = vst [vmem:[#allocation2 + $0x18] sm:$0xff] %v1176
        %1185 = vst [vmem:[#allocation2 + $0x20] sm:$0xff] %v1177
        %1186 = vst [vmem:[#allocation2 + $0x28] sm:$0xff] %v1178
        %1187 = vst [vmem:[#allocation2 + $0x30] sm:$0xff] %v1179
        %1188 = vst [vmem:[#allocation2 + $0x38] sm:$0xff] %v1180
        %1189 = vst [vmem:[#allocation2 + $0x40] sm:$0xff] %v1181
        %v1190 = vld [vmem:[#allocation2] sm:$0xff]
        %v1191 = vld [vmem:[#allocation2 + $0x8] sm:$0xff]
        %v1192 = vld [vmem:[#allocation2 + $0x10] sm:$0xff]
        %v1193 = vld [vmem:[#allocation2 + $0x18] sm:$0xff]
        %v1194 = vld [vmem:[#allocation2 + $0x20] sm:$0xff]
        %v1195 = vld [vmem:[#allocation2 + $0x28] sm:$0xff]
        %v1196 = vld [vmem:[#allocation2 + $0x30] sm:$0xff]
        %v1197 = vld [vmem:[#allocation2 + $0x38] sm:$0xff]
        %v1198 = vld [vmem:[#allocation2 + $0x40] sm:$0xff]
        %1208 = vrot.lane.b32.xlu0 %v1190, 33
        %v1209 = vpop.permute.xlu0 %1208
        %1210 = vrot.lane.b32.xlu0 %v1191, 33
        %v1211 = vpop.permute.xlu0 %1210
        %1212 = vrot.lane.b32.xlu0 %v1192, 33
        %v1213 = vpop.permute.xlu0 %1212
        %1214 = vrot.lane.b32.xlu0 %v1193, 33
        %v1215 = vpop.permute.xlu0 %1214
        %1216 = vrot.lane.b32.xlu0 %v1194, 33
        %v1217 = vpop.permute.xlu0 %1216
        %1218 = vrot.lane.b32.xlu0 %v1195, 33
        %v1219 = vpop.permute.xlu0 %1218
        %1220 = vrot.lane.b32.xlu0 %v1196, 33
        %v1221 = vpop.permute.xlu0 %1220
        %1222 = vrot.lane.b32.xlu0 %v1197, 33
        %v1223 = vpop.permute.xlu0 %1222
        %1224 = vrot.lane.b32.xlu0 %v1198, 33
        %v1225 = vpop.permute.xlu0 %1224
        %v1226 = vsel %vm289, %v1209, %v1211
        %v1227 = vsel %vm289, %v1211, %v1213
        %v1228 = vsel %vm289, %v1213, %v1215
        %v1229 = vsel %vm289, %v1215, %v1217
        %v1230 = vsel %vm289, %v1217, %v1219
        %v1231 = vsel %vm289, %v1219, %v1221
        %v1232 = vsel %vm289, %v1221, %v1223
        %v1233 = vsel %vm289, %v1223, %v1225
        %1242 = vst [vmem:[#allocation4] sm:$0xff] %v1226
        %1243 = vst [vmem:[#allocation4 + $0x8] sm:$0xff] %v1227
        %1244 = vst [vmem:[#allocation4 + $0x10] sm:$0xff] %v1228
        %1245 = vst [vmem:[#allocation4 + $0x18] sm:$0xff] %v1229
        %1246 = vst [vmem:[#allocation4 + $0x20] sm:$0xff] %v1230
        %1247 = vst [vmem:[#allocation4 + $0x28] sm:$0xff] %v1231
        %1248 = vst [vmem:[#allocation4 + $0x30] sm:$0xff] %v1232
        %1249 = vst [vmem:[#allocation4 + $0x38] sm:$0xff] %v1233
        %v1250 = vld [vmem:[#allocation2] sm:$0xff]
        %v1251 = vld [vmem:[#allocation2 + $0x8] sm:$0xff]
        %v1252 = vld [vmem:[#allocation2 + $0x10] sm:$0xff]
        %v1253 = vld [vmem:[#allocation2 + $0x18] sm:$0xff]
        %v1254 = vld [vmem:[#allocation2 + $0x20] sm:$0xff]
        %v1255 = vld [vmem:[#allocation2 + $0x28] sm:$0xff]
        %v1256 = vld [vmem:[#allocation2 + $0x30] sm:$0xff]
        %v1257 = vld [vmem:[#allocation2 + $0x38] sm:$0xff]
        %v1258 = vld [vmem:[#allocation2 + $0x40] sm:$0xff]
        %1268 = vrot.lane.b32.xlu0 %v1250, 32
        %v1269 = vpop.permute.xlu0 %1268
        %1270 = vrot.lane.b32.xlu0 %v1251, 32
        %v1271 = vpop.permute.xlu0 %1270
        %1272 = vrot.lane.b32.xlu0 %v1252, 32
        %v1273 = vpop.permute.xlu0 %1272
        %1274 = vrot.lane.b32.xlu0 %v1253, 32
        %v1275 = vpop.permute.xlu0 %1274
        %1276 = vrot.lane.b32.xlu0 %v1254, 32
        %v1277 = vpop.permute.xlu0 %1276
        %1278 = vrot.lane.b32.xlu0 %v1255, 32
        %v1279 = vpop.permute.xlu0 %1278
        %1280 = vrot.lane.b32.xlu0 %v1256, 32
        %v1281 = vpop.permute.xlu0 %1280
        %1282 = vrot.lane.b32.xlu0 %v1257, 32
        %v1283 = vpop.permute.xlu0 %1282
        %1284 = vrot.lane.b32.xlu0 %v1258, 32
        %v1285 = vpop.permute.xlu0 %1284
        %v1286 = vsel %vm350, %v1269, %v1271
        %v1287 = vsel %vm350, %v1271, %v1273
        %v1288 = vsel %vm350, %v1273, %v1275
        %v1289 = vsel %vm350, %v1275, %v1277
        %v1290 = vsel %vm350, %v1277, %v1279
        %v1291 = vsel %vm350, %v1279, %v1281
        %v1292 = vsel %vm350, %v1281, %v1283
        %v1293 = vsel %vm350, %v1283, %v1285
        %1302 = vst [vmem:[#allocation4 + $0x40] sm:$0xff] %v1286
        %1303 = vst [vmem:[#allocation4 + $0x48] sm:$0xff] %v1287
        %1304 = vst [vmem:[#allocation4 + $0x50] sm:$0xff] %v1288
        %1305 = vst [vmem:[#allocation4 + $0x58] sm:$0xff] %v1289
        %1306 = vst [vmem:[#allocation4 + $0x60] sm:$0xff] %v1290
        %1307 = vst [vmem:[#allocation4 + $0x68] sm:$0xff] %v1291
        %1308 = vst [vmem:[#allocation4 + $0x70] sm:$0xff] %v1292
        %1309 = vst [vmem:[#allocation4 + $0x78] sm:$0xff] %v1293
        %v1310 = vld [vmem:[#allocation2] sm:$0xff]
        %v1311 = vld [vmem:[#allocation2 + $0x8] sm:$0xff]
        %v1312 = vld [vmem:[#allocation2 + $0x10] sm:$0xff]
        %v1313 = vld [vmem:[#allocation2 + $0x18] sm:$0xff]
        %v1314 = vld [vmem:[#allocation2 + $0x20] sm:$0xff]
        %v1315 = vld [vmem:[#allocation2 + $0x28] sm:$0xff]
        %v1316 = vld [vmem:[#allocation2 + $0x30] sm:$0xff]
        %v1317 = vld [vmem:[#allocation2 + $0x38] sm:$0xff]
        %v1318 = vld [vmem:[#allocation2 + $0x40] sm:$0xff]
        %1328 = vrot.lane.b32.xlu0 %v1310, 31
        %v1329 = vpop.permute.xlu0 %1328
        %1330 = vrot.lane.b32.xlu0 %v1311, 31
        %v1331 = vpop.permute.xlu0 %1330
        %1332 = vrot.lane.b32.xlu0 %v1312, 31
        %v1333 = vpop.permute.xlu0 %1332
        %1334 = vrot.lane.b32.xlu0 %v1313, 31
        %v1335 = vpop.permute.xlu0 %1334
        %1336 = vrot.lane.b32.xlu0 %v1314, 31
        %v1337 = vpop.permute.xlu0 %1336
        %1338 = vrot.lane.b32.xlu0 %v1315, 31
        %v1339 = vpop.permute.xlu0 %1338
        %1340 = vrot.lane.b32.xlu0 %v1316, 31
        %v1341 = vpop.permute.xlu0 %1340
        %1342 = vrot.lane.b32.xlu0 %v1317, 31
        %v1343 = vpop.permute.xlu0 %1342
        %1344 = vrot.lane.b32.xlu0 %v1318, 31
        %v1345 = vpop.permute.xlu0 %1344
        %v1346 = vsel %vm411, %v1329, %v1331
        %v1347 = vsel %vm411, %v1331, %v1333
        %v1348 = vsel %vm411, %v1333, %v1335
        %v1349 = vsel %vm411, %v1335, %v1337
        %v1350 = vsel %vm411, %v1337, %v1339
        %v1351 = vsel %vm411, %v1339, %v1341
        %v1352 = vsel %vm411, %v1341, %v1343
        %v1353 = vsel %vm411, %v1343, %v1345
        %1362 = vst [vmem:[#allocation4 + $0x80] sm:$0xff] %v1346
        %1363 = vst [vmem:[#allocation4 + $0x88] sm:$0xff] %v1347
        %1364 = vst [vmem:[#allocation4 + $0x90] sm:$0xff] %v1348
        %1365 = vst [vmem:[#allocation4 + $0x98] sm:$0xff] %v1349
        %1366 = vst [vmem:[#allocation4 + $0xa0] sm:$0xff] %v1350
        %1367 = vst [vmem:[#allocation4 + $0xa8] sm:$0xff] %v1351
        %1368 = vst [vmem:[#allocation4 + $0xb0] sm:$0xff] %v1352
        %1369 = vst [vmem:[#allocation4 + $0xb8] sm:$0xff] %v1353
        %v1370 = vld [vmem:[#allocation2] sm:$0xff]
        %v1371 = vld [vmem:[#allocation2 + $0x8] sm:$0xff]
        %v1372 = vld [vmem:[#allocation2 + $0x10] sm:$0xff]
        %v1373 = vld [vmem:[#allocation2 + $0x18] sm:$0xff]
        %v1374 = vld [vmem:[#allocation2 + $0x20] sm:$0xff]
        %v1375 = vld [vmem:[#allocation2 + $0x28] sm:$0xff]
        %v1376 = vld [vmem:[#allocation2 + $0x30] sm:$0xff]
        %v1377 = vld [vmem:[#allocation2 + $0x38] sm:$0xff]
        %v1378 = vld [vmem:[#allocation2 + $0x40] sm:$0xff]
        %1388 = vrot.lane.b32.xlu0 %v1370, 1
        %v1389 = vpop.permute.xlu0 %1388
        %1390 = vrot.lane.b32.xlu0 %v1371, 1
        %v1391 = vpop.permute.xlu0 %1390
        %1392 = vrot.lane.b32.xlu0 %v1372, 1
        %v1393 = vpop.permute.xlu0 %1392
        %1394 = vrot.lane.b32.xlu0 %v1373, 1
        %v1395 = vpop.permute.xlu0 %1394
        %1396 = vrot.lane.b32.xlu0 %v1374, 1
        %v1397 = vpop.permute.xlu0 %1396
        %1398 = vrot.lane.b32.xlu0 %v1375, 1
        %v1399 = vpop.permute.xlu0 %1398
        %1400 = vrot.lane.b32.xlu0 %v1376, 1
        %v1401 = vpop.permute.xlu0 %1400
        %1402 = vrot.lane.b32.xlu0 %v1377, 1
        %v1403 = vpop.permute.xlu0 %1402
        %1404 = vrot.lane.b32.xlu0 %v1378, 1
        %v1405 = vpop.permute.xlu0 %1404
        %v1406 = vsel %vm472, %v1389, %v1391
        %v1407 = vsel %vm472, %v1391, %v1393
        %v1408 = vsel %vm472, %v1393, %v1395
        %v1409 = vsel %vm472, %v1395, %v1397
        %v1410 = vsel %vm472, %v1397, %v1399
        %v1411 = vsel %vm472, %v1399, %v1401
        %v1412 = vsel %vm472, %v1401, %v1403
        %v1413 = vsel %vm472, %v1403, %v1405
        %1422 = vst [vmem:[#allocation4 + $0xc0] sm:$0xff] %v1406
        %1423 = vst [vmem:[#allocation4 + $0xc8] sm:$0xff] %v1407
        %1424 = vst [vmem:[#allocation4 + $0xd0] sm:$0xff] %v1408
        %1425 = vst [vmem:[#allocation4 + $0xd8] sm:$0xff] %v1409
        %1426 = vst [vmem:[#allocation4 + $0xe0] sm:$0xff] %v1410
        %1427 = vst [vmem:[#allocation4 + $0xe8] sm:$0xff] %v1411
        %1428 = vst [vmem:[#allocation4 + $0xf0] sm:$0xff] %v1412
        %1429 = vst [vmem:[#allocation4 + $0xf8] sm:$0xff] %v1413
        %v1430 = vld [vmem:[#allocation2 + $0x8] sm:$0xff]
        %v1431 = vld [vmem:[#allocation2 + $0x10] sm:$0xff]
        %v1432 = vld [vmem:[#allocation2 + $0x18] sm:$0xff]
        %v1433 = vld [vmem:[#allocation2 + $0x20] sm:$0xff]
        %v1434 = vld [vmem:[#allocation2 + $0x28] sm:$0xff]
        %v1435 = vld [vmem:[#allocation2 + $0x30] sm:$0xff]
        %v1436 = vld [vmem:[#allocation2 + $0x38] sm:$0xff]
        %v1437 = vld [vmem:[#allocation2 + $0x40] sm:$0xff]
        %1438 = vst [vmem:[#allocation4 + $0x100] sm:$0xff] %v1430
        %1439 = vst [vmem:[#allocation4 + $0x108] sm:$0xff] %v1431
        %1440 = vst [vmem:[#allocation4 + $0x110] sm:$0xff] %v1432
        %1441 = vst [vmem:[#allocation4 + $0x118] sm:$0xff] %v1433
        %1442 = vst [vmem:[#allocation4 + $0x120] sm:$0xff] %v1434
        %1443 = vst [vmem:[#allocation4 + $0x128] sm:$0xff] %v1435
        %1444 = vst [vmem:[#allocation4 + $0x130] sm:$0xff] %v1436
        %1445 = vst [vmem:[#allocation4 + $0x138] sm:$0xff] %v1437
        %v1446 = vld [vmem:[#allocation2 + $0x8] sm:$0xff]
        %v1447 = vld [vmem:[#allocation2 + $0x10] sm:$0xff]
        %v1448 = vld [vmem:[#allocation2 + $0x18] sm:$0xff]
        %v1449 = vld [vmem:[#allocation2 + $0x20] sm:$0xff]
        %v1450 = vld [vmem:[#allocation2 + $0x28] sm:$0xff]
        %v1451 = vld [vmem:[#allocation2 + $0x30] sm:$0xff]
        %v1452 = vld [vmem:[#allocation2 + $0x38] sm:$0xff]
        %v1453 = vld [vmem:[#allocation2 + $0x40] sm:$0xff]
        %v1454 = vld [vmem:[#allocation2 + $0x48] sm:$0xff]
        %1464 = vrot.lane.b32.xlu0 %v1446, 127
        %v1465 = vpop.permute.xlu0 %1464
        %1466 = vrot.lane.b32.xlu0 %v1447, 127
        %v1467 = vpop.permute.xlu0 %1466
        %1468 = vrot.lane.b32.xlu0 %v1448, 127
        %v1469 = vpop.permute.xlu0 %1468
        %1470 = vrot.lane.b32.xlu0 %v1449, 127
        %v1471 = vpop.permute.xlu0 %1470
        %1472 = vrot.lane.b32.xlu0 %v1450, 127
        %v1473 = vpop.permute.xlu0 %1472
        %1474 = vrot.lane.b32.xlu0 %v1451, 127
        %v1475 = vpop.permute.xlu0 %1474
        %1476 = vrot.lane.b32.xlu0 %v1452, 127
        %v1477 = vpop.permute.xlu0 %1476
        %1478 = vrot.lane.b32.xlu0 %v1453, 127
        %v1479 = vpop.permute.xlu0 %1478
        %1480 = vrot.lane.b32.xlu0 %v1454, 127
        %v1481 = vpop.permute.xlu0 %1480
        %v1482 = vsel %vm549, %v1465, %v1467
        %v1483 = vsel %vm549, %v1467, %v1469
        %v1484 = vsel %vm549, %v1469, %v1471
        %v1485 = vsel %vm549, %v1471, %v1473
        %v1486 = vsel %vm549, %v1473, %v1475
        %v1487 = vsel %vm549, %v1475, %v1477
        %v1488 = vsel %vm549, %v1477, %v1479
        %v1489 = vsel %vm549, %v1479, %v1481
        %1498 = vst [vmem:[#allocation4 + $0x140] sm:$0xff] %v1482
        %1499 = vst [vmem:[#allocation4 + $0x148] sm:$0xff] %v1483
        %1500 = vst [vmem:[#allocation4 + $0x150] sm:$0xff] %v1484
        %1501 = vst [vmem:[#allocation4 + $0x158] sm:$0xff] %v1485
        %1502 = vst [vmem:[#allocation4 + $0x160] sm:$0xff] %v1486
        %1503 = vst [vmem:[#allocation4 + $0x168] sm:$0xff] %v1487
        %1504 = vst [vmem:[#allocation4 + $0x170] sm:$0xff] %v1488
        %1505 = vst [vmem:[#allocation4 + $0x178] sm:$0xff] %v1489
        %v1506 = vld [vmem:[#allocation2 + $0x8] sm:$0xff]
        %v1507 = vld [vmem:[#allocation2 + $0x10] sm:$0xff]
        %v1508 = vld [vmem:[#allocation2 + $0x18] sm:$0xff]
        %v1509 = vld [vmem:[#allocation2 + $0x20] sm:$0xff]
        %v1510 = vld [vmem:[#allocation2 + $0x28] sm:$0xff]
        %v1511 = vld [vmem:[#allocation2 + $0x30] sm:$0xff]
        %v1512 = vld [vmem:[#allocation2 + $0x38] sm:$0xff]
        %v1513 = vld [vmem:[#allocation2 + $0x40] sm:$0xff]
        %v1514 = vld [vmem:[#allocation2 + $0x48] sm:$0xff]
        %1524 = vrot.lane.b32.xlu0 %v1506, 97
        %v1525 = vpop.permute.xlu0 %1524
        %1526 = vrot.lane.b32.xlu0 %v1507, 97
        %v1527 = vpop.permute.xlu0 %1526
        %1528 = vrot.lane.b32.xlu0 %v1508, 97
        %v1529 = vpop.permute.xlu0 %1528
        %1530 = vrot.lane.b32.xlu0 %v1509, 97
        %v1531 = vpop.permute.xlu0 %1530
        %1532 = vrot.lane.b32.xlu0 %v1510, 97
        %v1533 = vpop.permute.xlu0 %1532
        %1534 = vrot.lane.b32.xlu0 %v1511, 97
        %v1535 = vpop.permute.xlu0 %1534
        %1536 = vrot.lane.b32.xlu0 %v1512, 97
        %v1537 = vpop.permute.xlu0 %1536
        %1538 = vrot.lane.b32.xlu0 %v1513, 97
        %v1539 = vpop.permute.xlu0 %1538
        %1540 = vrot.lane.b32.xlu0 %v1514, 97
        %v1541 = vpop.permute.xlu0 %1540
        %v1542 = vsel %vm610, %v1525, %v1527
        %v1543 = vsel %vm610, %v1527, %v1529
        %v1544 = vsel %vm610, %v1529, %v1531
        %v1545 = vsel %vm610, %v1531, %v1533
        %v1546 = vsel %vm610, %v1533, %v1535
        %v1547 = vsel %vm610, %v1535, %v1537
        %v1548 = vsel %vm610, %v1537, %v1539
        %v1549 = vsel %vm610, %v1539, %v1541
        %1558 = vst [vmem:[#allocation4 + $0x180] sm:$0xff] %v1542
        %1559 = vst [vmem:[#allocation4 + $0x188] sm:$0xff] %v1543
        %1560 = vst [vmem:[#allocation4 + $0x190] sm:$0xff] %v1544
        %1561 = vst [vmem:[#allocation4 + $0x198] sm:$0xff] %v1545
        %1562 = vst [vmem:[#allocation4 + $0x1a0] sm:$0xff] %v1546
        %1563 = vst [vmem:[#allocation4 + $0x1a8] sm:$0xff] %v1547
        %1564 = vst [vmem:[#allocation4 + $0x1b0] sm:$0xff] %v1548
        %1565 = vst [vmem:[#allocation4 + $0x1b8] sm:$0xff] %v1549
        %v1566 = vld [vmem:[#allocation2 + $0x8] sm:$0xff]
        %v1567 = vld [vmem:[#allocation2 + $0x10] sm:$0xff]
        %v1568 = vld [vmem:[#allocation2 + $0x18] sm:$0xff]
        %v1569 = vld [vmem:[#allocation2 + $0x20] sm:$0xff]
        %v1570 = vld [vmem:[#allocation2 + $0x28] sm:$0xff]
        %v1571 = vld [vmem:[#allocation2 + $0x30] sm:$0xff]
        %v1572 = vld [vmem:[#allocation2 + $0x38] sm:$0xff]
        %v1573 = vld [vmem:[#allocation2 + $0x40] sm:$0xff]
        %v1574 = vld [vmem:[#allocation2 + $0x48] sm:$0xff]
        %1584 = vrot.lane.b32.xlu0 %v1566, 96
        %v1585 = vpop.permute.xlu0 %1584
        %1586 = vrot.lane.b32.xlu0 %v1567, 96
        %v1587 = vpop.permute.xlu0 %1586
        %1588 = vrot.lane.b32.xlu0 %v1568, 96
        %v1589 = vpop.permute.xlu0 %1588
        %1590 = vrot.lane.b32.xlu0 %v1569, 96
        %v1591 = vpop.permute.xlu0 %1590
        %1592 = vrot.lane.b32.xlu0 %v1570, 96
        %v1593 = vpop.permute.xlu0 %1592
        %1594 = vrot.lane.b32.xlu0 %v1571, 96
        %v1595 = vpop.permute.xlu0 %1594
        %1596 = vrot.lane.b32.xlu0 %v1572, 96
        %v1597 = vpop.permute.xlu0 %1596
        %1598 = vrot.lane.b32.xlu0 %v1573, 96
        %v1599 = vpop.permute.xlu0 %1598
        %1600 = vrot.lane.b32.xlu0 %v1574, 96
        %v1601 = vpop.permute.xlu0 %1600
        %v1602 = vsel %vm671, %v1585, %v1587
        %v1603 = vsel %vm671, %v1587, %v1589
        %v1604 = vsel %vm671, %v1589, %v1591
        %v1605 = vsel %vm671, %v1591, %v1593
        %v1606 = vsel %vm671, %v1593, %v1595
        %v1607 = vsel %vm671, %v1595, %v1597
        %v1608 = vsel %vm671, %v1597, %v1599
        %v1609 = vsel %vm671, %v1599, %v1601
        %1618 = vst [vmem:[#allocation4 + $0x1c0] sm:$0xff] %v1602
        %1619 = vst [vmem:[#allocation4 + $0x1c8] sm:$0xff] %v1603
        %1620 = vst [vmem:[#allocation4 + $0x1d0] sm:$0xff] %v1604
        %1621 = vst [vmem:[#allocation4 + $0x1d8] sm:$0xff] %v1605
        %1622 = vst [vmem:[#allocation4 + $0x1e0] sm:$0xff] %v1606
        %1623 = vst [vmem:[#allocation4 + $0x1e8] sm:$0xff] %v1607
        %1624 = vst [vmem:[#allocation4 + $0x1f0] sm:$0xff] %v1608
        %1625 = vst [vmem:[#allocation4 + $0x1f8] sm:$0xff] %v1609
        %v1626 = vld [vmem:[#allocation2 + $0x8] sm:$0xff]
        %v1627 = vld [vmem:[#allocation2 + $0x10] sm:$0xff]
        %v1628 = vld [vmem:[#allocation2 + $0x18] sm:$0xff]
        %v1629 = vld [vmem:[#allocation2 + $0x20] sm:$0xff]
        %v1630 = vld [vmem:[#allocation2 + $0x28] sm:$0xff]
        %v1631 = vld [vmem:[#allocation2 + $0x30] sm:$0xff]
        %v1632 = vld [vmem:[#allocation2 + $0x38] sm:$0xff]
        %v1633 = vld [vmem:[#allocation2 + $0x40] sm:$0xff]
        %v1634 = vld [vmem:[#allocation2 + $0x48] sm:$0xff]
        %1644 = vrot.lane.b32.xlu0 %v1626, 95
        %v1645 = vpop.permute.xlu0 %1644
        %1646 = vrot.lane.b32.xlu0 %v1627, 95
        %v1647 = vpop.permute.xlu0 %1646
        %1648 = vrot.lane.b32.xlu0 %v1628, 95
        %v1649 = vpop.permute.xlu0 %1648
        %1650 = vrot.lane.b32.xlu0 %v1629, 95
        %v1651 = vpop.permute.xlu0 %1650
        %1652 = vrot.lane.b32.xlu0 %v1630, 95
        %v1653 = vpop.permute.xlu0 %1652
        %1654 = vrot.lane.b32.xlu0 %v1631, 95
        %v1655 = vpop.permute.xlu0 %1654
        %1656 = vrot.lane.b32.xlu0 %v1632, 95
        %v1657 = vpop.permute.xlu0 %1656
        %1658 = vrot.lane.b32.xlu0 %v1633, 95
        %v1659 = vpop.permute.xlu0 %1658
        %1660 = vrot.lane.b32.xlu0 %v1634, 95
        %v1661 = vpop.permute.xlu0 %1660
        %v1662 = vsel %vm732, %v1645, %v1647
        %v1663 = vsel %vm732, %v1647, %v1649
        %v1664 = vsel %vm732, %v1649, %v1651
        %v1665 = vsel %vm732, %v1651, %v1653
        %v1666 = vsel %vm732, %v1653, %v1655
        %v1667 = vsel %vm732, %v1655, %v1657
        %v1668 = vsel %vm732, %v1657, %v1659
        %v1669 = vsel %vm732, %v1659, %v1661
        %1678 = vst [vmem:[#allocation4 + $0x200] sm:$0xff] %v1662
        %1679 = vst [vmem:[#allocation4 + $0x208] sm:$0xff] %v1663
        %1680 = vst [vmem:[#allocation4 + $0x210] sm:$0xff] %v1664
        %1681 = vst [vmem:[#allocation4 + $0x218] sm:$0xff] %v1665
        %1682 = vst [vmem:[#allocation4 + $0x220] sm:$0xff] %v1666
        %1683 = vst [vmem:[#allocation4 + $0x228] sm:$0xff] %v1667
        %1684 = vst [vmem:[#allocation4 + $0x230] sm:$0xff] %v1668
        %1685 = vst [vmem:[#allocation4 + $0x238] sm:$0xff] %v1669
        %s1686 = scalar_lea.vmem %s1, 8
        %v1687 = vld [vmem:[%s1686] sm:$0xff]
        %v1688 = vld [vmem:[#allocation4] sm:$0xff]
        %v1689 = vld [vmem:[#allocation4 + $0x8] sm:$0xff]
        %v1690 = vld [vmem:[#allocation4 + $0x10] sm:$0xff]
        %v1691 = vld [vmem:[#allocation4 + $0x18] sm:$0xff]
        %v1692 = vld [vmem:[#allocation4 + $0x20] sm:$0xff]
        %v1693 = vld [vmem:[#allocation4 + $0x28] sm:$0xff]
        %v1694 = vld [vmem:[#allocation4 + $0x30] sm:$0xff]
        %v1695 = vld [vmem:[#allocation4 + $0x38] sm:$0xff]
        %v1696 = vld [vmem:[#allocation4 + $0x40] sm:$0xff]
        %v1697 = vld [vmem:[#allocation4 + $0x48] sm:$0xff]
        %v1698 = vld [vmem:[#allocation4 + $0x50] sm:$0xff]
        %v1699 = vld [vmem:[#allocation4 + $0x58] sm:$0xff]
        %v1700 = vld [vmem:[#allocation4 + $0x60] sm:$0xff]
        %v1701 = vld [vmem:[#allocation4 + $0x68] sm:$0xff]
        %v1702 = vld [vmem:[#allocation4 + $0x70] sm:$0xff]
        %v1703 = vld [vmem:[#allocation4 + $0x78] sm:$0xff]
        %v1704 = vld [vmem:[#allocation4 + $0x80] sm:$0xff]
        %v1705 = vld [vmem:[#allocation4 + $0x88] sm:$0xff]
        %v1706 = vld [vmem:[#allocation4 + $0x90] sm:$0xff]
        %v1707 = vld [vmem:[#allocation4 + $0x98] sm:$0xff]
        %v1708 = vld [vmem:[#allocation4 + $0xa0] sm:$0xff]
        %v1709 = vld [vmem:[#allocation4 + $0xa8] sm:$0xff]
        %v1710 = vld [vmem:[#allocation4 + $0xb0] sm:$0xff]
        %v1711 = vld [vmem:[#allocation4 + $0xb8] sm:$0xff]
        %v1712 = vld [vmem:[#allocation4 + $0xc0] sm:$0xff]
        %v1713 = vld [vmem:[#allocation4 + $0xc8] sm:$0xff]
        %v1714 = vld [vmem:[#allocation4 + $0xd0] sm:$0xff]
        %v1715 = vld [vmem:[#allocation4 + $0xd8] sm:$0xff]
        %v1716 = vld [vmem:[#allocation4 + $0xe0] sm:$0xff]
        %v1717 = vld [vmem:[#allocation4 + $0xe8] sm:$0xff]
        %v1718 = vld [vmem:[#allocation4 + $0xf0] sm:$0xff]
        %v1719 = vld [vmem:[#allocation4 + $0xf8] sm:$0xff]
        %v1720 = vld [vmem:[#allocation4 + $0x100] sm:$0xff]
        %v1721 = vld [vmem:[#allocation4 + $0x108] sm:$0xff]
        %v1722 = vld [vmem:[#allocation4 + $0x110] sm:$0xff]
        %v1723 = vld [vmem:[#allocation4 + $0x118] sm:$0xff]
        %v1724 = vld [vmem:[#allocation4 + $0x120] sm:$0xff]
        %v1725 = vld [vmem:[#allocation4 + $0x128] sm:$0xff]
        %v1726 = vld [vmem:[#allocation4 + $0x130] sm:$0xff]
        %v1727 = vld [vmem:[#allocation4 + $0x138] sm:$0xff]
        %v1728 = vld [vmem:[#allocation4 + $0x140] sm:$0xff]
        %v1729 = vld [vmem:[#allocation4 + $0x148] sm:$0xff]
        %v1730 = vld [vmem:[#allocation4 + $0x150] sm:$0xff]
        %v1731 = vld [vmem:[#allocation4 + $0x158] sm:$0xff]
        %v1732 = vld [vmem:[#allocation4 + $0x160] sm:$0xff]
        %v1733 = vld [vmem:[#allocation4 + $0x168] sm:$0xff]
        %v1734 = vld [vmem:[#allocation4 + $0x170] sm:$0xff]
        %v1735 = vld [vmem:[#allocation4 + $0x178] sm:$0xff]
        %v1736 = vld [vmem:[#allocation4 + $0x180] sm:$0xff]
        %v1737 = vld [vmem:[#allocation4 + $0x188] sm:$0xff]
        %v1738 = vld [vmem:[#allocation4 + $0x190] sm:$0xff]
        %v1739 = vld [vmem:[#allocation4 + $0x198] sm:$0xff]
        %v1740 = vld [vmem:[#allocation4 + $0x1a0] sm:$0xff]
        %v1741 = vld [vmem:[#allocation4 + $0x1a8] sm:$0xff]
        %v1742 = vld [vmem:[#allocation4 + $0x1b0] sm:$0xff]
        %v1743 = vld [vmem:[#allocation4 + $0x1b8] sm:$0xff]
        %v1744 = vld [vmem:[#allocation4 + $0x1c0] sm:$0xff]
        %v1745 = vld [vmem:[#allocation4 + $0x1c8] sm:$0xff]
        %v1746 = vld [vmem:[#allocation4 + $0x1d0] sm:$0xff]
        %v1747 = vld [vmem:[#allocation4 + $0x1d8] sm:$0xff]
        %v1748 = vld [vmem:[#allocation4 + $0x1e0] sm:$0xff]
        %v1749 = vld [vmem:[#allocation4 + $0x1e8] sm:$0xff]
        %v1750 = vld [vmem:[#allocation4 + $0x1f0] sm:$0xff]
        %v1751 = vld [vmem:[#allocation4 + $0x1f8] sm:$0xff]
        %v1752 = vld [vmem:[#allocation4 + $0x200] sm:$0xff]
        %v1753 = vld [vmem:[#allocation4 + $0x208] sm:$0xff]
        %v1754 = vld [vmem:[#allocation4 + $0x210] sm:$0xff]
        %v1755 = vld [vmem:[#allocation4 + $0x218] sm:$0xff]
        %v1756 = vld [vmem:[#allocation4 + $0x220] sm:$0xff]
        %v1757 = vld [vmem:[#allocation4 + $0x228] sm:$0xff]
        %v1758 = vld [vmem:[#allocation4 + $0x230] sm:$0xff]
        %v1759 = vld [vmem:[#allocation4 + $0x238] sm:$0xff]
        %s1760 = scalar_lea.vmem %s2, 8
        %v1761 = vld [vmem:[%s1760] sm:$0xff]
        %1763 = vset.pattern.permute.xlu0 0
        %1764 = vperm.xlu0 %1763, %v1761
        %v1765 = vpop.permute.xlu0 %1764
        %v1768 = vsel %vm836, %v1687, 0
        %1770 = vmatprep.subr.mxu0 0.0
        %1771 = vmatpush1.msra.mxu0 0.0
        %1772 = vmatprep.subr.mxu0 0.0
        %1773 = vmatpush1.msra.mxu0 0.0
        %1774 = vmatprep.subr.mxu0 0.0
        %1775 = vmatpush1.msra.mxu0 0.0
        %1776 = vmatprep.subr.mxu0 0.0
        %1777 = vmatpush1.msra.mxu0 0.0
        %1778 = vmatprep.subr.mxu0 0.0
        %1779 = vmatpush1.msra.mxu0 0.0
        %1780 = vmatprep.subr.mxu0 0.0
        %1781 = vmatpush1.msra.mxu0 0.0
        %1782 = vmatprep.subr.mxu0 0.0
        %1783 = vmatpush1.msra.mxu0 0.0
        %1784 = vmatprep.subr.mxu0 %v1753
        %1785 = vmatpush1.msra.mxu0 %v1752
        %1786 = vmatprep.subr.mxu0 %v1745
        %1787 = vmatpush1.msra.mxu0 %v1744
        %1788 = vmatprep.subr.mxu0 %v1737
        %1789 = vmatpush1.msra.mxu0 %v1736
        %1790 = vmatprep.subr.mxu0 %v1729
        %1791 = vmatpush1.msra.mxu0 %v1728
        %1792 = vmatprep.subr.mxu0 %v1721
        %1793 = vmatpush1.msra.mxu0 %v1720
        %1794 = vmatprep.subr.mxu0 %v1713
        %1795 = vmatpush1.msra.mxu0 %v1712
        %1796 = vmatprep.subr.mxu0 %v1705
        %1797 = vmatpush1.msra.mxu0 %v1704
        %1798 = vmatprep.subr.mxu0 %v1697
        %1799 = vmatpush1.msra.mxu0 %v1696
        %1800 = vmatprep.subr.mxu0 %v1689
        %1801 = vmatpush1.msra.mxu0 %v1688
        %1802 = vmatprep.subr.mxu0 0.0
        %1803 = vmatpush2.msra.mxu0 0.0
        %1804 = vmatprep.subr.mxu0 0.0
        %1805 = vmatpush2.msra.mxu0 0.0
        %1806 = vmatprep.subr.mxu0 0.0
        %1807 = vmatpush2.msra.mxu0 0.0
        %1808 = vmatprep.subr.mxu0 0.0
        %1809 = vmatpush2.msra.mxu0 0.0
        %1810 = vmatprep.subr.mxu0 0.0
        %1811 = vmatpush2.msra.mxu0 0.0
        %1812 = vmatprep.subr.mxu0 0.0
        %1813 = vmatpush2.msra.mxu0 0.0
        %1814 = vmatprep.subr.mxu0 0.0
        %1815 = vmatpush2.msra.mxu0 0.0
        %1816 = vmatprep.subr.mxu0 0.0
        %1817 = vmatpush2.msra.mxu0 0.0
        %1818 = vmatprep.subr.mxu0 0.0
        %1819 = vmatpush2.msra.mxu0 0.0
        %1820 = vmatprep.subr.mxu0 0.0
        %1821 = vmatpush2.msra.mxu0 0.0
        %1822 = vmatprep.subr.mxu0 0.0
        %1823 = vmatpush2.msra.mxu0 0.0
        %1824 = vmatprep.subr.mxu0 0.0
        %1825 = vmatpush2.msra.mxu0 0.0
        %1826 = vmatprep.subr.mxu0 0.0
        %1827 = vmatpush2.msra.mxu0 0.0
        %1828 = vmatprep.subr.mxu0 0.0
        %1829 = vmatpush2.msra.mxu0 0.0
        %1830 = vmatprep.subr.mxu0 0.0
        %1831 = vmatpush2.msra.mxu0 0.0
        %1832 = vmatprep.subr.mxu0 0.0
        %1833 = vmatpush2.msra.mxu0 0.0
        %1834 = vmatprep.mubr.f32.mxu0 0.0
        %1835 = vmatmul.mubr.f32.gmra.mxu0 %v1768
        %v1836 = vpop.f32.mrf.mxu0
        %v1837 = vadd.f32 %v1765, %v1836
        %v1838 = vpop.f32.mrf.mxu0
        %v1839 = vadd.f32 %v1765, %v1838
        %1840 = vdwg.mxu0
        %1841 = vmatprep.subr.mxu0 0.0
        %1842 = vmatpush1.msra.mxu0 0.0
        %1843 = vmatprep.subr.mxu0 0.0
        %1844 = vmatpush1.msra.mxu0 0.0
        %1845 = vmatprep.subr.mxu0 0.0
        %1846 = vmatpush1.msra.mxu0 0.0
        %1847 = vmatprep.subr.mxu0 0.0
        %1848 = vmatpush1.msra.mxu0 0.0
        %1849 = vmatprep.subr.mxu0 0.0
        %1850 = vmatpush1.msra.mxu0 0.0
        %1851 = vmatprep.subr.mxu0 0.0
        %1852 = vmatpush1.msra.mxu0 0.0
        %1853 = vmatprep.subr.mxu0 0.0
        %1854 = vmatpush1.msra.mxu0 0.0
        %1855 = vmatprep.subr.mxu0 %v1755
        %1856 = vmatpush1.msra.mxu0 %v1754
        %1857 = vmatprep.subr.mxu0 %v1747
        %1858 = vmatpush1.msra.mxu0 %v1746
        %1859 = vmatprep.subr.mxu0 %v1739
        %1860 = vmatpush1.msra.mxu0 %v1738
        %1861 = vmatprep.subr.mxu0 %v1731
        %1862 = vmatpush1.msra.mxu0 %v1730
        %1863 = vmatprep.subr.mxu0 %v1723
        %1864 = vmatpush1.msra.mxu0 %v1722
        %1865 = vmatprep.subr.mxu0 %v1715
        %1866 = vmatpush1.msra.mxu0 %v1714
        %1867 = vmatprep.subr.mxu0 %v1707
        %1868 = vmatpush1.msra.mxu0 %v1706
        %1869 = vmatprep.subr.mxu0 %v1699
        %1870 = vmatpush1.msra.mxu0 %v1698
        %1871 = vmatprep.subr.mxu0 %v1691
        %1872 = vmatpush1.msra.mxu0 %v1690
        %1873 = vmatprep.subr.mxu0 0.0
        %1874 = vmatpush2.msra.mxu0 0.0
        %1875 = vmatprep.subr.mxu0 0.0
        %1876 = vmatpush2.msra.mxu0 0.0
        %1877 = vmatprep.subr.mxu0 0.0
        %1878 = vmatpush2.msra.mxu0 0.0
        %1879 = vmatprep.subr.mxu0 0.0
        %1880 = vmatpush2.msra.mxu0 0.0
        %1881 = vmatprep.subr.mxu0 0.0
        %1882 = vmatpush2.msra.mxu0 0.0
        %1883 = vmatprep.subr.mxu0 0.0
        %1884 = vmatpush2.msra.mxu0 0.0
        %1885 = vmatprep.subr.mxu0 0.0
        %1886 = vmatpush2.msra.mxu0 0.0
        %1887 = vmatprep.subr.mxu0 0.0
        %1888 = vmatpush2.msra.mxu0 0.0
        %1889 = vmatprep.subr.mxu0 0.0
        %1890 = vmatpush2.msra.mxu0 0.0
        %1891 = vmatprep.subr.mxu0 0.0
        %1892 = vmatpush2.msra.mxu0 0.0
        %1893 = vmatprep.subr.mxu0 0.0
        %1894 = vmatpush2.msra.mxu0 0.0
        %1895 = vmatprep.subr.mxu0 0.0
        %1896 = vmatpush2.msra.mxu0 0.0
        %1897 = vmatprep.subr.mxu0 0.0
        %1898 = vmatpush2.msra.mxu0 0.0
        %1899 = vmatprep.subr.mxu0 0.0
        %1900 = vmatpush2.msra.mxu0 0.0
        %1901 = vmatprep.subr.mxu0 0.0
        %1902 = vmatpush2.msra.mxu0 0.0
        %1903 = vmatprep.subr.mxu0 0.0
        %1904 = vmatpush2.msra.mxu0 0.0
        %1905 = vmatprep.mubr.f32.mxu0 0.0
        %1906 = vmatmul.mubr.f32.gmra.mxu0 %v1768
        %v1907 = vpop.f32.mrf.mxu0
        %v1908 = vadd.f32 %v1765, %v1907
        %v1909 = vpop.f32.mrf.mxu0
        %v1910 = vadd.f32 %v1765, %v1909
        %1911 = vdwg.mxu0
        %1912 = vmatprep.subr.mxu0 0.0
        %1913 = vmatpush1.msra.mxu0 0.0
        %1914 = vmatprep.subr.mxu0 0.0
        %1915 = vmatpush1.msra.mxu0 0.0
        %1916 = vmatprep.subr.mxu0 0.0
        %1917 = vmatpush1.msra.mxu0 0.0
        %1918 = vmatprep.subr.mxu0 0.0
        %1919 = vmatpush1.msra.mxu0 0.0
        %1920 = vmatprep.subr.mxu0 0.0
        %1921 = vmatpush1.msra.mxu0 0.0
        %1922 = vmatprep.subr.mxu0 0.0
        %1923 = vmatpush1.msra.mxu0 0.0
        %1924 = vmatprep.subr.mxu0 0.0
        %1925 = vmatpush1.msra.mxu0 0.0
        %1926 = vmatprep.subr.mxu0 %v1757
        %1927 = vmatpush1.msra.mxu0 %v1756
        %1928 = vmatprep.subr.mxu0 %v1749
        %1929 = vmatpush1.msra.mxu0 %v1748
        %1930 = vmatprep.subr.mxu0 %v1741
        %1931 = vmatpush1.msra.mxu0 %v1740
        %1932 = vmatprep.subr.mxu0 %v1733
        %1933 = vmatpush1.msra.mxu0 %v1732
        %1934 = vmatprep.subr.mxu0 %v1725
        %1935 = vmatpush1.msra.mxu0 %v1724
        %1936 = vmatprep.subr.mxu0 %v1717
        %1937 = vmatpush1.msra.mxu0 %v1716
        %1938 = vmatprep.subr.mxu0 %v1709
        %1939 = vmatpush1.msra.mxu0 %v1708
        %1940 = vmatprep.subr.mxu0 %v1701
        %1941 = vmatpush1.msra.mxu0 %v1700
        %1942 = vmatprep.subr.mxu0 %v1693
        %1943 = vmatpush1.msra.mxu0 %v1692
        %1944 = vmatprep.subr.mxu0 0.0
        %1945 = vmatpush2.msra.mxu0 0.0
        %1946 = vmatprep.subr.mxu0 0.0
        %1947 = vmatpush2.msra.mxu0 0.0
        %1948 = vmatprep.subr.mxu0 0.0
        %1949 = vmatpush2.msra.mxu0 0.0
        %1950 = vmatprep.subr.mxu0 0.0
        %1951 = vmatpush2.msra.mxu0 0.0
        %1952 = vmatprep.subr.mxu0 0.0
        %1953 = vmatpush2.msra.mxu0 0.0
        %1954 = vmatprep.subr.mxu0 0.0
        %1955 = vmatpush2.msra.mxu0 0.0
        %1956 = vmatprep.subr.mxu0 0.0
        %1957 = vmatpush2.msra.mxu0 0.0
        %1958 = vmatprep.subr.mxu0 0.0
        %1959 = vmatpush2.msra.mxu0 0.0
        %1960 = vmatprep.subr.mxu0 0.0
        %1961 = vmatpush2.msra.mxu0 0.0
        %1962 = vmatprep.subr.mxu0 0.0
        %1963 = vmatpush2.msra.mxu0 0.0
        %1964 = vmatprep.subr.mxu0 0.0
        %1965 = vmatpush2.msra.mxu0 0.0
        %1966 = vmatprep.subr.mxu0 0.0
        %1967 = vmatpush2.msra.mxu0 0.0
        %1968 = vmatprep.subr.mxu0 0.0
        %1969 = vmatpush2.msra.mxu0 0.0
        %1970 = vmatprep.subr.mxu0 0.0
        %1971 = vmatpush2.msra.mxu0 0.0
        %1972 = vmatprep.subr.mxu0 0.0
        %1973 = vmatpush2.msra.mxu0 0.0
        %1974 = vmatprep.subr.mxu0 0.0
        %1975 = vmatpush2.msra.mxu0 0.0
        %1976 = vmatprep.mubr.f32.mxu0 0.0
        %1977 = vmatmul.mubr.f32.gmra.mxu0 %v1768
        %v1978 = vpop.f32.mrf.mxu0
        %v1979 = vadd.f32 %v1765, %v1978
        %v1980 = vpop.f32.mrf.mxu0
        %v1981 = vadd.f32 %v1765, %v1980
        %1982 = vdwg.mxu0
        %1983 = vmatprep.subr.mxu0 0.0
        %1984 = vmatpush1.msra.mxu0 0.0
        %1985 = vmatprep.subr.mxu0 0.0
        %1986 = vmatpush1.msra.mxu0 0.0
        %1987 = vmatprep.subr.mxu0 0.0
        %1988 = vmatpush1.msra.mxu0 0.0
        %1989 = vmatprep.subr.mxu0 0.0
        %1990 = vmatpush1.msra.mxu0 0.0
        %1991 = vmatprep.subr.mxu0 0.0
        %1992 = vmatpush1.msra.mxu0 0.0
        %1993 = vmatprep.subr.mxu0 0.0
        %1994 = vmatpush1.msra.mxu0 0.0
        %1995 = vmatprep.subr.mxu0 0.0
        %1996 = vmatpush1.msra.mxu0 0.0
        %1997 = vmatprep.subr.mxu0 %v1759
        %1998 = vmatpush1.msra.mxu0 %v1758
        %1999 = vmatprep.subr.mxu0 %v1751
        %2000 = vmatpush1.msra.mxu0 %v1750
        %2001 = vmatprep.subr.mxu0 %v1743
        %2002 = vmatpush1.msra.mxu0 %v1742
        %2003 = vmatprep.subr.mxu0 %v1735
        %2004 = vmatpush1.msra.mxu0 %v1734
        %2005 = vmatprep.subr.mxu0 %v1727
        %2006 = vmatpush1.msra.mxu0 %v1726
        %2007 = vmatprep.subr.mxu0 %v1719
        %2008 = vmatpush1.msra.mxu0 %v1718
        %2009 = vmatprep.subr.mxu0 %v1711
        %2010 = vmatpush1.msra.mxu0 %v1710
        %2011 = vmatprep.subr.mxu0 %v1703
        %2012 = vmatpush1.msra.mxu0 %v1702
        %2013 = vmatprep.subr.mxu0 %v1695
        %2014 = vmatpush1.msra.mxu0 %v1694
        %2015 = vmatprep.subr.mxu0 0.0
        %2016 = vmatpush2.msra.mxu0 0.0
        %2017 = vmatprep.subr.mxu0 0.0
        %2018 = vmatpush2.msra.mxu0 0.0
        %2019 = vmatprep.subr.mxu0 0.0
        %2020 = vmatpush2.msra.mxu0 0.0
        %2021 = vmatprep.subr.mxu0 0.0
        %2022 = vmatpush2.msra.mxu0 0.0
        %2023 = vmatprep.subr.mxu0 0.0
        %2024 = vmatpush2.msra.mxu0 0.0
        %2025 = vmatprep.subr.mxu0 0.0
        %2026 = vmatpush2.msra.mxu0 0.0
        %2027 = vmatprep.subr.mxu0 0.0
        %2028 = vmatpush2.msra.mxu0 0.0
        %2029 = vmatprep.subr.mxu0 0.0
        %2030 = vmatpush2.msra.mxu0 0.0
        %2031 = vmatprep.subr.mxu0 0.0
        %2032 = vmatpush2.msra.mxu0 0.0
        %2033 = vmatprep.subr.mxu0 0.0
        %2034 = vmatpush2.msra.mxu0 0.0
        %2035 = vmatprep.subr.mxu0 0.0
        %2036 = vmatpush2.msra.mxu0 0.0
        %2037 = vmatprep.subr.mxu0 0.0
        %2038 = vmatpush2.msra.mxu0 0.0
        %2039 = vmatprep.subr.mxu0 0.0
        %2040 = vmatpush2.msra.mxu0 0.0
        %2041 = vmatprep.subr.mxu0 0.0
        %2042 = vmatpush2.msra.mxu0 0.0
        %2043 = vmatprep.subr.mxu0 0.0
        %2044 = vmatpush2.msra.mxu0 0.0
        %2045 = vmatprep.subr.mxu0 0.0
        %2046 = vmatpush2.msra.mxu0 0.0
        %2047 = vmatprep.mubr.f32.mxu0 0.0
        %2048 = vmatmul.mubr.f32.gmra.mxu0 %v1768
        %v2049 = vpop.f32.mrf.mxu0
        %v2050 = vadd.f32 %v1765, %v2049
        %v2051 = vpop.f32.mrf.mxu0
        %v2052 = vadd.f32 %v1765, %v2051
        %2053 = vdwg.mxu0
        %v2054 = vmax.f32 %v1837, 0.0
        %v2055 = vmax.f32 %v1839, 0.0
        %v2056 = vmax.f32 %v1908, 0.0
        %v2057 = vmax.f32 %v1910, 0.0
        %v2058 = vmax.f32 %v1979, 0.0
        %v2059 = vmax.f32 %v1981, 0.0
        %v2060 = vmax.f32 %v2050, 0.0
        %v2061 = vmax.f32 %v2052, 0.0
        %v2062 = vld [vmem:[%s3] sm:$0xff]
        %v2064 = vlaneseq
        %v2065 = vshrl.u32 %v2064, 7
        %v2066 = vsub.s32 0, %v2065
        %v2067 = vrot.slane %v2062, %v2066
        %v2068 = vlaneseq
        %v2069 = vshrl.u32 %v2068, 7
        %v2070 = vsub.s32 1, %v2069
        %v2071 = vrot.slane %v2062, %v2070
        %v2072 = vlaneseq
        %v2073 = vshrl.u32 %v2072, 7
        %v2074 = vsub.s32 2, %v2073
        %v2075 = vrot.slane %v2062, %v2074
        %v2076 = vlaneseq
        %v2077 = vshrl.u32 %v2076, 7
        %v2078 = vsub.s32 3, %v2077
        %v2079 = vrot.slane %v2062, %v2078
        %v2080 = vlaneseq
        %v2081 = vshrl.u32 %v2080, 7
        %v2082 = vsub.s32 4, %v2081
        %v2083 = vrot.slane %v2062, %v2082
        %v2084 = vlaneseq
        %v2085 = vshrl.u32 %v2084, 7
        %v2086 = vsub.s32 5, %v2085
        %v2087 = vrot.slane %v2062, %v2086
        %v2088 = vlaneseq
        %v2089 = vshrl.u32 %v2088, 7
        %v2090 = vsub.s32 6, %v2089
        %v2091 = vrot.slane %v2062, %v2090
        %v2092 = vlaneseq
        %v2093 = vshrl.u32 %v2092, 7
        %v2094 = vsub.s32 7, %v2093
        %v2095 = vrot.slane %v2062, %v2094
        %v2104 = vmul.f32 %v2054, %v2067
        %v2105 = vmul.f32 %v2055, %v2071
        %v2106 = vmul.f32 %v2056, %v2075
        %v2107 = vmul.f32 %v2057, %v2079
        %v2108 = vmul.f32 %v2058, %v2083
        %v2109 = vmul.f32 %v2059, %v2087
        %v2110 = vmul.f32 %v2060, %v2091
        %v2111 = vmul.f32 %v2061, %v2095
        %2112 = vst [vmem:[#allocation3 + $0x8] sm:$0xff] %v2104
        %2113 = vst [vmem:[#allocation3 + $0x10] sm:$0xff] %v2105
        %2114 = vst [vmem:[#allocation3 + $0x18] sm:$0xff] %v2106
        %2115 = vst [vmem:[#allocation3 + $0x20] sm:$0xff] %v2107
        %2116 = vst [vmem:[#allocation3 + $0x28] sm:$0xff] %v2108
        %2117 = vst [vmem:[#allocation3 + $0x30] sm:$0xff] %v2109
        %2118 = vst [vmem:[#allocation3 + $0x38] sm:$0xff] %v2110
        %2119 = vst [vmem:[#allocation3 + $0x40] sm:$0xff] %v2111
        %v2120 = vld [vmem:[#allocation3 + $0x8] sm:$0xff]
        %v2121 = vld [vmem:[#allocation3 + $0x10] sm:$0xff]
        %v2122 = vld [vmem:[#allocation3 + $0x18] sm:$0xff]
        %v2123 = vld [vmem:[#allocation3 + $0x20] sm:$0xff]
        %v2124 = vld [vmem:[#allocation3 + $0x28] sm:$0xff]
        %v2125 = vld [vmem:[#allocation3 + $0x30] sm:$0xff]
        %v2126 = vld [vmem:[#allocation3 + $0x38] sm:$0xff]
        %v2127 = vld [vmem:[#allocation3 + $0x40] sm:$0xff]
        %v2128 = vld [vmem:[#allocation3 + $0x8] sm:$0xff]
        %v2129 = vld [vmem:[#allocation3 + $0x10] sm:$0xff]
        %v2130 = vld [vmem:[#allocation3 + $0x18] sm:$0xff]
        %v2131 = vld [vmem:[#allocation3 + $0x20] sm:$0xff]
        %v2132 = vld [vmem:[#allocation3 + $0x28] sm:$0xff]
        %v2133 = vld [vmem:[#allocation3 + $0x30] sm:$0xff]
        %v2134 = vld [vmem:[#allocation3 + $0x38] sm:$0xff]
        %v2135 = vld [vmem:[#allocation3 + $0x40] sm:$0xff]
        %v2136 = vld [vmem:[#allocation3 + $0x48] sm:$0xff]
        %2146 = vrot.lane.b32.xlu0 %v2128, 127
        %v2147 = vpop.permute.xlu0 %2146
        %2148 = vrot.lane.b32.xlu0 %v2129, 127
        %v2149 = vpop.permute.xlu0 %2148
        %2150 = vrot.lane.b32.xlu0 %v2130, 127
        %v2151 = vpop.permute.xlu0 %2150
        %2152 = vrot.lane.b32.xlu0 %v2131, 127
        %v2153 = vpop.permute.xlu0 %2152
        %2154 = vrot.lane.b32.xlu0 %v2132, 127
        %v2155 = vpop.permute.xlu0 %2154
        %2156 = vrot.lane.b32.xlu0 %v2133, 127
        %v2157 = vpop.permute.xlu0 %2156
        %2158 = vrot.lane.b32.xlu0 %v2134, 127
        %v2159 = vpop.permute.xlu0 %2158
        %2160 = vrot.lane.b32.xlu0 %v2135, 127
        %v2161 = vpop.permute.xlu0 %2160
        %2162 = vrot.lane.b32.xlu0 %v2136, 127
        %v2163 = vpop.permute.xlu0 %2162
        %v2164 = vsel %vm549, %v2147, %v2149
        %v2165 = vsel %vm549, %v2149, %v2151
        %v2166 = vsel %vm549, %v2151, %v2153
        %v2167 = vsel %vm549, %v2153, %v2155
        %v2168 = vsel %vm549, %v2155, %v2157
        %v2169 = vsel %vm549, %v2157, %v2159
        %v2170 = vsel %vm549, %v2159, %v2161
        %v2171 = vsel %vm549, %v2161, %v2163
        %v2180 = vmax.f32 %v2120, %v2164
        %v2181 = vmax.f32 %v2121, %v2165
        %v2182 = vmax.f32 %v2122, %v2166
        %v2183 = vmax.f32 %v2123, %v2167
        %v2184 = vmax.f32 %v2124, %v2168
        %v2185 = vmax.f32 %v2125, %v2169
        %v2186 = vmax.f32 %v2126, %v2170
        %v2187 = vmax.f32 %v2127, %v2171
        %2188 = vrot.lane.b32.xlu0 %v2128, 96
        %v2189 = vpop.permute.xlu0 %2188
        %2190 = vrot.lane.b32.xlu0 %v2129, 96
        %v2191 = vpop.permute.xlu0 %2190
        %2192 = vrot.lane.b32.xlu0 %v2130, 96
        %v2193 = vpop.permute.xlu0 %2192
        %2194 = vrot.lane.b32.xlu0 %v2131, 96
        %v2195 = vpop.permute.xlu0 %2194
        %2196 = vrot.lane.b32.xlu0 %v2132, 96
        %v2197 = vpop.permute.xlu0 %2196
        %2198 = vrot.lane.b32.xlu0 %v2133, 96
        %v2199 = vpop.permute.xlu0 %2198
        %2200 = vrot.lane.b32.xlu0 %v2134, 96
        %v2201 = vpop.permute.xlu0 %2200
        %2202 = vrot.lane.b32.xlu0 %v2135, 96
        %v2203 = vpop.permute.xlu0 %2202
        %2204 = vrot.lane.b32.xlu0 %v2136, 96
        %v2205 = vpop.permute.xlu0 %2204
        %v2206 = vsel %vm671, %v2189, %v2191
        %v2207 = vsel %vm671, %v2191, %v2193
        %v2208 = vsel %vm671, %v2193, %v2195
        %v2209 = vsel %vm671, %v2195, %v2197
        %v2210 = vsel %vm671, %v2197, %v2199
        %v2211 = vsel %vm671, %v2199, %v2201
        %v2212 = vsel %vm671, %v2201, %v2203
        %v2213 = vsel %vm671, %v2203, %v2205
        %v2222 = vmax.f32 %v2180, %v2206
        %v2223 = vmax.f32 %v2181, %v2207
        %v2224 = vmax.f32 %v2182, %v2208
        %v2225 = vmax.f32 %v2183, %v2209
        %v2226 = vmax.f32 %v2184, %v2210
        %v2227 = vmax.f32 %v2185, %v2211
        %v2228 = vmax.f32 %v2186, %v2212
        %v2229 = vmax.f32 %v2187, %v2213
        %2230 = vrot.lane.b32.xlu0 %v2128, 95
        %v2231 = vpop.permute.xlu0 %2230
        %2232 = vrot.lane.b32.xlu0 %v2129, 95
        %v2233 = vpop.permute.xlu0 %2232
        %2234 = vrot.lane.b32.xlu0 %v2130, 95
        %v2235 = vpop.permute.xlu0 %2234
        %2236 = vrot.lane.b32.xlu0 %v2131, 95
        %v2237 = vpop.permute.xlu0 %2236
        %2238 = vrot.lane.b32.xlu0 %v2132, 95
        %v2239 = vpop.permute.xlu0 %2238
        %2240 = vrot.lane.b32.xlu0 %v2133, 95
        %v2241 = vpop.permute.xlu0 %2240
        %2242 = vrot.lane.b32.xlu0 %v2134, 95
        %v2243 = vpop.permute.xlu0 %2242
        %2244 = vrot.lane.b32.xlu0 %v2135, 95
        %v2245 = vpop.permute.xlu0 %2244
        %2246 = vrot.lane.b32.xlu0 %v2136, 95
        %v2247 = vpop.permute.xlu0 %2246
        %v2248 = vsel %vm732, %v2231, %v2233
        %v2249 = vsel %vm732, %v2233, %v2235
        %v2250 = vsel %vm732, %v2235, %v2237
        %v2251 = vsel %vm732, %v2237, %v2239
        %v2252 = vsel %vm732, %v2239, %v2241
        %v2253 = vsel %vm732, %v2241, %v2243
        %v2254 = vsel %vm732, %v2243, %v2245
        %v2255 = vsel %vm732, %v2245, %v2247
        %v2264 = vmax.f32 %v2222, %v2248
        %v2265 = vmax.f32 %v2223, %v2249
        %v2266 = vmax.f32 %v2224, %v2250
        %v2267 = vmax.f32 %v2225, %v2251
        %v2268 = vmax.f32 %v2226, %v2252
        %v2269 = vmax.f32 %v2227, %v2253
        %v2270 = vmax.f32 %v2228, %v2254
        %v2271 = vmax.f32 %v2229, %v2255
        %v2272 = vld [vmem:[%s3] sm:$0xff]
        %v2274 = vlaneseq
        %v2275 = vshrl.u32 %v2274, 7
        %v2276 = vsub.s32 0, %v2275
        %v2277 = vrot.slane %v2272, %v2276
        %v2278 = vlaneseq
        %v2279 = vshrl.u32 %v2278, 7
        %v2280 = vsub.s32 1, %v2279
        %v2281 = vrot.slane %v2272, %v2280
        %v2282 = vlaneseq
        %v2283 = vshrl.u32 %v2282, 7
        %v2284 = vsub.s32 2, %v2283
        %v2285 = vrot.slane %v2272, %v2284
        %v2286 = vlaneseq
        %v2287 = vshrl.u32 %v2286, 7
        %v2288 = vsub.s32 3, %v2287
        %v2289 = vrot.slane %v2272, %v2288
        %v2290 = vlaneseq
        %v2291 = vshrl.u32 %v2290, 7
        %v2292 = vsub.s32 4, %v2291
        %v2293 = vrot.slane %v2272, %v2292
        %v2294 = vlaneseq
        %v2295 = vshrl.u32 %v2294, 7
        %v2296 = vsub.s32 5, %v2295
        %v2297 = vrot.slane %v2272, %v2296
        %v2298 = vlaneseq
        %v2299 = vshrl.u32 %v2298, 7
        %v2300 = vsub.s32 6, %v2299
        %v2301 = vrot.slane %v2272, %v2300
        %v2302 = vlaneseq
        %v2303 = vshrl.u32 %v2302, 7
        %v2304 = vsub.s32 7, %v2303
        %v2305 = vrot.slane %v2272, %v2304
        %v2314 = vmul.f32 %v2264, %v2277
        %v2315 = vmul.f32 %v2265, %v2281
        %v2316 = vmul.f32 %v2266, %v2285
        %v2317 = vmul.f32 %v2267, %v2289
        %v2318 = vmul.f32 %v2268, %v2293
        %v2319 = vmul.f32 %v2269, %v2297
        %v2320 = vmul.f32 %v2270, %v2301
        %v2321 = vmul.f32 %v2271, %v2305
        %2322 = vst [vmem:[#allocation2 + $0x8] sm:$0xff] %v2314
        %2323 = vst [vmem:[#allocation2 + $0x10] sm:$0xff] %v2315
        %2324 = vst [vmem:[#allocation2 + $0x18] sm:$0xff] %v2316
        %2325 = vst [vmem:[#allocation2 + $0x20] sm:$0xff] %v2317
        %2326 = vst [vmem:[#allocation2 + $0x28] sm:$0xff] %v2318
        %2327 = vst [vmem:[#allocation2 + $0x30] sm:$0xff] %v2319
        %2328 = vst [vmem:[#allocation2 + $0x38] sm:$0xff] %v2320
        %2329 = vst [vmem:[#allocation2 + $0x40] sm:$0xff] %v2321
        %v2330 = vld [vmem:[#allocation2] sm:$0xff]
        %v2331 = vld [vmem:[#allocation2 + $0x8] sm:$0xff]
        %v2332 = vld [vmem:[#allocation2 + $0x10] sm:$0xff]
        %v2333 = vld [vmem:[#allocation2 + $0x18] sm:$0xff]
        %v2334 = vld [vmem:[#allocation2 + $0x20] sm:$0xff]
        %v2335 = vld [vmem:[#allocation2 + $0x28] sm:$0xff]
        %v2336 = vld [vmem:[#allocation2 + $0x30] sm:$0xff]
        %v2337 = vld [vmem:[#allocation2 + $0x38] sm:$0xff]
        %v2338 = vld [vmem:[#allocation2 + $0x40] sm:$0xff]
        %2348 = vrot.lane.b32.xlu0 %v2330, 66
        %v2349 = vpop.permute.xlu0 %2348
        %2350 = vrot.lane.b32.xlu0 %v2331, 66
        %v2351 = vpop.permute.xlu0 %2350
        %2352 = vrot.lane.b32.xlu0 %v2332, 66
        %v2353 = vpop.permute.xlu0 %2352
        %2354 = vrot.lane.b32.xlu0 %v2333, 66
        %v2355 = vpop.permute.xlu0 %2354
        %2356 = vrot.lane.b32.xlu0 %v2334, 66
        %v2357 = vpop.permute.xlu0 %2356
        %2358 = vrot.lane.b32.xlu0 %v2335, 66
        %v2359 = vpop.permute.xlu0 %2358
        %2360 = vrot.lane.b32.xlu0 %v2336, 66
        %v2361 = vpop.permute.xlu0 %2360
        %2362 = vrot.lane.b32.xlu0 %v2337, 66
        %v2363 = vpop.permute.xlu0 %2362
        %2364 = vrot.lane.b32.xlu0 %v2338, 66
        %v2365 = vpop.permute.xlu0 %2364
        %vm2366 = vcmask 539648
        %v2367 = vsel %vm2366, %v2349, %v2351
        %v2368 = vsel %vm2366, %v2351, %v2353
        %v2369 = vsel %vm2366, %v2353, %v2355
        %v2370 = vsel %vm2366, %v2355, %v2357
        %v2371 = vsel %vm2366, %v2357, %v2359
        %v2372 = vsel %vm2366, %v2359, %v2361
        %v2373 = vsel %vm2366, %v2361, %v2363
        %v2374 = vsel %vm2366, %v2363, %v2365
        %2383 = vst [vmem:[#allocation4] sm:$0xff] %v2367
        %2384 = vst [vmem:[#allocation4 + $0x8] sm:$0xff] %v2368
        %2385 = vst [vmem:[#allocation4 + $0x10] sm:$0xff] %v2369
        %2386 = vst [vmem:[#allocation4 + $0x18] sm:$0xff] %v2370
        %2387 = vst [vmem:[#allocation4 + $0x20] sm:$0xff] %v2371
        %2388 = vst [vmem:[#allocation4 + $0x28] sm:$0xff] %v2372
        %2389 = vst [vmem:[#allocation4 + $0x30] sm:$0xff] %v2373
        %2390 = vst [vmem:[#allocation4 + $0x38] sm:$0xff] %v2374
        %v2391 = vld [vmem:[#allocation2] sm:$0xff]
        %v2392 = vld [vmem:[#allocation2 + $0x8] sm:$0xff]
        %v2393 = vld [vmem:[#allocation2 + $0x10] sm:$0xff]
        %v2394 = vld [vmem:[#allocation2 + $0x18] sm:$0xff]
        %v2395 = vld [vmem:[#allocation2 + $0x20] sm:$0xff]
        %v2396 = vld [vmem:[#allocation2 + $0x28] sm:$0xff]
        %v2397 = vld [vmem:[#allocation2 + $0x30] sm:$0xff]
        %v2398 = vld [vmem:[#allocation2 + $0x38] sm:$0xff]
        %v2399 = vld [vmem:[#allocation2 + $0x40] sm:$0xff]
        %2409 = vrot.lane.b32.xlu0 %v2391, 64
        %v2410 = vpop.permute.xlu0 %2409
        %2411 = vrot.lane.b32.xlu0 %v2392, 64
        %v2412 = vpop.permute.xlu0 %2411
        %2413 = vrot.lane.b32.xlu0 %v2393, 64
        %v2414 = vpop.permute.xlu0 %2413
        %2415 = vrot.lane.b32.xlu0 %v2394, 64
        %v2416 = vpop.permute.xlu0 %2415
        %2417 = vrot.lane.b32.xlu0 %v2395, 64
        %v2418 = vpop.permute.xlu0 %2417
        %2419 = vrot.lane.b32.xlu0 %v2396, 64
        %v2420 = vpop.permute.xlu0 %2419
        %2421 = vrot.lane.b32.xlu0 %v2397, 64
        %v2422 = vpop.permute.xlu0 %2421
        %2423 = vrot.lane.b32.xlu0 %v2398, 64
        %v2424 = vpop.permute.xlu0 %2423
        %2425 = vrot.lane.b32.xlu0 %v2399, 64
        %v2426 = vpop.permute.xlu0 %2425
        %vm2427 = vcmask 523264
        %v2428 = vsel %vm2427, %v2410, %v2412
        %v2429 = vsel %vm2427, %v2412, %v2414
        %v2430 = vsel %vm2427, %v2414, %v2416
        %v2431 = vsel %vm2427, %v2416, %v2418
        %v2432 = vsel %vm2427, %v2418, %v2420
        %v2433 = vsel %vm2427, %v2420, %v2422
        %v2434 = vsel %vm2427, %v2422, %v2424
        %v2435 = vsel %vm2427, %v2424, %v2426
        %2444 = vst [vmem:[#allocation4 + $0x40] sm:$0xff] %v2428
        %2445 = vst [vmem:[#allocation4 + $0x48] sm:$0xff] %v2429
        %2446 = vst [vmem:[#allocation4 + $0x50] sm:$0xff] %v2430
        %2447 = vst [vmem:[#allocation4 + $0x58] sm:$0xff] %v2431
        %2448 = vst [vmem:[#allocation4 + $0x60] sm:$0xff] %v2432
        %2449 = vst [vmem:[#allocation4 + $0x68] sm:$0xff] %v2433
        %2450 = vst [vmem:[#allocation4 + $0x70] sm:$0xff] %v2434
        %2451 = vst [vmem:[#allocation4 + $0x78] sm:$0xff] %v2435
        %v2452 = vld [vmem:[#allocation2] sm:$0xff]
        %v2453 = vld [vmem:[#allocation2 + $0x8] sm:$0xff]
        %v2454 = vld [vmem:[#allocation2 + $0x10] sm:$0xff]
        %v2455 = vld [vmem:[#allocation2 + $0x18] sm:$0xff]
        %v2456 = vld [vmem:[#allocation2 + $0x20] sm:$0xff]
        %v2457 = vld [vmem:[#allocation2 + $0x28] sm:$0xff]
        %v2458 = vld [vmem:[#allocation2 + $0x30] sm:$0xff]
        %v2459 = vld [vmem:[#allocation2 + $0x38] sm:$0xff]
        %v2460 = vld [vmem:[#allocation2 + $0x40] sm:$0xff]
        %2470 = vrot.lane.b32.xlu0 %v2452, 62
        %v2471 = vpop.permute.xlu0 %2470
        %2472 = vrot.lane.b32.xlu0 %v2453, 62
        %v2473 = vpop.permute.xlu0 %2472
        %2474 = vrot.lane.b32.xlu0 %v2454, 62
        %v2475 = vpop.permute.xlu0 %2474
        %2476 = vrot.lane.b32.xlu0 %v2455, 62
        %v2477 = vpop.permute.xlu0 %2476
        %2478 = vrot.lane.b32.xlu0 %v2456, 62
        %v2479 = vpop.permute.xlu0 %2478
        %2480 = vrot.lane.b32.xlu0 %v2457, 62
        %v2481 = vpop.permute.xlu0 %2480
        %2482 = vrot.lane.b32.xlu0 %v2458, 62
        %v2483 = vpop.permute.xlu0 %2482
        %2484 = vrot.lane.b32.xlu0 %v2459, 62
        %v2485 = vpop.permute.xlu0 %2484
        %2486 = vrot.lane.b32.xlu0 %v2460, 62
        %v2487 = vpop.permute.xlu0 %2486
        %vm2488 = vcmask 506880
        %v2489 = vsel %vm2488, %v2471, %v2473
        %v2490 = vsel %vm2488, %v2473, %v2475
        %v2491 = vsel %vm2488, %v2475, %v2477
        %v2492 = vsel %vm2488, %v2477, %v2479
        %v2493 = vsel %vm2488, %v2479, %v2481
        %v2494 = vsel %vm2488, %v2481, %v2483
        %v2495 = vsel %vm2488, %v2483, %v2485
        %v2496 = vsel %vm2488, %v2485, %v2487
        %2505 = vst [vmem:[#allocation4 + $0x80] sm:$0xff] %v2489
        %2506 = vst [vmem:[#allocation4 + $0x88] sm:$0xff] %v2490
        %2507 = vst [vmem:[#allocation4 + $0x90] sm:$0xff] %v2491
        %2508 = vst [vmem:[#allocation4 + $0x98] sm:$0xff] %v2492
        %2509 = vst [vmem:[#allocation4 + $0xa0] sm:$0xff] %v2493
        %2510 = vst [vmem:[#allocation4 + $0xa8] sm:$0xff] %v2494
        %2511 = vst [vmem:[#allocation4 + $0xb0] sm:$0xff] %v2495
        %2512 = vst [vmem:[#allocation4 + $0xb8] sm:$0xff] %v2496
        %v2513 = vld [vmem:[#allocation2] sm:$0xff]
        %v2514 = vld [vmem:[#allocation2 + $0x8] sm:$0xff]
        %v2515 = vld [vmem:[#allocation2 + $0x10] sm:$0xff]
        %v2516 = vld [vmem:[#allocation2 + $0x18] sm:$0xff]
        %v2517 = vld [vmem:[#allocation2 + $0x20] sm:$0xff]
        %v2518 = vld [vmem:[#allocation2 + $0x28] sm:$0xff]
        %v2519 = vld [vmem:[#allocation2 + $0x30] sm:$0xff]
        %v2520 = vld [vmem:[#allocation2 + $0x38] sm:$0xff]
        %v2521 = vld [vmem:[#allocation2 + $0x40] sm:$0xff]
        %2531 = vrot.lane.b32.xlu0 %v2513, 2
        %v2532 = vpop.permute.xlu0 %2531
        %2533 = vrot.lane.b32.xlu0 %v2514, 2
        %v2534 = vpop.permute.xlu0 %2533
        %2535 = vrot.lane.b32.xlu0 %v2515, 2
        %v2536 = vpop.permute.xlu0 %2535
        %2537 = vrot.lane.b32.xlu0 %v2516, 2
        %v2538 = vpop.permute.xlu0 %2537
        %2539 = vrot.lane.b32.xlu0 %v2517, 2
        %v2540 = vpop.permute.xlu0 %2539
        %2541 = vrot.lane.b32.xlu0 %v2518, 2
        %v2542 = vpop.permute.xlu0 %2541
        %2543 = vrot.lane.b32.xlu0 %v2519, 2
        %v2544 = vpop.permute.xlu0 %2543
        %2545 = vrot.lane.b32.xlu0 %v2520, 2
        %v2546 = vpop.permute.xlu0 %2545
        %2547 = vrot.lane.b32.xlu0 %v2521, 2
        %v2548 = vpop.permute.xlu0 %2547
        %vm2549 = vcmask 15360
        %v2550 = vsel %vm2549, %v2532, %v2534
        %v2551 = vsel %vm2549, %v2534, %v2536
        %v2552 = vsel %vm2549, %v2536, %v2538
        %v2553 = vsel %vm2549, %v2538, %v2540
        %v2554 = vsel %vm2549, %v2540, %v2542
        %v2555 = vsel %vm2549, %v2542, %v2544
        %v2556 = vsel %vm2549, %v2544, %v2546
        %v2557 = vsel %vm2549, %v2546, %v2548
        %2566 = vst [vmem:[#allocation4 + $0xc0] sm:$0xff] %v2550
        %2567 = vst [vmem:[#allocation4 + $0xc8] sm:$0xff] %v2551
        %2568 = vst [vmem:[#allocation4 + $0xd0] sm:$0xff] %v2552
        %2569 = vst [vmem:[#allocation4 + $0xd8] sm:$0xff] %v2553
        %2570 = vst [vmem:[#allocation4 + $0xe0] sm:$0xff] %v2554
        %2571 = vst [vmem:[#allocation4 + $0xe8] sm:$0xff] %v2555
        %2572 = vst [vmem:[#allocation4 + $0xf0] sm:$0xff] %v2556
        %2573 = vst [vmem:[#allocation4 + $0xf8] sm:$0xff] %v2557
        %v2574 = vld [vmem:[#allocation2 + $0x8] sm:$0xff]
        %v2575 = vld [vmem:[#allocation2 + $0x10] sm:$0xff]
        %v2576 = vld [vmem:[#allocation2 + $0x18] sm:$0xff]
        %v2577 = vld [vmem:[#allocation2 + $0x20] sm:$0xff]
        %v2578 = vld [vmem:[#allocation2 + $0x28] sm:$0xff]
        %v2579 = vld [vmem:[#allocation2 + $0x30] sm:$0xff]
        %v2580 = vld [vmem:[#allocation2 + $0x38] sm:$0xff]
        %v2581 = vld [vmem:[#allocation2 + $0x40] sm:$0xff]
        %2582 = vst [vmem:[#allocation4 + $0x100] sm:$0xff] %v2574
        %2583 = vst [vmem:[#allocation4 + $0x108] sm:$0xff] %v2575
        %2584 = vst [vmem:[#allocation4 + $0x110] sm:$0xff] %v2576
        %2585 = vst [vmem:[#allocation4 + $0x118] sm:$0xff] %v2577
        %2586 = vst [vmem:[#allocation4 + $0x120] sm:$0xff] %v2578
        %2587 = vst [vmem:[#allocation4 + $0x128] sm:$0xff] %v2579
        %2588 = vst [vmem:[#allocation4 + $0x130] sm:$0xff] %v2580
        %2589 = vst [vmem:[#allocation4 + $0x138] sm:$0xff] %v2581
        %v2590 = vld [vmem:[#allocation2 + $0x8] sm:$0xff]
        %v2591 = vld [vmem:[#allocation2 + $0x10] sm:$0xff]
        %v2592 = vld [vmem:[#allocation2 + $0x18] sm:$0xff]
        %v2593 = vld [vmem:[#allocation2 + $0x20] sm:$0xff]
        %v2594 = vld [vmem:[#allocation2 + $0x28] sm:$0xff]
        %v2595 = vld [vmem:[#allocation2 + $0x30] sm:$0xff]
        %v2596 = vld [vmem:[#allocation2 + $0x38] sm:$0xff]
        %v2597 = vld [vmem:[#allocation2 + $0x40] sm:$0xff]
        %v2598 = vld [vmem:[#allocation2 + $0x48] sm:$0xff]
        %2608 = vrot.lane.b32.xlu0 %v2590, 126
        %v2609 = vpop.permute.xlu0 %2608
        %2610 = vrot.lane.b32.xlu0 %v2591, 126
        %v2611 = vpop.permute.xlu0 %2610
        %2612 = vrot.lane.b32.xlu0 %v2592, 126
        %v2613 = vpop.permute.xlu0 %2612
        %2614 = vrot.lane.b32.xlu0 %v2593, 126
        %v2615 = vpop.permute.xlu0 %2614
        %2616 = vrot.lane.b32.xlu0 %v2594, 126
        %v2617 = vpop.permute.xlu0 %2616
        %2618 = vrot.lane.b32.xlu0 %v2595, 126
        %v2619 = vpop.permute.xlu0 %2618
        %2620 = vrot.lane.b32.xlu0 %v2596, 126
        %v2621 = vpop.permute.xlu0 %2620
        %2622 = vrot.lane.b32.xlu0 %v2597, 126
        %v2623 = vpop.permute.xlu0 %2622
        %2624 = vrot.lane.b32.xlu0 %v2598, 126
        %v2625 = vpop.permute.xlu0 %2624
        %vm2626 = vcmask 1031168
        %v2627 = vsel %vm2626, %v2609, %v2611
        %v2628 = vsel %vm2626, %v2611, %v2613
        %v2629 = vsel %vm2626, %v2613, %v2615
        %v2630 = vsel %vm2626, %v2615, %v2617
        %v2631 = vsel %vm2626, %v2617, %v2619
        %v2632 = vsel %vm2626, %v2619, %v2621
        %v2633 = vsel %vm2626, %v2621, %v2623
        %v2634 = vsel %vm2626, %v2623, %v2625
        %2643 = vst [vmem:[#allocation4 + $0x140] sm:$0xff] %v2627
        %2644 = vst [vmem:[#allocation4 + $0x148] sm:$0xff] %v2628
        %2645 = vst [vmem:[#allocation4 + $0x150] sm:$0xff] %v2629
        %2646 = vst [vmem:[#allocation4 + $0x158] sm:$0xff] %v2630
        %2647 = vst [vmem:[#allocation4 + $0x160] sm:$0xff] %v2631
        %2648 = vst [vmem:[#allocation4 + $0x168] sm:$0xff] %v2632
        %2649 = vst [vmem:[#allocation4 + $0x170] sm:$0xff] %v2633
        %2650 = vst [vmem:[#allocation4 + $0x178] sm:$0xff] %v2634
        %v2651 = vld [vmem:[#allocation2 + $0x8] sm:$0xff]
        %v2652 = vld [vmem:[#allocation2 + $0x10] sm:$0xff]
        %v2653 = vld [vmem:[#allocation2 + $0x18] sm:$0xff]
        %v2654 = vld [vmem:[#allocation2 + $0x20] sm:$0xff]
        %v2655 = vld [vmem:[#allocation2 + $0x28] sm:$0xff]
        %v2656 = vld [vmem:[#allocation2 + $0x30] sm:$0xff]
        %v2657 = vld [vmem:[#allocation2 + $0x38] sm:$0xff]
        %v2658 = vld [vmem:[#allocation2 + $0x40] sm:$0xff]
        %v2659 = vld [vmem:[#allocation2 + $0x48] sm:$0xff]
        %2669 = vrot.lane.b32.xlu0 %v2651, 66
        %v2670 = vpop.permute.xlu0 %2669
        %2671 = vrot.lane.b32.xlu0 %v2652, 66
        %v2672 = vpop.permute.xlu0 %2671
        %2673 = vrot.lane.b32.xlu0 %v2653, 66
        %v2674 = vpop.permute.xlu0 %2673
        %2675 = vrot.lane.b32.xlu0 %v2654, 66
        %v2676 = vpop.permute.xlu0 %2675
        %2677 = vrot.lane.b32.xlu0 %v2655, 66
        %v2678 = vpop.permute.xlu0 %2677
        %2679 = vrot.lane.b32.xlu0 %v2656, 66
        %v2680 = vpop.permute.xlu0 %2679
        %2681 = vrot.lane.b32.xlu0 %v2657, 66
        %v2682 = vpop.permute.xlu0 %2681
        %2683 = vrot.lane.b32.xlu0 %v2658, 66
        %v2684 = vpop.permute.xlu0 %2683
        %2685 = vrot.lane.b32.xlu0 %v2659, 66
        %v2686 = vpop.permute.xlu0 %2685
        %v2687 = vsel %vm2366, %v2670, %v2672
        %v2688 = vsel %vm2366, %v2672, %v2674
        %v2689 = vsel %vm2366, %v2674, %v2676
        %v2690 = vsel %vm2366, %v2676, %v2678
        %v2691 = vsel %vm2366, %v2678, %v2680
        %v2692 = vsel %vm2366, %v2680, %v2682
        %v2693 = vsel %vm2366, %v2682, %v2684
        %v2694 = vsel %vm2366, %v2684, %v2686
        %2703 = vst [vmem:[#allocation4 + $0x180] sm:$0xff] %v2687
        %2704 = vst [vmem:[#allocation4 + $0x188] sm:$0xff] %v2688
        %2705 = vst [vmem:[#allocation4 + $0x190] sm:$0xff] %v2689
        %2706 = vst [vmem:[#allocation4 + $0x198] sm:$0xff] %v2690
        %2707 = vst [vmem:[#allocation4 + $0x1a0] sm:$0xff] %v2691
        %2708 = vst [vmem:[#allocation4 + $0x1a8] sm:$0xff] %v2692
        %2709 = vst [vmem:[#allocation4 + $0x1b0] sm:$0xff] %v2693
        %2710 = vst [vmem:[#allocation4 + $0x1b8] sm:$0xff] %v2694
        %v2711 = vld [vmem:[#allocation2 + $0x8] sm:$0xff]
        %v2712 = vld [vmem:[#allocation2 + $0x10] sm:$0xff]
        %v2713 = vld [vmem:[#allocation2 + $0x18] sm:$0xff]
        %v2714 = vld [vmem:[#allocation2 + $0x20] sm:$0xff]
        %v2715 = vld [vmem:[#allocation2 + $0x28] sm:$0xff]
        %v2716 = vld [vmem:[#allocation2 + $0x30] sm:$0xff]
        %v2717 = vld [vmem:[#allocation2 + $0x38] sm:$0xff]
        %v2718 = vld [vmem:[#allocation2 + $0x40] sm:$0xff]
        %v2719 = vld [vmem:[#allocation2 + $0x48] sm:$0xff]
        %2729 = vrot.lane.b32.xlu0 %v2711, 64
        %v2730 = vpop.permute.xlu0 %2729
        %2731 = vrot.lane.b32.xlu0 %v2712, 64
        %v2732 = vpop.permute.xlu0 %2731
        %2733 = vrot.lane.b32.xlu0 %v2713, 64
        %v2734 = vpop.permute.xlu0 %2733
        %2735 = vrot.lane.b32.xlu0 %v2714, 64
        %v2736 = vpop.permute.xlu0 %2735
        %2737 = vrot.lane.b32.xlu0 %v2715, 64
        %v2738 = vpop.permute.xlu0 %2737
        %2739 = vrot.lane.b32.xlu0 %v2716, 64
        %v2740 = vpop.permute.xlu0 %2739
        %2741 = vrot.lane.b32.xlu0 %v2717, 64
        %v2742 = vpop.permute.xlu0 %2741
        %2743 = vrot.lane.b32.xlu0 %v2718, 64
        %v2744 = vpop.permute.xlu0 %2743
        %2745 = vrot.lane.b32.xlu0 %v2719, 64
        %v2746 = vpop.permute.xlu0 %2745
        %v2747 = vsel %vm2427, %v2730, %v2732
        %v2748 = vsel %vm2427, %v2732, %v2734
        %v2749 = vsel %vm2427, %v2734, %v2736
        %v2750 = vsel %vm2427, %v2736, %v2738
        %v2751 = vsel %vm2427, %v2738, %v2740
        %v2752 = vsel %vm2427, %v2740, %v2742
        %v2753 = vsel %vm2427, %v2742, %v2744
        %v2754 = vsel %vm2427, %v2744, %v2746
        %2763 = vst [vmem:[#allocation4 + $0x1c0] sm:$0xff] %v2747
        %2764 = vst [vmem:[#allocation4 + $0x1c8] sm:$0xff] %v2748
        %2765 = vst [vmem:[#allocation4 + $0x1d0] sm:$0xff] %v2749
        %2766 = vst [vmem:[#allocation4 + $0x1d8] sm:$0xff] %v2750
        %2767 = vst [vmem:[#allocation4 + $0x1e0] sm:$0xff] %v2751
        %2768 = vst [vmem:[#allocation4 + $0x1e8] sm:$0xff] %v2752
        %2769 = vst [vmem:[#allocation4 + $0x1f0] sm:$0xff] %v2753
        %2770 = vst [vmem:[#allocation4 + $0x1f8] sm:$0xff] %v2754
        %v2771 = vld [vmem:[#allocation2 + $0x8] sm:$0xff]
        %v2772 = vld [vmem:[#allocation2 + $0x10] sm:$0xff]
        %v2773 = vld [vmem:[#allocation2 + $0x18] sm:$0xff]
        %v2774 = vld [vmem:[#allocation2 + $0x20] sm:$0xff]
        %v2775 = vld [vmem:[#allocation2 + $0x28] sm:$0xff]
        %v2776 = vld [vmem:[#allocation2 + $0x30] sm:$0xff]
        %v2777 = vld [vmem:[#allocation2 + $0x38] sm:$0xff]
        %v2778 = vld [vmem:[#allocation2 + $0x40] sm:$0xff]
        %v2779 = vld [vmem:[#allocation2 + $0x48] sm:$0xff]
        %2789 = vrot.lane.b32.xlu0 %v2771, 62
        %v2790 = vpop.permute.xlu0 %2789
        %2791 = vrot.lane.b32.xlu0 %v2772, 62
        %v2792 = vpop.permute.xlu0 %2791
        %2793 = vrot.lane.b32.xlu0 %v2773, 62
        %v2794 = vpop.permute.xlu0 %2793
        %2795 = vrot.lane.b32.xlu0 %v2774, 62
        %v2796 = vpop.permute.xlu0 %2795
        %2797 = vrot.lane.b32.xlu0 %v2775, 62
        %v2798 = vpop.permute.xlu0 %2797
        %2799 = vrot.lane.b32.xlu0 %v2776, 62
        %v2800 = vpop.permute.xlu0 %2799
        %2801 = vrot.lane.b32.xlu0 %v2777, 62
        %v2802 = vpop.permute.xlu0 %2801
        %2803 = vrot.lane.b32.xlu0 %v2778, 62
        %v2804 = vpop.permute.xlu0 %2803
        %2805 = vrot.lane.b32.xlu0 %v2779, 62
        %v2806 = vpop.permute.xlu0 %2805
        %v2807 = vsel %vm2488, %v2790, %v2792
        %v2808 = vsel %vm2488, %v2792, %v2794
        %v2809 = vsel %vm2488, %v2794, %v2796
        %v2810 = vsel %vm2488, %v2796, %v2798
        %v2811 = vsel %vm2488, %v2798, %v2800
        %v2812 = vsel %vm2488, %v2800, %v2802
        %v2813 = vsel %vm2488, %v2802, %v2804
        %v2814 = vsel %vm2488, %v2804, %v2806
        %2823 = vst [vmem:[#allocation4 + $0x200] sm:$0xff] %v2807
        %2824 = vst [vmem:[#allocation4 + $0x208] sm:$0xff] %v2808
        %2825 = vst [vmem:[#allocation4 + $0x210] sm:$0xff] %v2809
        %2826 = vst [vmem:[#allocation4 + $0x218] sm:$0xff] %v2810
        %2827 = vst [vmem:[#allocation4 + $0x220] sm:$0xff] %v2811
        %2828 = vst [vmem:[#allocation4 + $0x228] sm:$0xff] %v2812
        %2829 = vst [vmem:[#allocation4 + $0x230] sm:$0xff] %v2813
        %2830 = vst [vmem:[#allocation4 + $0x238] sm:$0xff] %v2814
        %s2831 = scalar_lea.vmem %s1, 16
        %v2832 = vld [vmem:[%s2831] sm:$0xff]
        %v2833 = vld [vmem:[#allocation4] sm:$0xff]
        %v2834 = vld [vmem:[#allocation4 + $0x8] sm:$0xff]
        %v2835 = vld [vmem:[#allocation4 + $0x10] sm:$0xff]
        %v2836 = vld [vmem:[#allocation4 + $0x18] sm:$0xff]
        %v2837 = vld [vmem:[#allocation4 + $0x20] sm:$0xff]
        %v2838 = vld [vmem:[#allocation4 + $0x28] sm:$0xff]
        %v2839 = vld [vmem:[#allocation4 + $0x30] sm:$0xff]
        %v2840 = vld [vmem:[#allocation4 + $0x38] sm:$0xff]
        %v2841 = vld [vmem:[#allocation4 + $0x40] sm:$0xff]
        %v2842 = vld [vmem:[#allocation4 + $0x48] sm:$0xff]
        %v2843 = vld [vmem:[#allocation4 + $0x50] sm:$0xff]
        %v2844 = vld [vmem:[#allocation4 + $0x58] sm:$0xff]
        %v2845 = vld [vmem:[#allocation4 + $0x60] sm:$0xff]
        %v2846 = vld [vmem:[#allocation4 + $0x68] sm:$0xff]
        %v2847 = vld [vmem:[#allocation4 + $0x70] sm:$0xff]
        %v2848 = vld [vmem:[#allocation4 + $0x78] sm:$0xff]
        %v2849 = vld [vmem:[#allocation4 + $0x80] sm:$0xff]
        %v2850 = vld [vmem:[#allocation4 + $0x88] sm:$0xff]
        %v2851 = vld [vmem:[#allocation4 + $0x90] sm:$0xff]
        %v2852 = vld [vmem:[#allocation4 + $0x98] sm:$0xff]
        %v2853 = vld [vmem:[#allocation4 + $0xa0] sm:$0xff]
        %v2854 = vld [vmem:[#allocation4 + $0xa8] sm:$0xff]
        %v2855 = vld [vmem:[#allocation4 + $0xb0] sm:$0xff]
        %v2856 = vld [vmem:[#allocation4 + $0xb8] sm:$0xff]
        %v2857 = vld [vmem:[#allocation4 + $0xc0] sm:$0xff]
        %v2858 = vld [vmem:[#allocation4 + $0xc8] sm:$0xff]
        %v2859 = vld [vmem:[#allocation4 + $0xd0] sm:$0xff]
        %v2860 = vld [vmem:[#allocation4 + $0xd8] sm:$0xff]
        %v2861 = vld [vmem:[#allocation4 + $0xe0] sm:$0xff]
        %v2862 = vld [vmem:[#allocation4 + $0xe8] sm:$0xff]
        %v2863 = vld [vmem:[#allocation4 + $0xf0] sm:$0xff]
        %v2864 = vld [vmem:[#allocation4 + $0xf8] sm:$0xff]
        %v2865 = vld [vmem:[#allocation4 + $0x100] sm:$0xff]
        %v2866 = vld [vmem:[#allocation4 + $0x108] sm:$0xff]
        %v2867 = vld [vmem:[#allocation4 + $0x110] sm:$0xff]
        %v2868 = vld [vmem:[#allocation4 + $0x118] sm:$0xff]
        %v2869 = vld [vmem:[#allocation4 + $0x120] sm:$0xff]
        %v2870 = vld [vmem:[#allocation4 + $0x128] sm:$0xff]
        %v2871 = vld [vmem:[#allocation4 + $0x130] sm:$0xff]
        %v2872 = vld [vmem:[#allocation4 + $0x138] sm:$0xff]
        %v2873 = vld [vmem:[#allocation4 + $0x140] sm:$0xff]
        %v2874 = vld [vmem:[#allocation4 + $0x148] sm:$0xff]
        %v2875 = vld [vmem:[#allocation4 + $0x150] sm:$0xff]
        %v2876 = vld [vmem:[#allocation4 + $0x158] sm:$0xff]
        %v2877 = vld [vmem:[#allocation4 + $0x160] sm:$0xff]
        %v2878 = vld [vmem:[#allocation4 + $0x168] sm:$0xff]
        %v2879 = vld [vmem:[#allocation4 + $0x170] sm:$0xff]
        %v2880 = vld [vmem:[#allocation4 + $0x178] sm:$0xff]
        %v2881 = vld [vmem:[#allocation4 + $0x180] sm:$0xff]
        %v2882 = vld [vmem:[#allocation4 + $0x188] sm:$0xff]
        %v2883 = vld [vmem:[#allocation4 + $0x190] sm:$0xff]
        %v2884 = vld [vmem:[#allocation4 + $0x198] sm:$0xff]
        %v2885 = vld [vmem:[#allocation4 + $0x1a0] sm:$0xff]
        %v2886 = vld [vmem:[#allocation4 + $0x1a8] sm:$0xff]
        %v2887 = vld [vmem:[#allocation4 + $0x1b0] sm:$0xff]
        %v2888 = vld [vmem:[#allocation4 + $0x1b8] sm:$0xff]
        %v2889 = vld [vmem:[#allocation4 + $0x1c0] sm:$0xff]
        %v2890 = vld [vmem:[#allocation4 + $0x1c8] sm:$0xff]
        %v2891 = vld [vmem:[#allocation4 + $0x1d0] sm:$0xff]
        %v2892 = vld [vmem:[#allocation4 + $0x1d8] sm:$0xff]
        %v2893 = vld [vmem:[#allocation4 + $0x1e0] sm:$0xff]
        %v2894 = vld [vmem:[#allocation4 + $0x1e8] sm:$0xff]
        %v2895 = vld [vmem:[#allocation4 + $0x1f0] sm:$0xff]
        %v2896 = vld [vmem:[#allocation4 + $0x1f8] sm:$0xff]
        %v2897 = vld [vmem:[#allocation4 + $0x200] sm:$0xff]
        %v2898 = vld [vmem:[#allocation4 + $0x208] sm:$0xff]
        %v2899 = vld [vmem:[#allocation4 + $0x210] sm:$0xff]
        %v2900 = vld [vmem:[#allocation4 + $0x218] sm:$0xff]
        %v2901 = vld [vmem:[#allocation4 + $0x220] sm:$0xff]
        %v2902 = vld [vmem:[#allocation4 + $0x228] sm:$0xff]
        %v2903 = vld [vmem:[#allocation4 + $0x230] sm:$0xff]
        %v2904 = vld [vmem:[#allocation4 + $0x238] sm:$0xff]
        %s2905 = scalar_lea.vmem %s2, 16
        %v2906 = vld [vmem:[%s2905] sm:$0xff]
        %2908 = vset.pattern.permute.xlu0 0
        %2909 = vperm.xlu0 %2908, %v2906
        %v2910 = vpop.permute.xlu0 %2909
        %v2913 = vsel %vm836, %v2832, 0
        %2915 = vmatprep.subr.mxu0 0.0
        %2916 = vmatpush1.msra.mxu0 0.0
        %2917 = vmatprep.subr.mxu0 0.0
        %2918 = vmatpush1.msra.mxu0 0.0
        %2919 = vmatprep.subr.mxu0 0.0
        %2920 = vmatpush1.msra.mxu0 0.0
        %2921 = vmatprep.subr.mxu0 0.0
        %2922 = vmatpush1.msra.mxu0 0.0
        %2923 = vmatprep.subr.mxu0 0.0
        %2924 = vmatpush1.msra.mxu0 0.0
        %2925 = vmatprep.subr.mxu0 0.0
        %2926 = vmatpush1.msra.mxu0 0.0
        %2927 = vmatprep.subr.mxu0 0.0
        %2928 = vmatpush1.msra.mxu0 0.0
        %2929 = vmatprep.subr.mxu0 %v2898
        %2930 = vmatpush1.msra.mxu0 %v2897
        %2931 = vmatprep.subr.mxu0 %v2890
        %2932 = vmatpush1.msra.mxu0 %v2889
        %2933 = vmatprep.subr.mxu0 %v2882
        %2934 = vmatpush1.msra.mxu0 %v2881
        %2935 = vmatprep.subr.mxu0 %v2874
        %2936 = vmatpush1.msra.mxu0 %v2873
        %2937 = vmatprep.subr.mxu0 %v2866
        %2938 = vmatpush1.msra.mxu0 %v2865
        %2939 = vmatprep.subr.mxu0 %v2858
        %2940 = vmatpush1.msra.mxu0 %v2857
        %2941 = vmatprep.subr.mxu0 %v2850
        %2942 = vmatpush1.msra.mxu0 %v2849
        %2943 = vmatprep.subr.mxu0 %v2842
        %2944 = vmatpush1.msra.mxu0 %v2841
        %2945 = vmatprep.subr.mxu0 %v2834
        %2946 = vmatpush1.msra.mxu0 %v2833
        %2947 = vmatprep.subr.mxu0 0.0
        %2948 = vmatpush2.msra.mxu0 0.0
        %2949 = vmatprep.subr.mxu0 0.0
        %2950 = vmatpush2.msra.mxu0 0.0
        %2951 = vmatprep.subr.mxu0 0.0
        %2952 = vmatpush2.msra.mxu0 0.0
        %2953 = vmatprep.subr.mxu0 0.0
        %2954 = vmatpush2.msra.mxu0 0.0
        %2955 = vmatprep.subr.mxu0 0.0
        %2956 = vmatpush2.msra.mxu0 0.0
        %2957 = vmatprep.subr.mxu0 0.0
        %2958 = vmatpush2.msra.mxu0 0.0
        %2959 = vmatprep.subr.mxu0 0.0
        %2960 = vmatpush2.msra.mxu0 0.0
        %2961 = vmatprep.subr.mxu0 0.0
        %2962 = vmatpush2.msra.mxu0 0.0
        %2963 = vmatprep.subr.mxu0 0.0
        %2964 = vmatpush2.msra.mxu0 0.0
        %2965 = vmatprep.subr.mxu0 0.0
        %2966 = vmatpush2.msra.mxu0 0.0
        %2967 = vmatprep.subr.mxu0 0.0
        %2968 = vmatpush2.msra.mxu0 0.0
        %2969 = vmatprep.subr.mxu0 0.0
        %2970 = vmatpush2.msra.mxu0 0.0
        %2971 = vmatprep.subr.mxu0 0.0
        %2972 = vmatpush2.msra.mxu0 0.0
        %2973 = vmatprep.subr.mxu0 0.0
        %2974 = vmatpush2.msra.mxu0 0.0
        %2975 = vmatprep.subr.mxu0 0.0
        %2976 = vmatpush2.msra.mxu0 0.0
        %2977 = vmatprep.subr.mxu0 0.0
        %2978 = vmatpush2.msra.mxu0 0.0
        %2979 = vmatprep.mubr.f32.mxu0 0.0
        %2980 = vmatmul.mubr.f32.gmra.mxu0 %v2913
        %v2981 = vpop.f32.mrf.mxu0
        %v2982 = vadd.f32 %v2910, %v2981
        %v2983 = vpop.f32.mrf.mxu0
        %v2984 = vadd.f32 %v2910, %v2983
        %2985 = vdwg.mxu0
        %2986 = vmatprep.subr.mxu0 0.0
        %2987 = vmatpush1.msra.mxu0 0.0
        %2988 = vmatprep.subr.mxu0 0.0
        %2989 = vmatpush1.msra.mxu0 0.0
        %2990 = vmatprep.subr.mxu0 0.0
        %2991 = vmatpush1.msra.mxu0 0.0
        %2992 = vmatprep.subr.mxu0 0.0
        %2993 = vmatpush1.msra.mxu0 0.0
        %2994 = vmatprep.subr.mxu0 0.0
        %2995 = vmatpush1.msra.mxu0 0.0
        %2996 = vmatprep.subr.mxu0 0.0
        %2997 = vmatpush1.msra.mxu0 0.0
        %2998 = vmatprep.subr.mxu0 0.0
        %2999 = vmatpush1.msra.mxu0 0.0
        %3000 = vmatprep.subr.mxu0 %v2900
        %3001 = vmatpush1.msra.mxu0 %v2899
        %3002 = vmatprep.subr.mxu0 %v2892
        %3003 = vmatpush1.msra.mxu0 %v2891
        %3004 = vmatprep.subr.mxu0 %v2884
        %3005 = vmatpush1.msra.mxu0 %v2883
        %3006 = vmatprep.subr.mxu0 %v2876
        %3007 = vmatpush1.msra.mxu0 %v2875
        %3008 = vmatprep.subr.mxu0 %v2868
        %3009 = vmatpush1.msra.mxu0 %v2867
        %3010 = vmatprep.subr.mxu0 %v2860
        %3011 = vmatpush1.msra.mxu0 %v2859
        %3012 = vmatprep.subr.mxu0 %v2852
        %3013 = vmatpush1.msra.mxu0 %v2851
        %3014 = vmatprep.subr.mxu0 %v2844
        %3015 = vmatpush1.msra.mxu0 %v2843
        %3016 = vmatprep.subr.mxu0 %v2836
        %3017 = vmatpush1.msra.mxu0 %v2835
        %3018 = vmatprep.subr.mxu0 0.0
        %3019 = vmatpush2.msra.mxu0 0.0
        %3020 = vmatprep.subr.mxu0 0.0
        %3021 = vmatpush2.msra.mxu0 0.0
        %3022 = vmatprep.subr.mxu0 0.0
        %3023 = vmatpush2.msra.mxu0 0.0
        %3024 = vmatprep.subr.mxu0 0.0
        %3025 = vmatpush2.msra.mxu0 0.0
        %3026 = vmatprep.subr.mxu0 0.0
        %3027 = vmatpush2.msra.mxu0 0.0
        %3028 = vmatprep.subr.mxu0 0.0
        %3029 = vmatpush2.msra.mxu0 0.0
        %3030 = vmatprep.subr.mxu0 0.0
        %3031 = vmatpush2.msra.mxu0 0.0
        %3032 = vmatprep.subr.mxu0 0.0
        %3033 = vmatpush2.msra.mxu0 0.0
        %3034 = vmatprep.subr.mxu0 0.0
        %3035 = vmatpush2.msra.mxu0 0.0
        %3036 = vmatprep.subr.mxu0 0.0
        %3037 = vmatpush2.msra.mxu0 0.0
        %3038 = vmatprep.subr.mxu0 0.0
        %3039 = vmatpush2.msra.mxu0 0.0
        %3040 = vmatprep.subr.mxu0 0.0
        %3041 = vmatpush2.msra.mxu0 0.0
        %3042 = vmatprep.subr.mxu0 0.0
        %3043 = vmatpush2.msra.mxu0 0.0
        %3044 = vmatprep.subr.mxu0 0.0
        %3045 = vmatpush2.msra.mxu0 0.0
        %3046 = vmatprep.subr.mxu0 0.0
        %3047 = vmatpush2.msra.mxu0 0.0
        %3048 = vmatprep.subr.mxu0 0.0
        %3049 = vmatpush2.msra.mxu0 0.0
        %3050 = vmatprep.mubr.f32.mxu0 0.0
        %3051 = vmatmul.mubr.f32.gmra.mxu0 %v2913
        %v3052 = vpop.f32.mrf.mxu0
        %v3053 = vadd.f32 %v2910, %v3052
        %v3054 = vpop.f32.mrf.mxu0
        %v3055 = vadd.f32 %v2910, %v3054
        %3056 = vdwg.mxu0
        %3057 = vmatprep.subr.mxu0 0.0
        %3058 = vmatpush1.msra.mxu0 0.0
        %3059 = vmatprep.subr.mxu0 0.0
        %3060 = vmatpush1.msra.mxu0 0.0
        %3061 = vmatprep.subr.mxu0 0.0
        %3062 = vmatpush1.msra.mxu0 0.0
        %3063 = vmatprep.subr.mxu0 0.0
        %3064 = vmatpush1.msra.mxu0 0.0
        %3065 = vmatprep.subr.mxu0 0.0
        %3066 = vmatpush1.msra.mxu0 0.0
        %3067 = vmatprep.subr.mxu0 0.0
        %3068 = vmatpush1.msra.mxu0 0.0
        %3069 = vmatprep.subr.mxu0 0.0
        %3070 = vmatpush1.msra.mxu0 0.0
        %3071 = vmatprep.subr.mxu0 %v2902
        %3072 = vmatpush1.msra.mxu0 %v2901
        %3073 = vmatprep.subr.mxu0 %v2894
        %3074 = vmatpush1.msra.mxu0 %v2893
        %3075 = vmatprep.subr.mxu0 %v2886
        %3076 = vmatpush1.msra.mxu0 %v2885
        %3077 = vmatprep.subr.mxu0 %v2878
        %3078 = vmatpush1.msra.mxu0 %v2877
        %3079 = vmatprep.subr.mxu0 %v2870
        %3080 = vmatpush1.msra.mxu0 %v2869
        %3081 = vmatprep.subr.mxu0 %v2862
        %3082 = vmatpush1.msra.mxu0 %v2861
        %3083 = vmatprep.subr.mxu0 %v2854
        %3084 = vmatpush1.msra.mxu0 %v2853
        %3085 = vmatprep.subr.mxu0 %v2846
        %3086 = vmatpush1.msra.mxu0 %v2845
        %3087 = vmatprep.subr.mxu0 %v2838
        %3088 = vmatpush1.msra.mxu0 %v2837
        %3089 = vmatprep.subr.mxu0 0.0
        %3090 = vmatpush2.msra.mxu0 0.0
        %3091 = vmatprep.subr.mxu0 0.0
        %3092 = vmatpush2.msra.mxu0 0.0
        %3093 = vmatprep.subr.mxu0 0.0
        %3094 = vmatpush2.msra.mxu0 0.0
        %3095 = vmatprep.subr.mxu0 0.0
        %3096 = vmatpush2.msra.mxu0 0.0
        %3097 = vmatprep.subr.mxu0 0.0
        %3098 = vmatpush2.msra.mxu0 0.0
        %3099 = vmatprep.subr.mxu0 0.0
        %3100 = vmatpush2.msra.mxu0 0.0
        %3101 = vmatprep.subr.mxu0 0.0
        %3102 = vmatpush2.msra.mxu0 0.0
        %3103 = vmatprep.subr.mxu0 0.0
        %3104 = vmatpush2.msra.mxu0 0.0
        %3105 = vmatprep.subr.mxu0 0.0
        %3106 = vmatpush2.msra.mxu0 0.0
        %3107 = vmatprep.subr.mxu0 0.0
        %3108 = vmatpush2.msra.mxu0 0.0
        %3109 = vmatprep.subr.mxu0 0.0
        %3110 = vmatpush2.msra.mxu0 0.0
        %3111 = vmatprep.subr.mxu0 0.0
        %3112 = vmatpush2.msra.mxu0 0.0
        %3113 = vmatprep.subr.mxu0 0.0
        %3114 = vmatpush2.msra.mxu0 0.0
        %3115 = vmatprep.subr.mxu0 0.0
        %3116 = vmatpush2.msra.mxu0 0.0
        %3117 = vmatprep.subr.mxu0 0.0
        %3118 = vmatpush2.msra.mxu0 0.0
        %3119 = vmatprep.subr.mxu0 0.0
        %3120 = vmatpush2.msra.mxu0 0.0
        %3121 = vmatprep.mubr.f32.mxu0 0.0
        %3122 = vmatmul.mubr.f32.gmra.mxu0 %v2913
        %v3123 = vpop.f32.mrf.mxu0
        %v3124 = vadd.f32 %v2910, %v3123
        %v3125 = vpop.f32.mrf.mxu0
        %v3126 = vadd.f32 %v2910, %v3125
        %3127 = vdwg.mxu0
        %3128 = vmatprep.subr.mxu0 0.0
        %3129 = vmatpush1.msra.mxu0 0.0
        %3130 = vmatprep.subr.mxu0 0.0
        %3131 = vmatpush1.msra.mxu0 0.0
        %3132 = vmatprep.subr.mxu0 0.0
        %3133 = vmatpush1.msra.mxu0 0.0
        %3134 = vmatprep.subr.mxu0 0.0
        %3135 = vmatpush1.msra.mxu0 0.0
        %3136 = vmatprep.subr.mxu0 0.0
        %3137 = vmatpush1.msra.mxu0 0.0
        %3138 = vmatprep.subr.mxu0 0.0
        %3139 = vmatpush1.msra.mxu0 0.0
        %3140 = vmatprep.subr.mxu0 0.0
        %3141 = vmatpush1.msra.mxu0 0.0
        %3142 = vmatprep.subr.mxu0 %v2904
        %3143 = vmatpush1.msra.mxu0 %v2903
        %3144 = vmatprep.subr.mxu0 %v2896
        %3145 = vmatpush1.msra.mxu0 %v2895
        %3146 = vmatprep.subr.mxu0 %v2888
        %3147 = vmatpush1.msra.mxu0 %v2887
        %3148 = vmatprep.subr.mxu0 %v2880
        %3149 = vmatpush1.msra.mxu0 %v2879
        %3150 = vmatprep.subr.mxu0 %v2872
        %3151 = vmatpush1.msra.mxu0 %v2871
        %3152 = vmatprep.subr.mxu0 %v2864
        %3153 = vmatpush1.msra.mxu0 %v2863
        %3154 = vmatprep.subr.mxu0 %v2856
        %3155 = vmatpush1.msra.mxu0 %v2855
        %3156 = vmatprep.subr.mxu0 %v2848
        %3157 = vmatpush1.msra.mxu0 %v2847
        %3158 = vmatprep.subr.mxu0 %v2840
        %3159 = vmatpush1.msra.mxu0 %v2839
        %3160 = vmatprep.subr.mxu0 0.0
        %3161 = vmatpush2.msra.mxu0 0.0
        %3162 = vmatprep.subr.mxu0 0.0
        %3163 = vmatpush2.msra.mxu0 0.0
        %3164 = vmatprep.subr.mxu0 0.0
        %3165 = vmatpush2.msra.mxu0 0.0
        %3166 = vmatprep.subr.mxu0 0.0
        %3167 = vmatpush2.msra.mxu0 0.0
        %3168 = vmatprep.subr.mxu0 0.0
        %3169 = vmatpush2.msra.mxu0 0.0
        %3170 = vmatprep.subr.mxu0 0.0
        %3171 = vmatpush2.msra.mxu0 0.0
        %3172 = vmatprep.subr.mxu0 0.0
        %3173 = vmatpush2.msra.mxu0 0.0
        %3174 = vmatprep.subr.mxu0 0.0
        %3175 = vmatpush2.msra.mxu0 0.0
        %3176 = vmatprep.subr.mxu0 0.0
        %3177 = vmatpush2.msra.mxu0 0.0
        %3178 = vmatprep.subr.mxu0 0.0
        %3179 = vmatpush2.msra.mxu0 0.0
        %3180 = vmatprep.subr.mxu0 0.0
        %3181 = vmatpush2.msra.mxu0 0.0
        %3182 = vmatprep.subr.mxu0 0.0
        %3183 = vmatpush2.msra.mxu0 0.0
        %3184 = vmatprep.subr.mxu0 0.0
        %3185 = vmatpush2.msra.mxu0 0.0
        %3186 = vmatprep.subr.mxu0 0.0
        %3187 = vmatpush2.msra.mxu0 0.0
        %3188 = vmatprep.subr.mxu0 0.0
        %3189 = vmatpush2.msra.mxu0 0.0
        %3190 = vmatprep.subr.mxu0 0.0
        %3191 = vmatpush2.msra.mxu0 0.0
        %3192 = vmatprep.mubr.f32.mxu0 0.0
        %3193 = vmatmul.mubr.f32.gmra.mxu0 %v2913
        %v3194 = vpop.f32.mrf.mxu0
        %v3195 = vadd.f32 %v2910, %v3194
        %v3196 = vpop.f32.mrf.mxu0
        %v3197 = vadd.f32 %v2910, %v3196
        %3198 = vdwg.mxu0
        %v3199 = vmax.f32 %v2982, 0.0
        %v3200 = vmax.f32 %v2984, 0.0
        %v3201 = vmax.f32 %v3053, 0.0
        %v3202 = vmax.f32 %v3055, 0.0
        %v3203 = vmax.f32 %v3124, 0.0
        %v3204 = vmax.f32 %v3126, 0.0
        %v3205 = vmax.f32 %v3195, 0.0
        %v3206 = vmax.f32 %v3197, 0.0
        %v3207 = vld [vmem:[%s3] sm:$0xff]
        %v3209 = vlaneseq
        %v3210 = vshrl.u32 %v3209, 7
        %v3211 = vsub.s32 0, %v3210
        %v3212 = vrot.slane %v3207, %v3211
        %v3213 = vlaneseq
        %v3214 = vshrl.u32 %v3213, 7
        %v3215 = vsub.s32 1, %v3214
        %v3216 = vrot.slane %v3207, %v3215
        %v3217 = vlaneseq
        %v3218 = vshrl.u32 %v3217, 7
        %v3219 = vsub.s32 2, %v3218
        %v3220 = vrot.slane %v3207, %v3219
        %v3221 = vlaneseq
        %v3222 = vshrl.u32 %v3221, 7
        %v3223 = vsub.s32 3, %v3222
        %v3224 = vrot.slane %v3207, %v3223
        %v3225 = vlaneseq
        %v3226 = vshrl.u32 %v3225, 7
        %v3227 = vsub.s32 4, %v3226
        %v3228 = vrot.slane %v3207, %v3227
        %v3229 = vlaneseq
        %v3230 = vshrl.u32 %v3229, 7
        %v3231 = vsub.s32 5, %v3230
        %v3232 = vrot.slane %v3207, %v3231
        %v3233 = vlaneseq
        %v3234 = vshrl.u32 %v3233, 7
        %v3235 = vsub.s32 6, %v3234
        %v3236 = vrot.slane %v3207, %v3235
        %v3237 = vlaneseq
        %v3238 = vshrl.u32 %v3237, 7
        %v3239 = vsub.s32 7, %v3238
        %v3240 = vrot.slane %v3207, %v3239
        %v3249 = vmul.f32 %v3199, %v3212
        %v3250 = vmul.f32 %v3200, %v3216
        %v3251 = vmul.f32 %v3201, %v3220
        %v3252 = vmul.f32 %v3202, %v3224
        %v3253 = vmul.f32 %v3203, %v3228
        %v3254 = vmul.f32 %v3204, %v3232
        %v3255 = vmul.f32 %v3205, %v3236
        %v3256 = vmul.f32 %v3206, %v3240
        %3257 = vst [vmem:[#allocation3 + $0x8] sm:$0xff] %v3249
        %3258 = vst [vmem:[#allocation3 + $0x10] sm:$0xff] %v3250
        %3259 = vst [vmem:[#allocation3 + $0x18] sm:$0xff] %v3251
        %3260 = vst [vmem:[#allocation3 + $0x20] sm:$0xff] %v3252
        %3261 = vst [vmem:[#allocation3 + $0x28] sm:$0xff] %v3253
        %3262 = vst [vmem:[#allocation3 + $0x30] sm:$0xff] %v3254
        %3263 = vst [vmem:[#allocation3 + $0x38] sm:$0xff] %v3255
        %3264 = vst [vmem:[#allocation3 + $0x40] sm:$0xff] %v3256
        %v3265 = vld [vmem:[#allocation3] sm:$0xff]
        %v3266 = vld [vmem:[#allocation3 + $0x8] sm:$0xff]
        %v3267 = vld [vmem:[#allocation3 + $0x10] sm:$0xff]
        %v3268 = vld [vmem:[#allocation3 + $0x18] sm:$0xff]
        %v3269 = vld [vmem:[#allocation3 + $0x20] sm:$0xff]
        %v3270 = vld [vmem:[#allocation3 + $0x28] sm:$0xff]
        %v3271 = vld [vmem:[#allocation3 + $0x30] sm:$0xff]
        %v3272 = vld [vmem:[#allocation3 + $0x38] sm:$0xff]
        %v3273 = vld [vmem:[#allocation3 + $0x40] sm:$0xff]
        %3283 = vrot.lane.b32.xlu0 %v3265, 66
        %v3284 = vpop.permute.xlu0 %3283
        %3285 = vrot.lane.b32.xlu0 %v3266, 66
        %v3286 = vpop.permute.xlu0 %3285
        %3287 = vrot.lane.b32.xlu0 %v3267, 66
        %v3288 = vpop.permute.xlu0 %3287
        %3289 = vrot.lane.b32.xlu0 %v3268, 66
        %v3290 = vpop.permute.xlu0 %3289
        %3291 = vrot.lane.b32.xlu0 %v3269, 66
        %v3292 = vpop.permute.xlu0 %3291
        %3293 = vrot.lane.b32.xlu0 %v3270, 66
        %v3294 = vpop.permute.xlu0 %3293
        %3295 = vrot.lane.b32.xlu0 %v3271, 66
        %v3296 = vpop.permute.xlu0 %3295
        %3297 = vrot.lane.b32.xlu0 %v3272, 66
        %v3298 = vpop.permute.xlu0 %3297
        %3299 = vrot.lane.b32.xlu0 %v3273, 66
        %v3300 = vpop.permute.xlu0 %3299
        %v3301 = vsel %vm2366, %v3284, %v3286
        %v3302 = vsel %vm2366, %v3286, %v3288
        %v3303 = vsel %vm2366, %v3288, %v3290
        %v3304 = vsel %vm2366, %v3290, %v3292
        %v3305 = vsel %vm2366, %v3292, %v3294
        %v3306 = vsel %vm2366, %v3294, %v3296
        %v3307 = vsel %vm2366, %v3296, %v3298
        %v3308 = vsel %vm2366, %v3298, %v3300
        %3317 = vst [vmem:[#allocation4] sm:$0xff] %v3301
        %3318 = vst [vmem:[#allocation4 + $0x8] sm:$0xff] %v3302
        %3319 = vst [vmem:[#allocation4 + $0x10] sm:$0xff] %v3303
        %3320 = vst [vmem:[#allocation4 + $0x18] sm:$0xff] %v3304
        %3321 = vst [vmem:[#allocation4 + $0x20] sm:$0xff] %v3305
        %3322 = vst [vmem:[#allocation4 + $0x28] sm:$0xff] %v3306
        %3323 = vst [vmem:[#allocation4 + $0x30] sm:$0xff] %v3307
        %3324 = vst [vmem:[#allocation4 + $0x38] sm:$0xff] %v3308
        %v3325 = vld [vmem:[#allocation3] sm:$0xff]
        %v3326 = vld [vmem:[#allocation3 + $0x8] sm:$0xff]
        %v3327 = vld [vmem:[#allocation3 + $0x10] sm:$0xff]
        %v3328 = vld [vmem:[#allocation3 + $0x18] sm:$0xff]
        %v3329 = vld [vmem:[#allocation3 + $0x20] sm:$0xff]
        %v3330 = vld [vmem:[#allocation3 + $0x28] sm:$0xff]
        %v3331 = vld [vmem:[#allocation3 + $0x30] sm:$0xff]
        %v3332 = vld [vmem:[#allocation3 + $0x38] sm:$0xff]
        %v3333 = vld [vmem:[#allocation3 + $0x40] sm:$0xff]
        %3343 = vrot.lane.b32.xlu0 %v3325, 64
        %v3344 = vpop.permute.xlu0 %3343
        %3345 = vrot.lane.b32.xlu0 %v3326, 64
        %v3346 = vpop.permute.xlu0 %3345
        %3347 = vrot.lane.b32.xlu0 %v3327, 64
        %v3348 = vpop.permute.xlu0 %3347
        %3349 = vrot.lane.b32.xlu0 %v3328, 64
        %v3350 = vpop.permute.xlu0 %3349
        %3351 = vrot.lane.b32.xlu0 %v3329, 64
        %v3352 = vpop.permute.xlu0 %3351
        %3353 = vrot.lane.b32.xlu0 %v3330, 64
        %v3354 = vpop.permute.xlu0 %3353
        %3355 = vrot.lane.b32.xlu0 %v3331, 64
        %v3356 = vpop.permute.xlu0 %3355
        %3357 = vrot.lane.b32.xlu0 %v3332, 64
        %v3358 = vpop.permute.xlu0 %3357
        %3359 = vrot.lane.b32.xlu0 %v3333, 64
        %v3360 = vpop.permute.xlu0 %3359
        %v3361 = vsel %vm2427, %v3344, %v3346
        %v3362 = vsel %vm2427, %v3346, %v3348
        %v3363 = vsel %vm2427, %v3348, %v3350
        %v3364 = vsel %vm2427, %v3350, %v3352
        %v3365 = vsel %vm2427, %v3352, %v3354
        %v3366 = vsel %vm2427, %v3354, %v3356
        %v3367 = vsel %vm2427, %v3356, %v3358
        %v3368 = vsel %vm2427, %v3358, %v3360
        %3377 = vst [vmem:[#allocation4 + $0x40] sm:$0xff] %v3361
        %3378 = vst [vmem:[#allocation4 + $0x48] sm:$0xff] %v3362
        %3379 = vst [vmem:[#allocation4 + $0x50] sm:$0xff] %v3363
        %3380 = vst [vmem:[#allocation4 + $0x58] sm:$0xff] %v3364
        %3381 = vst [vmem:[#allocation4 + $0x60] sm:$0xff] %v3365
        %3382 = vst [vmem:[#allocation4 + $0x68] sm:$0xff] %v3366
        %3383 = vst [vmem:[#allocation4 + $0x70] sm:$0xff] %v3367
        %3384 = vst [vmem:[#allocation4 + $0x78] sm:$0xff] %v3368
        %v3385 = vld [vmem:[#allocation3] sm:$0xff]
        %v3386 = vld [vmem:[#allocation3 + $0x8] sm:$0xff]
        %v3387 = vld [vmem:[#allocation3 + $0x10] sm:$0xff]
        %v3388 = vld [vmem:[#allocation3 + $0x18] sm:$0xff]
        %v3389 = vld [vmem:[#allocation3 + $0x20] sm:$0xff]
        %v3390 = vld [vmem:[#allocation3 + $0x28] sm:$0xff]
        %v3391 = vld [vmem:[#allocation3 + $0x30] sm:$0xff]
        %v3392 = vld [vmem:[#allocation3 + $0x38] sm:$0xff]
        %v3393 = vld [vmem:[#allocation3 + $0x40] sm:$0xff]
        %3403 = vrot.lane.b32.xlu0 %v3385, 62
        %v3404 = vpop.permute.xlu0 %3403
        %3405 = vrot.lane.b32.xlu0 %v3386, 62
        %v3406 = vpop.permute.xlu0 %3405
        %3407 = vrot.lane.b32.xlu0 %v3387, 62
        %v3408 = vpop.permute.xlu0 %3407
        %3409 = vrot.lane.b32.xlu0 %v3388, 62
        %v3410 = vpop.permute.xlu0 %3409
        %3411 = vrot.lane.b32.xlu0 %v3389, 62
        %v3412 = vpop.permute.xlu0 %3411
        %3413 = vrot.lane.b32.xlu0 %v3390, 62
        %v3414 = vpop.permute.xlu0 %3413
        %3415 = vrot.lane.b32.xlu0 %v3391, 62
        %v3416 = vpop.permute.xlu0 %3415
        %3417 = vrot.lane.b32.xlu0 %v3392, 62
        %v3418 = vpop.permute.xlu0 %3417
        %3419 = vrot.lane.b32.xlu0 %v3393, 62
        %v3420 = vpop.permute.xlu0 %3419
        %v3421 = vsel %vm2488, %v3404, %v3406
        %v3422 = vsel %vm2488, %v3406, %v3408
        %v3423 = vsel %vm2488, %v3408, %v3410
        %v3424 = vsel %vm2488, %v3410, %v3412
        %v3425 = vsel %vm2488, %v3412, %v3414
        %v3426 = vsel %vm2488, %v3414, %v3416
        %v3427 = vsel %vm2488, %v3416, %v3418
        %v3428 = vsel %vm2488, %v3418, %v3420
        %3437 = vst [vmem:[#allocation4 + $0x80] sm:$0xff] %v3421
        %3438 = vst [vmem:[#allocation4 + $0x88] sm:$0xff] %v3422
        %3439 = vst [vmem:[#allocation4 + $0x90] sm:$0xff] %v3423
        %3440 = vst [vmem:[#allocation4 + $0x98] sm:$0xff] %v3424
        %3441 = vst [vmem:[#allocation4 + $0xa0] sm:$0xff] %v3425
        %3442 = vst [vmem:[#allocation4 + $0xa8] sm:$0xff] %v3426
        %3443 = vst [vmem:[#allocation4 + $0xb0] sm:$0xff] %v3427
        %3444 = vst [vmem:[#allocation4 + $0xb8] sm:$0xff] %v3428
        %v3445 = vld [vmem:[#allocation3] sm:$0xff]
        %v3446 = vld [vmem:[#allocation3 + $0x8] sm:$0xff]
        %v3447 = vld [vmem:[#allocation3 + $0x10] sm:$0xff]
        %v3448 = vld [vmem:[#allocation3 + $0x18] sm:$0xff]
        %v3449 = vld [vmem:[#allocation3 + $0x20] sm:$0xff]
        %v3450 = vld [vmem:[#allocation3 + $0x28] sm:$0xff]
        %v3451 = vld [vmem:[#allocation3 + $0x30] sm:$0xff]
        %v3452 = vld [vmem:[#allocation3 + $0x38] sm:$0xff]
        %v3453 = vld [vmem:[#allocation3 + $0x40] sm:$0xff]
        %3463 = vrot.lane.b32.xlu0 %v3445, 2
        %v3464 = vpop.permute.xlu0 %3463
        %3465 = vrot.lane.b32.xlu0 %v3446, 2
        %v3466 = vpop.permute.xlu0 %3465
        %3467 = vrot.lane.b32.xlu0 %v3447, 2
        %v3468 = vpop.permute.xlu0 %3467
        %3469 = vrot.lane.b32.xlu0 %v3448, 2
        %v3470 = vpop.permute.xlu0 %3469
        %3471 = vrot.lane.b32.xlu0 %v3449, 2
        %v3472 = vpop.permute.xlu0 %3471
        %3473 = vrot.lane.b32.xlu0 %v3450, 2
        %v3474 = vpop.permute.xlu0 %3473
        %3475 = vrot.lane.b32.xlu0 %v3451, 2
        %v3476 = vpop.permute.xlu0 %3475
        %3477 = vrot.lane.b32.xlu0 %v3452, 2
        %v3478 = vpop.permute.xlu0 %3477
        %3479 = vrot.lane.b32.xlu0 %v3453, 2
        %v3480 = vpop.permute.xlu0 %3479
        %v3481 = vsel %vm2549, %v3464, %v3466
        %v3482 = vsel %vm2549, %v3466, %v3468
        %v3483 = vsel %vm2549, %v3468, %v3470
        %v3484 = vsel %vm2549, %v3470, %v3472
        %v3485 = vsel %vm2549, %v3472, %v3474
        %v3486 = vsel %vm2549, %v3474, %v3476
        %v3487 = vsel %vm2549, %v3476, %v3478
        %v3488 = vsel %vm2549, %v3478, %v3480
        %3497 = vst [vmem:[#allocation4 + $0xc0] sm:$0xff] %v3481
        %3498 = vst [vmem:[#allocation4 + $0xc8] sm:$0xff] %v3482
        %3499 = vst [vmem:[#allocation4 + $0xd0] sm:$0xff] %v3483
        %3500 = vst [vmem:[#allocation4 + $0xd8] sm:$0xff] %v3484
        %3501 = vst [vmem:[#allocation4 + $0xe0] sm:$0xff] %v3485
        %3502 = vst [vmem:[#allocation4 + $0xe8] sm:$0xff] %v3486
        %3503 = vst [vmem:[#allocation4 + $0xf0] sm:$0xff] %v3487
        %3504 = vst [vmem:[#allocation4 + $0xf8] sm:$0xff] %v3488
        %v3505 = vld [vmem:[#allocation3 + $0x8] sm:$0xff]
        %v3506 = vld [vmem:[#allocation3 + $0x10] sm:$0xff]
        %v3507 = vld [vmem:[#allocation3 + $0x18] sm:$0xff]
        %v3508 = vld [vmem:[#allocation3 + $0x20] sm:$0xff]
        %v3509 = vld [vmem:[#allocation3 + $0x28] sm:$0xff]
        %v3510 = vld [vmem:[#allocation3 + $0x30] sm:$0xff]
        %v3511 = vld [vmem:[#allocation3 + $0x38] sm:$0xff]
        %v3512 = vld [vmem:[#allocation3 + $0x40] sm:$0xff]
        %3513 = vst [vmem:[#allocation4 + $0x100] sm:$0xff] %v3505
        %3514 = vst [vmem:[#allocation4 + $0x108] sm:$0xff] %v3506
        %3515 = vst [vmem:[#allocation4 + $0x110] sm:$0xff] %v3507
        %3516 = vst [vmem:[#allocation4 + $0x118] sm:$0xff] %v3508
        %3517 = vst [vmem:[#allocation4 + $0x120] sm:$0xff] %v3509
        %3518 = vst [vmem:[#allocation4 + $0x128] sm:$0xff] %v3510
        %3519 = vst [vmem:[#allocation4 + $0x130] sm:$0xff] %v3511
        %3520 = vst [vmem:[#allocation4 + $0x138] sm:$0xff] %v3512
        %v3521 = vld [vmem:[#allocation3 + $0x8] sm:$0xff]
        %v3522 = vld [vmem:[#allocation3 + $0x10] sm:$0xff]
        %v3523 = vld [vmem:[#allocation3 + $0x18] sm:$0xff]
        %v3524 = vld [vmem:[#allocation3 + $0x20] sm:$0xff]
        %v3525 = vld [vmem:[#allocation3 + $0x28] sm:$0xff]
        %v3526 = vld [vmem:[#allocation3 + $0x30] sm:$0xff]
        %v3527 = vld [vmem:[#allocation3 + $0x38] sm:$0xff]
        %v3528 = vld [vmem:[#allocation3 + $0x40] sm:$0xff]
        %v3529 = vld [vmem:[#allocation3 + $0x48] sm:$0xff]
        %3539 = vrot.lane.b32.xlu0 %v3521, 126
        %v3540 = vpop.permute.xlu0 %3539
        %3541 = vrot.lane.b32.xlu0 %v3522, 126
        %v3542 = vpop.permute.xlu0 %3541
        %3543 = vrot.lane.b32.xlu0 %v3523, 126
        %v3544 = vpop.permute.xlu0 %3543
        %3545 = vrot.lane.b32.xlu0 %v3524, 126
        %v3546 = vpop.permute.xlu0 %3545
        %3547 = vrot.lane.b32.xlu0 %v3525, 126
        %v3548 = vpop.permute.xlu0 %3547
        %3549 = vrot.lane.b32.xlu0 %v3526, 126
        %v3550 = vpop.permute.xlu0 %3549
        %3551 = vrot.lane.b32.xlu0 %v3527, 126
        %v3552 = vpop.permute.xlu0 %3551
        %3553 = vrot.lane.b32.xlu0 %v3528, 126
        %v3554 = vpop.permute.xlu0 %3553
        %3555 = vrot.lane.b32.xlu0 %v3529, 126
        %v3556 = vpop.permute.xlu0 %3555
        %v3557 = vsel %vm2626, %v3540, %v3542
        %v3558 = vsel %vm2626, %v3542, %v3544
        %v3559 = vsel %vm2626, %v3544, %v3546
        %v3560 = vsel %vm2626, %v3546, %v3548
        %v3561 = vsel %vm2626, %v3548, %v3550
        %v3562 = vsel %vm2626, %v3550, %v3552
        %v3563 = vsel %vm2626, %v3552, %v3554
        %v3564 = vsel %vm2626, %v3554, %v3556
        %3573 = vst [vmem:[#allocation4 + $0x140] sm:$0xff] %v3557
        %3574 = vst [vmem:[#allocation4 + $0x148] sm:$0xff] %v3558
        %3575 = vst [vmem:[#allocation4 + $0x150] sm:$0xff] %v3559
        %3576 = vst [vmem:[#allocation4 + $0x158] sm:$0xff] %v3560
        %3577 = vst [vmem:[#allocation4 + $0x160] sm:$0xff] %v3561
        %3578 = vst [vmem:[#allocation4 + $0x168] sm:$0xff] %v3562
        %3579 = vst [vmem:[#allocation4 + $0x170] sm:$0xff] %v3563
        %3580 = vst [vmem:[#allocation4 + $0x178] sm:$0xff] %v3564
        %v3581 = vld [vmem:[#allocation3 + $0x8] sm:$0xff]
        %v3582 = vld [vmem:[#allocation3 + $0x10] sm:$0xff]
        %v3583 = vld [vmem:[#allocation3 + $0x18] sm:$0xff]
        %v3584 = vld [vmem:[#allocation3 + $0x20] sm:$0xff]
        %v3585 = vld [vmem:[#allocation3 + $0x28] sm:$0xff]
        %v3586 = vld [vmem:[#allocation3 + $0x30] sm:$0xff]
        %v3587 = vld [vmem:[#allocation3 + $0x38] sm:$0xff]
        %v3588 = vld [vmem:[#allocation3 + $0x40] sm:$0xff]
        %v3589 = vld [vmem:[#allocation3 + $0x48] sm:$0xff]
        %3599 = vrot.lane.b32.xlu0 %v3581, 66
        %v3600 = vpop.permute.xlu0 %3599
        %3601 = vrot.lane.b32.xlu0 %v3582, 66
        %v3602 = vpop.permute.xlu0 %3601
        %3603 = vrot.lane.b32.xlu0 %v3583, 66
        %v3604 = vpop.permute.xlu0 %3603
        %3605 = vrot.lane.b32.xlu0 %v3584, 66
        %v3606 = vpop.permute.xlu0 %3605
        %3607 = vrot.lane.b32.xlu0 %v3585, 66
        %v3608 = vpop.permute.xlu0 %3607
        %3609 = vrot.lane.b32.xlu0 %v3586, 66
        %v3610 = vpop.permute.xlu0 %3609
        %3611 = vrot.lane.b32.xlu0 %v3587, 66
        %v3612 = vpop.permute.xlu0 %3611
        %3613 = vrot.lane.b32.xlu0 %v3588, 66
        %v3614 = vpop.permute.xlu0 %3613
        %3615 = vrot.lane.b32.xlu0 %v3589, 66
        %v3616 = vpop.permute.xlu0 %3615
        %v3617 = vsel %vm2366, %v3600, %v3602
        %v3618 = vsel %vm2366, %v3602, %v3604
        %v3619 = vsel %vm2366, %v3604, %v3606
        %v3620 = vsel %vm2366, %v3606, %v3608
        %v3621 = vsel %vm2366, %v3608, %v3610
        %v3622 = vsel %vm2366, %v3610, %v3612
        %v3623 = vsel %vm2366, %v3612, %v3614
        %v3624 = vsel %vm2366, %v3614, %v3616
        %3633 = vst [vmem:[#allocation4 + $0x180] sm:$0xff] %v3617
        %3634 = vst [vmem:[#allocation4 + $0x188] sm:$0xff] %v3618
        %3635 = vst [vmem:[#allocation4 + $0x190] sm:$0xff] %v3619
        %3636 = vst [vmem:[#allocation4 + $0x198] sm:$0xff] %v3620
        %3637 = vst [vmem:[#allocation4 + $0x1a0] sm:$0xff] %v3621
        %3638 = vst [vmem:[#allocation4 + $0x1a8] sm:$0xff] %v3622
        %3639 = vst [vmem:[#allocation4 + $0x1b0] sm:$0xff] %v3623
        %3640 = vst [vmem:[#allocation4 + $0x1b8] sm:$0xff] %v3624
        %v3641 = vld [vmem:[#allocation3 + $0x8] sm:$0xff]
        %v3642 = vld [vmem:[#allocation3 + $0x10] sm:$0xff]
        %v3643 = vld [vmem:[#allocation3 + $0x18] sm:$0xff]
        %v3644 = vld [vmem:[#allocation3 + $0x20] sm:$0xff]
        %v3645 = vld [vmem:[#allocation3 + $0x28] sm:$0xff]
        %v3646 = vld [vmem:[#allocation3 + $0x30] sm:$0xff]
        %v3647 = vld [vmem:[#allocation3 + $0x38] sm:$0xff]
        %v3648 = vld [vmem:[#allocation3 + $0x40] sm:$0xff]
        %v3649 = vld [vmem:[#allocation3 + $0x48] sm:$0xff]
        %3659 = vrot.lane.b32.xlu0 %v3641, 64
        %v3660 = vpop.permute.xlu0 %3659
        %3661 = vrot.lane.b32.xlu0 %v3642, 64
        %v3662 = vpop.permute.xlu0 %3661
        %3663 = vrot.lane.b32.xlu0 %v3643, 64
        %v3664 = vpop.permute.xlu0 %3663
        %3665 = vrot.lane.b32.xlu0 %v3644, 64
        %v3666 = vpop.permute.xlu0 %3665
        %3667 = vrot.lane.b32.xlu0 %v3645, 64
        %v3668 = vpop.permute.xlu0 %3667
        %3669 = vrot.lane.b32.xlu0 %v3646, 64
        %v3670 = vpop.permute.xlu0 %3669
        %3671 = vrot.lane.b32.xlu0 %v3647, 64
        %v3672 = vpop.permute.xlu0 %3671
        %3673 = vrot.lane.b32.xlu0 %v3648, 64
        %v3674 = vpop.permute.xlu0 %3673
        %3675 = vrot.lane.b32.xlu0 %v3649, 64
        %v3676 = vpop.permute.xlu0 %3675
        %v3677 = vsel %vm2427, %v3660, %v3662
        %v3678 = vsel %vm2427, %v3662, %v3664
        %v3679 = vsel %vm2427, %v3664, %v3666
        %v3680 = vsel %vm2427, %v3666, %v3668
        %v3681 = vsel %vm2427, %v3668, %v3670
        %v3682 = vsel %vm2427, %v3670, %v3672
        %v3683 = vsel %vm2427, %v3672, %v3674
        %v3684 = vsel %vm2427, %v3674, %v3676
        %3693 = vst [vmem:[#allocation4 + $0x1c0] sm:$0xff] %v3677
        %3694 = vst [vmem:[#allocation4 + $0x1c8] sm:$0xff] %v3678
        %3695 = vst [vmem:[#allocation4 + $0x1d0] sm:$0xff] %v3679
        %3696 = vst [vmem:[#allocation4 + $0x1d8] sm:$0xff] %v3680
        %3697 = vst [vmem:[#allocation4 + $0x1e0] sm:$0xff] %v3681
        %3698 = vst [vmem:[#allocation4 + $0x1e8] sm:$0xff] %v3682
        %3699 = vst [vmem:[#allocation4 + $0x1f0] sm:$0xff] %v3683
        %3700 = vst [vmem:[#allocation4 + $0x1f8] sm:$0xff] %v3684
        %v3701 = vld [vmem:[#allocation3 + $0x8] sm:$0xff]
        %v3702 = vld [vmem:[#allocation3 + $0x10] sm:$0xff]
        %v3703 = vld [vmem:[#allocation3 + $0x18] sm:$0xff]
        %v3704 = vld [vmem:[#allocation3 + $0x20] sm:$0xff]
        %v3705 = vld [vmem:[#allocation3 + $0x28] sm:$0xff]
        %v3706 = vld [vmem:[#allocation3 + $0x30] sm:$0xff]
        %v3707 = vld [vmem:[#allocation3 + $0x38] sm:$0xff]
        %v3708 = vld [vmem:[#allocation3 + $0x40] sm:$0xff]
        %v3709 = vld [vmem:[#allocation3 + $0x48] sm:$0xff]
        %3719 = vrot.lane.b32.xlu0 %v3701, 62
        %v3720 = vpop.permute.xlu0 %3719
        %3721 = vrot.lane.b32.xlu0 %v3702, 62
        %v3722 = vpop.permute.xlu0 %3721
        %3723 = vrot.lane.b32.xlu0 %v3703, 62
        %v3724 = vpop.permute.xlu0 %3723
        %3725 = vrot.lane.b32.xlu0 %v3704, 62
        %v3726 = vpop.permute.xlu0 %3725
        %3727 = vrot.lane.b32.xlu0 %v3705, 62
        %v3728 = vpop.permute.xlu0 %3727
        %3729 = vrot.lane.b32.xlu0 %v3706, 62
        %v3730 = vpop.permute.xlu0 %3729
        %3731 = vrot.lane.b32.xlu0 %v3707, 62
        %v3732 = vpop.permute.xlu0 %3731
        %3733 = vrot.lane.b32.xlu0 %v3708, 62
        %v3734 = vpop.permute.xlu0 %3733
        %3735 = vrot.lane.b32.xlu0 %v3709, 62
        %v3736 = vpop.permute.xlu0 %3735
        %v3737 = vsel %vm2488, %v3720, %v3722
        %v3738 = vsel %vm2488, %v3722, %v3724
        %v3739 = vsel %vm2488, %v3724, %v3726
        %v3740 = vsel %vm2488, %v3726, %v3728
        %v3741 = vsel %vm2488, %v3728, %v3730
        %v3742 = vsel %vm2488, %v3730, %v3732
        %v3743 = vsel %vm2488, %v3732, %v3734
        %v3744 = vsel %vm2488, %v3734, %v3736
        %3753 = vst [vmem:[#allocation4 + $0x200] sm:$0xff] %v3737
        %3754 = vst [vmem:[#allocation4 + $0x208] sm:$0xff] %v3738
        %3755 = vst [vmem:[#allocation4 + $0x210] sm:$0xff] %v3739
        %3756 = vst [vmem:[#allocation4 + $0x218] sm:$0xff] %v3740
        %3757 = vst [vmem:[#allocation4 + $0x220] sm:$0xff] %v3741
        %3758 = vst [vmem:[#allocation4 + $0x228] sm:$0xff] %v3742
        %3759 = vst [vmem:[#allocation4 + $0x230] sm:$0xff] %v3743
        %3760 = vst [vmem:[#allocation4 + $0x238] sm:$0xff] %v3744
        %s3761 = scalar_lea.vmem %s1, 24
        %v3762 = vld [vmem:[%s3761] sm:$0xff]
        %v3763 = vld [vmem:[#allocation4] sm:$0xff]
        %v3764 = vld [vmem:[#allocation4 + $0x8] sm:$0xff]
        %v3765 = vld [vmem:[#allocation4 + $0x10] sm:$0xff]
        %v3766 = vld [vmem:[#allocation4 + $0x18] sm:$0xff]
        %v3767 = vld [vmem:[#allocation4 + $0x20] sm:$0xff]
        %v3768 = vld [vmem:[#allocation4 + $0x28] sm:$0xff]
        %v3769 = vld [vmem:[#allocation4 + $0x30] sm:$0xff]
        %v3770 = vld [vmem:[#allocation4 + $0x38] sm:$0xff]
        %v3771 = vld [vmem:[#allocation4 + $0x40] sm:$0xff]
        %v3772 = vld [vmem:[#allocation4 + $0x48] sm:$0xff]
        %v3773 = vld [vmem:[#allocation4 + $0x50] sm:$0xff]
        %v3774 = vld [vmem:[#allocation4 + $0x58] sm:$0xff]
        %v3775 = vld [vmem:[#allocation4 + $0x60] sm:$0xff]
        %v3776 = vld [vmem:[#allocation4 + $0x68] sm:$0xff]
        %v3777 = vld [vmem:[#allocation4 + $0x70] sm:$0xff]
        %v3778 = vld [vmem:[#allocation4 + $0x78] sm:$0xff]
        %v3779 = vld [vmem:[#allocation4 + $0x80] sm:$0xff]
        %v3780 = vld [vmem:[#allocation4 + $0x88] sm:$0xff]
        %v3781 = vld [vmem:[#allocation4 + $0x90] sm:$0xff]
        %v3782 = vld [vmem:[#allocation4 + $0x98] sm:$0xff]
        %v3783 = vld [vmem:[#allocation4 + $0xa0] sm:$0xff]
        %v3784 = vld [vmem:[#allocation4 + $0xa8] sm:$0xff]
        %v3785 = vld [vmem:[#allocation4 + $0xb0] sm:$0xff]
        %v3786 = vld [vmem:[#allocation4 + $0xb8] sm:$0xff]
        %v3787 = vld [vmem:[#allocation4 + $0xc0] sm:$0xff]
        %v3788 = vld [vmem:[#allocation4 + $0xc8] sm:$0xff]
        %v3789 = vld [vmem:[#allocation4 + $0xd0] sm:$0xff]
        %v3790 = vld [vmem:[#allocation4 + $0xd8] sm:$0xff]
        %v3791 = vld [vmem:[#allocation4 + $0xe0] sm:$0xff]
        %v3792 = vld [vmem:[#allocation4 + $0xe8] sm:$0xff]
        %v3793 = vld [vmem:[#allocation4 + $0xf0] sm:$0xff]
        %v3794 = vld [vmem:[#allocation4 + $0xf8] sm:$0xff]
        %v3795 = vld [vmem:[#allocation4 + $0x100] sm:$0xff]
        %v3796 = vld [vmem:[#allocation4 + $0x108] sm:$0xff]
        %v3797 = vld [vmem:[#allocation4 + $0x110] sm:$0xff]
        %v3798 = vld [vmem:[#allocation4 + $0x118] sm:$0xff]
        %v3799 = vld [vmem:[#allocation4 + $0x120] sm:$0xff]
        %v3800 = vld [vmem:[#allocation4 + $0x128] sm:$0xff]
        %v3801 = vld [vmem:[#allocation4 + $0x130] sm:$0xff]
        %v3802 = vld [vmem:[#allocation4 + $0x138] sm:$0xff]
        %v3803 = vld [vmem:[#allocation4 + $0x140] sm:$0xff]
        %v3804 = vld [vmem:[#allocation4 + $0x148] sm:$0xff]
        %v3805 = vld [vmem:[#allocation4 + $0x150] sm:$0xff]
        %v3806 = vld [vmem:[#allocation4 + $0x158] sm:$0xff]
        %v3807 = vld [vmem:[#allocation4 + $0x160] sm:$0xff]
        %v3808 = vld [vmem:[#allocation4 + $0x168] sm:$0xff]
        %v3809 = vld [vmem:[#allocation4 + $0x170] sm:$0xff]
        %v3810 = vld [vmem:[#allocation4 + $0x178] sm:$0xff]
        %v3811 = vld [vmem:[#allocation4 + $0x180] sm:$0xff]
        %v3812 = vld [vmem:[#allocation4 + $0x188] sm:$0xff]
        %v3813 = vld [vmem:[#allocation4 + $0x190] sm:$0xff]
        %v3814 = vld [vmem:[#allocation4 + $0x198] sm:$0xff]
        %v3815 = vld [vmem:[#allocation4 + $0x1a0] sm:$0xff]
        %v3816 = vld [vmem:[#allocation4 + $0x1a8] sm:$0xff]
        %v3817 = vld [vmem:[#allocation4 + $0x1b0] sm:$0xff]
        %v3818 = vld [vmem:[#allocation4 + $0x1b8] sm:$0xff]
        %v3819 = vld [vmem:[#allocation4 + $0x1c0] sm:$0xff]
        %v3820 = vld [vmem:[#allocation4 + $0x1c8] sm:$0xff]
        %v3821 = vld [vmem:[#allocation4 + $0x1d0] sm:$0xff]
        %v3822 = vld [vmem:[#allocation4 + $0x1d8] sm:$0xff]
        %v3823 = vld [vmem:[#allocation4 + $0x1e0] sm:$0xff]
        %v3824 = vld [vmem:[#allocation4 + $0x1e8] sm:$0xff]
        %v3825 = vld [vmem:[#allocation4 + $0x1f0] sm:$0xff]
        %v3826 = vld [vmem:[#allocation4 + $0x1f8] sm:$0xff]
        %v3827 = vld [vmem:[#allocation4 + $0x200] sm:$0xff]
        %v3828 = vld [vmem:[#allocation4 + $0x208] sm:$0xff]
        %v3829 = vld [vmem:[#allocation4 + $0x210] sm:$0xff]
        %v3830 = vld [vmem:[#allocation4 + $0x218] sm:$0xff]
        %v3831 = vld [vmem:[#allocation4 + $0x220] sm:$0xff]
        %v3832 = vld [vmem:[#allocation4 + $0x228] sm:$0xff]
        %v3833 = vld [vmem:[#allocation4 + $0x230] sm:$0xff]
        %v3834 = vld [vmem:[#allocation4 + $0x238] sm:$0xff]
        %s3835 = scalar_lea.vmem %s2, 24
        %v3836 = vld [vmem:[%s3835] sm:$0xff]
        %3838 = vset.pattern.permute.xlu0 0
        %3839 = vperm.xlu0 %3838, %v3836
        %v3840 = vpop.permute.xlu0 %3839
        %v3843 = vsel %vm836, %v3762, 0
        %3845 = vmatprep.subr.mxu0 0.0
        %3846 = vmatpush1.msra.mxu0 0.0
        %3847 = vmatprep.subr.mxu0 0.0
        %3848 = vmatpush1.msra.mxu0 0.0
        %3849 = vmatprep.subr.mxu0 0.0
        %3850 = vmatpush1.msra.mxu0 0.0
        %3851 = vmatprep.subr.mxu0 0.0
        %3852 = vmatpush1.msra.mxu0 0.0
        %3853 = vmatprep.subr.mxu0 0.0
        %3854 = vmatpush1.msra.mxu0 0.0
        %3855 = vmatprep.subr.mxu0 0.0
        %3856 = vmatpush1.msra.mxu0 0.0
        %3857 = vmatprep.subr.mxu0 0.0
        %3858 = vmatpush1.msra.mxu0 0.0
        %3859 = vmatprep.subr.mxu0 %v3828
        %3860 = vmatpush1.msra.mxu0 %v3827
        %3861 = vmatprep.subr.mxu0 %v3820
        %3862 = vmatpush1.msra.mxu0 %v3819
        %3863 = vmatprep.subr.mxu0 %v3812
        %3864 = vmatpush1.msra.mxu0 %v3811
        %3865 = vmatprep.subr.mxu0 %v3804
        %3866 = vmatpush1.msra.mxu0 %v3803
        %3867 = vmatprep.subr.mxu0 %v3796
        %3868 = vmatpush1.msra.mxu0 %v3795
        %3869 = vmatprep.subr.mxu0 %v3788
        %3870 = vmatpush1.msra.mxu0 %v3787
        %3871 = vmatprep.subr.mxu0 %v3780
        %3872 = vmatpush1.msra.mxu0 %v3779
        %3873 = vmatprep.subr.mxu0 %v3772
        %3874 = vmatpush1.msra.mxu0 %v3771
        %3875 = vmatprep.subr.mxu0 %v3764
        %3876 = vmatpush1.msra.mxu0 %v3763
        %3877 = vmatprep.subr.mxu0 0.0
        %3878 = vmatpush2.msra.mxu0 0.0
        %3879 = vmatprep.subr.mxu0 0.0
        %3880 = vmatpush2.msra.mxu0 0.0
        %3881 = vmatprep.subr.mxu0 0.0
        %3882 = vmatpush2.msra.mxu0 0.0
        %3883 = vmatprep.subr.mxu0 0.0
        %3884 = vmatpush2.msra.mxu0 0.0
        %3885 = vmatprep.subr.mxu0 0.0
        %3886 = vmatpush2.msra.mxu0 0.0
        %3887 = vmatprep.subr.mxu0 0.0
        %3888 = vmatpush2.msra.mxu0 0.0
        %3889 = vmatprep.subr.mxu0 0.0
        %3890 = vmatpush2.msra.mxu0 0.0
        %3891 = vmatprep.subr.mxu0 0.0
        %3892 = vmatpush2.msra.mxu0 0.0
        %3893 = vmatprep.subr.mxu0 0.0
        %3894 = vmatpush2.msra.mxu0 0.0
        %3895 = vmatprep.subr.mxu0 0.0
        %3896 = vmatpush2.msra.mxu0 0.0
        %3897 = vmatprep.subr.mxu0 0.0
        %3898 = vmatpush2.msra.mxu0 0.0
        %3899 = vmatprep.subr.mxu0 0.0
        %3900 = vmatpush2.msra.mxu0 0.0
        %3901 = vmatprep.subr.mxu0 0.0
        %3902 = vmatpush2.msra.mxu0 0.0
        %3903 = vmatprep.subr.mxu0 0.0
        %3904 = vmatpush2.msra.mxu0 0.0
        %3905 = vmatprep.subr.mxu0 0.0
        %3906 = vmatpush2.msra.mxu0 0.0
        %3907 = vmatprep.subr.mxu0 0.0
        %3908 = vmatpush2.msra.mxu0 0.0
        %3909 = vmatprep.mubr.f32.mxu0 0.0
        %3910 = vmatmul.mubr.f32.gmra.mxu0 %v3843
        %v3911 = vpop.f32.mrf.mxu0
        %v3912 = vadd.f32 %v3840, %v3911
        %v3913 = vpop.f32.mrf.mxu0
        %v3914 = vadd.f32 %v3840, %v3913
        %3915 = vdwg.mxu0
        %3916 = vmatprep.subr.mxu0 0.0
        %3917 = vmatpush1.msra.mxu0 0.0
        %3918 = vmatprep.subr.mxu0 0.0
        %3919 = vmatpush1.msra.mxu0 0.0
        %3920 = vmatprep.subr.mxu0 0.0
        %3921 = vmatpush1.msra.mxu0 0.0
        %3922 = vmatprep.subr.mxu0 0.0
        %3923 = vmatpush1.msra.mxu0 0.0
        %3924 = vmatprep.subr.mxu0 0.0
        %3925 = vmatpush1.msra.mxu0 0.0
        %3926 = vmatprep.subr.mxu0 0.0
        %3927 = vmatpush1.msra.mxu0 0.0
        %3928 = vmatprep.subr.mxu0 0.0
        %3929 = vmatpush1.msra.mxu0 0.0
        %3930 = vmatprep.subr.mxu0 %v3830
        %3931 = vmatpush1.msra.mxu0 %v3829
        %3932 = vmatprep.subr.mxu0 %v3822
        %3933 = vmatpush1.msra.mxu0 %v3821
        %3934 = vmatprep.subr.mxu0 %v3814
        %3935 = vmatpush1.msra.mxu0 %v3813
        %3936 = vmatprep.subr.mxu0 %v3806
        %3937 = vmatpush1.msra.mxu0 %v3805
        %3938 = vmatprep.subr.mxu0 %v3798
        %3939 = vmatpush1.msra.mxu0 %v3797
        %3940 = vmatprep.subr.mxu0 %v3790
        %3941 = vmatpush1.msra.mxu0 %v3789
        %3942 = vmatprep.subr.mxu0 %v3782
        %3943 = vmatpush1.msra.mxu0 %v3781
        %3944 = vmatprep.subr.mxu0 %v3774
        %3945 = vmatpush1.msra.mxu0 %v3773
        %3946 = vmatprep.subr.mxu0 %v3766
        %3947 = vmatpush1.msra.mxu0 %v3765
        %3948 = vmatprep.subr.mxu0 0.0
        %3949 = vmatpush2.msra.mxu0 0.0
        %3950 = vmatprep.subr.mxu0 0.0
        %3951 = vmatpush2.msra.mxu0 0.0
        %3952 = vmatprep.subr.mxu0 0.0
        %3953 = vmatpush2.msra.mxu0 0.0
        %3954 = vmatprep.subr.mxu0 0.0
        %3955 = vmatpush2.msra.mxu0 0.0
        %3956 = vmatprep.subr.mxu0 0.0
        %3957 = vmatpush2.msra.mxu0 0.0
        %3958 = vmatprep.subr.mxu0 0.0
        %3959 = vmatpush2.msra.mxu0 0.0
        %3960 = vmatprep.subr.mxu0 0.0
        %3961 = vmatpush2.msra.mxu0 0.0
        %3962 = vmatprep.subr.mxu0 0.0
        %3963 = vmatpush2.msra.mxu0 0.0
        %3964 = vmatprep.subr.mxu0 0.0
        %3965 = vmatpush2.msra.mxu0 0.0
        %3966 = vmatprep.subr.mxu0 0.0
        %3967 = vmatpush2.msra.mxu0 0.0
        %3968 = vmatprep.subr.mxu0 0.0
        %3969 = vmatpush2.msra.mxu0 0.0
        %3970 = vmatprep.subr.mxu0 0.0
        %3971 = vmatpush2.msra.mxu0 0.0
        %3972 = vmatprep.subr.mxu0 0.0
        %3973 = vmatpush2.msra.mxu0 0.0
        %3974 = vmatprep.subr.mxu0 0.0
        %3975 = vmatpush2.msra.mxu0 0.0
        %3976 = vmatprep.subr.mxu0 0.0
        %3977 = vmatpush2.msra.mxu0 0.0
        %3978 = vmatprep.subr.mxu0 0.0
        %3979 = vmatpush2.msra.mxu0 0.0
        %3980 = vmatprep.mubr.f32.mxu0 0.0
        %3981 = vmatmul.mubr.f32.gmra.mxu0 %v3843
        %v3982 = vpop.f32.mrf.mxu0
        %v3983 = vadd.f32 %v3840, %v3982
        %v3984 = vpop.f32.mrf.mxu0
        %v3985 = vadd.f32 %v3840, %v3984
        %3986 = vdwg.mxu0
        %3987 = vmatprep.subr.mxu0 0.0
        %3988 = vmatpush1.msra.mxu0 0.0
        %3989 = vmatprep.subr.mxu0 0.0
        %3990 = vmatpush1.msra.mxu0 0.0
        %3991 = vmatprep.subr.mxu0 0.0
        %3992 = vmatpush1.msra.mxu0 0.0
        %3993 = vmatprep.subr.mxu0 0.0
        %3994 = vmatpush1.msra.mxu0 0.0
        %3995 = vmatprep.subr.mxu0 0.0
        %3996 = vmatpush1.msra.mxu0 0.0
        %3997 = vmatprep.subr.mxu0 0.0
        %3998 = vmatpush1.msra.mxu0 0.0
        %3999 = vmatprep.subr.mxu0 0.0
        %4000 = vmatpush1.msra.mxu0 0.0
        %4001 = vmatprep.subr.mxu0 %v3832
        %4002 = vmatpush1.msra.mxu0 %v3831
        %4003 = vmatprep.subr.mxu0 %v3824
        %4004 = vmatpush1.msra.mxu0 %v3823
        %4005 = vmatprep.subr.mxu0 %v3816
        %4006 = vmatpush1.msra.mxu0 %v3815
        %4007 = vmatprep.subr.mxu0 %v3808
        %4008 = vmatpush1.msra.mxu0 %v3807
        %4009 = vmatprep.subr.mxu0 %v3800
        %4010 = vmatpush1.msra.mxu0 %v3799
        %4011 = vmatprep.subr.mxu0 %v3792
        %4012 = vmatpush1.msra.mxu0 %v3791
        %4013 = vmatprep.subr.mxu0 %v3784
        %4014 = vmatpush1.msra.mxu0 %v3783
        %4015 = vmatprep.subr.mxu0 %v3776
        %4016 = vmatpush1.msra.mxu0 %v3775
        %4017 = vmatprep.subr.mxu0 %v3768
        %4018 = vmatpush1.msra.mxu0 %v3767
        %4019 = vmatprep.subr.mxu0 0.0
        %4020 = vmatpush2.msra.mxu0 0.0
        %4021 = vmatprep.subr.mxu0 0.0
        %4022 = vmatpush2.msra.mxu0 0.0
        %4023 = vmatprep.subr.mxu0 0.0
        %4024 = vmatpush2.msra.mxu0 0.0
        %4025 = vmatprep.subr.mxu0 0.0
        %4026 = vmatpush2.msra.mxu0 0.0
        %4027 = vmatprep.subr.mxu0 0.0
        %4028 = vmatpush2.msra.mxu0 0.0
        %4029 = vmatprep.subr.mxu0 0.0
        %4030 = vmatpush2.msra.mxu0 0.0
        %4031 = vmatprep.subr.mxu0 0.0
        %4032 = vmatpush2.msra.mxu0 0.0
        %4033 = vmatprep.subr.mxu0 0.0
        %4034 = vmatpush2.msra.mxu0 0.0
        %4035 = vmatprep.subr.mxu0 0.0
        %4036 = vmatpush2.msra.mxu0 0.0
        %4037 = vmatprep.subr.mxu0 0.0
        %4038 = vmatpush2.msra.mxu0 0.0
        %4039 = vmatprep.subr.mxu0 0.0
        %4040 = vmatpush2.msra.mxu0 0.0
        %4041 = vmatprep.subr.mxu0 0.0
        %4042 = vmatpush2.msra.mxu0 0.0
        %4043 = vmatprep.subr.mxu0 0.0
        %4044 = vmatpush2.msra.mxu0 0.0
        %4045 = vmatprep.subr.mxu0 0.0
        %4046 = vmatpush2.msra.mxu0 0.0
        %4047 = vmatprep.subr.mxu0 0.0
        %4048 = vmatpush2.msra.mxu0 0.0
        %4049 = vmatprep.subr.mxu0 0.0
        %4050 = vmatpush2.msra.mxu0 0.0
        %4051 = vmatprep.mubr.f32.mxu0 0.0
        %4052 = vmatmul.mubr.f32.gmra.mxu0 %v3843
        %v4053 = vpop.f32.mrf.mxu0
        %v4054 = vadd.f32 %v3840, %v4053
        %v4055 = vpop.f32.mrf.mxu0
        %v4056 = vadd.f32 %v3840, %v4055
        %4057 = vdwg.mxu0
        %4058 = vmatprep.subr.mxu0 0.0
        %4059 = vmatpush1.msra.mxu0 0.0
        %4060 = vmatprep.subr.mxu0 0.0
        %4061 = vmatpush1.msra.mxu0 0.0
        %4062 = vmatprep.subr.mxu0 0.0
        %4063 = vmatpush1.msra.mxu0 0.0
        %4064 = vmatprep.subr.mxu0 0.0
        %4065 = vmatpush1.msra.mxu0 0.0
        %4066 = vmatprep.subr.mxu0 0.0
        %4067 = vmatpush1.msra.mxu0 0.0
        %4068 = vmatprep.subr.mxu0 0.0
        %4069 = vmatpush1.msra.mxu0 0.0
        %4070 = vmatprep.subr.mxu0 0.0
        %4071 = vmatpush1.msra.mxu0 0.0
        %4072 = vmatprep.subr.mxu0 %v3834
        %4073 = vmatpush1.msra.mxu0 %v3833
        %4074 = vmatprep.subr.mxu0 %v3826
        %4075 = vmatpush1.msra.mxu0 %v3825
        %4076 = vmatprep.subr.mxu0 %v3818
        %4077 = vmatpush1.msra.mxu0 %v3817
        %4078 = vmatprep.subr.mxu0 %v3810
        %4079 = vmatpush1.msra.mxu0 %v3809
        %4080 = vmatprep.subr.mxu0 %v3802
        %4081 = vmatpush1.msra.mxu0 %v3801
        %4082 = vmatprep.subr.mxu0 %v3794
        %4083 = vmatpush1.msra.mxu0 %v3793
        %4084 = vmatprep.subr.mxu0 %v3786
        %4085 = vmatpush1.msra.mxu0 %v3785
        %4086 = vmatprep.subr.mxu0 %v3778
        %4087 = vmatpush1.msra.mxu0 %v3777
        %4088 = vmatprep.subr.mxu0 %v3770
        %4089 = vmatpush1.msra.mxu0 %v3769
        %4090 = vmatprep.subr.mxu0 0.0
        %4091 = vmatpush2.msra.mxu0 0.0
        %4092 = vmatprep.subr.mxu0 0.0
        %4093 = vmatpush2.msra.mxu0 0.0
        %4094 = vmatprep.subr.mxu0 0.0
        %4095 = vmatpush2.msra.mxu0 0.0
        %4096 = vmatprep.subr.mxu0 0.0
        %4097 = vmatpush2.msra.mxu0 0.0
        %4098 = vmatprep.subr.mxu0 0.0
        %4099 = vmatpush2.msra.mxu0 0.0
        %4100 = vmatprep.subr.mxu0 0.0
        %4101 = vmatpush2.msra.mxu0 0.0
        %4102 = vmatprep.subr.mxu0 0.0
        %4103 = vmatpush2.msra.mxu0 0.0
        %4104 = vmatprep.subr.mxu0 0.0
        %4105 = vmatpush2.msra.mxu0 0.0
        %4106 = vmatprep.subr.mxu0 0.0
        %4107 = vmatpush2.msra.mxu0 0.0
        %4108 = vmatprep.subr.mxu0 0.0
        %4109 = vmatpush2.msra.mxu0 0.0
        %4110 = vmatprep.subr.mxu0 0.0
        %4111 = vmatpush2.msra.mxu0 0.0
        %4112 = vmatprep.subr.mxu0 0.0
        %4113 = vmatpush2.msra.mxu0 0.0
        %4114 = vmatprep.subr.mxu0 0.0
        %4115 = vmatpush2.msra.mxu0 0.0
        %4116 = vmatprep.subr.mxu0 0.0
        %4117 = vmatpush2.msra.mxu0 0.0
        %4118 = vmatprep.subr.mxu0 0.0
        %4119 = vmatpush2.msra.mxu0 0.0
        %4120 = vmatprep.subr.mxu0 0.0
        %4121 = vmatpush2.msra.mxu0 0.0
        %4122 = vmatprep.mubr.f32.mxu0 0.0
        %4123 = vmatmul.mubr.f32.gmra.mxu0 %v3843
        %v4124 = vpop.f32.mrf.mxu0
        %v4125 = vadd.f32 %v3840, %v4124
        %v4126 = vpop.f32.mrf.mxu0
        %v4127 = vadd.f32 %v3840, %v4126
        %4128 = vdwg.mxu0
        %v4129 = vmax.f32 %v3912, 0.0
        %v4130 = vmax.f32 %v3914, 0.0
        %v4131 = vmax.f32 %v3983, 0.0
        %v4132 = vmax.f32 %v3985, 0.0
        %v4133 = vmax.f32 %v4054, 0.0
        %v4134 = vmax.f32 %v4056, 0.0
        %v4135 = vmax.f32 %v4125, 0.0
        %v4136 = vmax.f32 %v4127, 0.0
        %v4137 = vld [vmem:[%s3] sm:$0xff]
        %v4139 = vlaneseq
        %v4140 = vshrl.u32 %v4139, 7
        %v4141 = vsub.s32 0, %v4140
        %v4142 = vrot.slane %v4137, %v4141
        %v4143 = vlaneseq
        %v4144 = vshrl.u32 %v4143, 7
        %v4145 = vsub.s32 1, %v4144
        %v4146 = vrot.slane %v4137, %v4145
        %v4147 = vlaneseq
        %v4148 = vshrl.u32 %v4147, 7
        %v4149 = vsub.s32 2, %v4148
        %v4150 = vrot.slane %v4137, %v4149
        %v4151 = vlaneseq
        %v4152 = vshrl.u32 %v4151, 7
        %v4153 = vsub.s32 3, %v4152
        %v4154 = vrot.slane %v4137, %v4153
        %v4155 = vlaneseq
        %v4156 = vshrl.u32 %v4155, 7
        %v4157 = vsub.s32 4, %v4156
        %v4158 = vrot.slane %v4137, %v4157
        %v4159 = vlaneseq
        %v4160 = vshrl.u32 %v4159, 7
        %v4161 = vsub.s32 5, %v4160
        %v4162 = vrot.slane %v4137, %v4161
        %v4163 = vlaneseq
        %v4164 = vshrl.u32 %v4163, 7
        %v4165 = vsub.s32 6, %v4164
        %v4166 = vrot.slane %v4137, %v4165
        %v4167 = vlaneseq
        %v4168 = vshrl.u32 %v4167, 7
        %v4169 = vsub.s32 7, %v4168
        %v4170 = vrot.slane %v4137, %v4169
        %v4179 = vmul.f32 %v4129, %v4142
        %v4180 = vmul.f32 %v4130, %v4146
        %v4181 = vmul.f32 %v4131, %v4150
        %v4182 = vmul.f32 %v4132, %v4154
        %v4183 = vmul.f32 %v4133, %v4158
        %v4184 = vmul.f32 %v4134, %v4162
        %v4185 = vmul.f32 %v4135, %v4166
        %v4186 = vmul.f32 %v4136, %v4170
        %4187 = vst [vmem:[#allocation2 + $0x8] sm:$0xff] %v4179
        %4188 = vst [vmem:[#allocation2 + $0x10] sm:$0xff] %v4180
        %4189 = vst [vmem:[#allocation2 + $0x18] sm:$0xff] %v4181
        %4190 = vst [vmem:[#allocation2 + $0x20] sm:$0xff] %v4182
        %4191 = vst [vmem:[#allocation2 + $0x28] sm:$0xff] %v4183
        %4192 = vst [vmem:[#allocation2 + $0x30] sm:$0xff] %v4184
        %4193 = vst [vmem:[#allocation2 + $0x38] sm:$0xff] %v4185
        %4194 = vst [vmem:[#allocation2 + $0x40] sm:$0xff] %v4186
        %v4195 = vld [vmem:[#allocation2 + $0x8] sm:$0xff]
        %v4196 = vld [vmem:[#allocation2 + $0x10] sm:$0xff]
        %v4197 = vld [vmem:[#allocation2 + $0x18] sm:$0xff]
        %v4198 = vld [vmem:[#allocation2 + $0x20] sm:$0xff]
        %v4199 = vld [vmem:[#allocation2 + $0x28] sm:$0xff]
        %v4200 = vld [vmem:[#allocation2 + $0x30] sm:$0xff]
        %v4201 = vld [vmem:[#allocation2 + $0x38] sm:$0xff]
        %v4202 = vld [vmem:[#allocation2 + $0x40] sm:$0xff]
        %v4203 = vld [vmem:[#allocation2 + $0x8] sm:$0xff]
        %v4204 = vld [vmem:[#allocation2 + $0x10] sm:$0xff]
        %v4205 = vld [vmem:[#allocation2 + $0x18] sm:$0xff]
        %v4206 = vld [vmem:[#allocation2 + $0x20] sm:$0xff]
        %v4207 = vld [vmem:[#allocation2 + $0x28] sm:$0xff]
        %v4208 = vld [vmem:[#allocation2 + $0x30] sm:$0xff]
        %v4209 = vld [vmem:[#allocation2 + $0x38] sm:$0xff]
        %v4210 = vld [vmem:[#allocation2 + $0x40] sm:$0xff]
        %v4211 = vld [vmem:[#allocation2 + $0x48] sm:$0xff]
        %4221 = vrot.lane.b32.xlu0 %v4203, 126
        %v4222 = vpop.permute.xlu0 %4221
        %4223 = vrot.lane.b32.xlu0 %v4204, 126
        %v4224 = vpop.permute.xlu0 %4223
        %4225 = vrot.lane.b32.xlu0 %v4205, 126
        %v4226 = vpop.permute.xlu0 %4225
        %4227 = vrot.lane.b32.xlu0 %v4206, 126
        %v4228 = vpop.permute.xlu0 %4227
        %4229 = vrot.lane.b32.xlu0 %v4207, 126
        %v4230 = vpop.permute.xlu0 %4229
        %4231 = vrot.lane.b32.xlu0 %v4208, 126
        %v4232 = vpop.permute.xlu0 %4231
        %4233 = vrot.lane.b32.xlu0 %v4209, 126
        %v4234 = vpop.permute.xlu0 %4233
        %4235 = vrot.lane.b32.xlu0 %v4210, 126
        %v4236 = vpop.permute.xlu0 %4235
        %4237 = vrot.lane.b32.xlu0 %v4211, 126
        %v4238 = vpop.permute.xlu0 %4237
        %v4239 = vsel %vm2626, %v4222, %v4224
        %v4240 = vsel %vm2626, %v4224, %v4226
        %v4241 = vsel %vm2626, %v4226, %v4228
        %v4242 = vsel %vm2626, %v4228, %v4230
        %v4243 = vsel %vm2626, %v4230, %v4232
        %v4244 = vsel %vm2626, %v4232, %v4234
        %v4245 = vsel %vm2626, %v4234, %v4236
        %v4246 = vsel %vm2626, %v4236, %v4238
        %v4255 = vmax.f32 %v4195, %v4239
        %v4256 = vmax.f32 %v4196, %v4240
        %v4257 = vmax.f32 %v4197, %v4241
        %v4258 = vmax.f32 %v4198, %v4242
        %v4259 = vmax.f32 %v4199, %v4243
        %v4260 = vmax.f32 %v4200, %v4244
        %v4261 = vmax.f32 %v4201, %v4245
        %v4262 = vmax.f32 %v4202, %v4246
        %4263 = vrot.lane.b32.xlu0 %v4203, 64
        %v4264 = vpop.permute.xlu0 %4263
        %4265 = vrot.lane.b32.xlu0 %v4204, 64
        %v4266 = vpop.permute.xlu0 %4265
        %4267 = vrot.lane.b32.xlu0 %v4205, 64
        %v4268 = vpop.permute.xlu0 %4267
        %4269 = vrot.lane.b32.xlu0 %v4206, 64
        %v4270 = vpop.permute.xlu0 %4269
        %4271 = vrot.lane.b32.xlu0 %v4207, 64
        %v4272 = vpop.permute.xlu0 %4271
        %4273 = vrot.lane.b32.xlu0 %v4208, 64
        %v4274 = vpop.permute.xlu0 %4273
        %4275 = vrot.lane.b32.xlu0 %v4209, 64
        %v4276 = vpop.permute.xlu0 %4275
        %4277 = vrot.lane.b32.xlu0 %v4210, 64
        %v4278 = vpop.permute.xlu0 %4277
        %4279 = vrot.lane.b32.xlu0 %v4211, 64
        %v4280 = vpop.permute.xlu0 %4279
        %v4281 = vsel %vm2427, %v4264, %v4266
        %v4282 = vsel %vm2427, %v4266, %v4268
        %v4283 = vsel %vm2427, %v4268, %v4270
        %v4284 = vsel %vm2427, %v4270, %v4272
        %v4285 = vsel %vm2427, %v4272, %v4274
        %v4286 = vsel %vm2427, %v4274, %v4276
        %v4287 = vsel %vm2427, %v4276, %v4278
        %v4288 = vsel %vm2427, %v4278, %v4280
        %v4297 = vmax.f32 %v4255, %v4281
        %v4298 = vmax.f32 %v4256, %v4282
        %v4299 = vmax.f32 %v4257, %v4283
        %v4300 = vmax.f32 %v4258, %v4284
        %v4301 = vmax.f32 %v4259, %v4285
        %v4302 = vmax.f32 %v4260, %v4286
        %v4303 = vmax.f32 %v4261, %v4287
        %v4304 = vmax.f32 %v4262, %v4288
        %4305 = vrot.lane.b32.xlu0 %v4203, 62
        %v4306 = vpop.permute.xlu0 %4305
        %4307 = vrot.lane.b32.xlu0 %v4204, 62
        %v4308 = vpop.permute.xlu0 %4307
        %4309 = vrot.lane.b32.xlu0 %v4205, 62
        %v4310 = vpop.permute.xlu0 %4309
        %4311 = vrot.lane.b32.xlu0 %v4206, 62
        %v4312 = vpop.permute.xlu0 %4311
        %4313 = vrot.lane.b32.xlu0 %v4207, 62
        %v4314 = vpop.permute.xlu0 %4313
        %4315 = vrot.lane.b32.xlu0 %v4208, 62
        %v4316 = vpop.permute.xlu0 %4315
        %4317 = vrot.lane.b32.xlu0 %v4209, 62
        %v4318 = vpop.permute.xlu0 %4317
        %4319 = vrot.lane.b32.xlu0 %v4210, 62
        %v4320 = vpop.permute.xlu0 %4319
        %4321 = vrot.lane.b32.xlu0 %v4211, 62
        %v4322 = vpop.permute.xlu0 %4321
        %v4323 = vsel %vm2488, %v4306, %v4308
        %v4324 = vsel %vm2488, %v4308, %v4310
        %v4325 = vsel %vm2488, %v4310, %v4312
        %v4326 = vsel %vm2488, %v4312, %v4314
        %v4327 = vsel %vm2488, %v4314, %v4316
        %v4328 = vsel %vm2488, %v4316, %v4318
        %v4329 = vsel %vm2488, %v4318, %v4320
        %v4330 = vsel %vm2488, %v4320, %v4322
        %v4339 = vmax.f32 %v4297, %v4323
        %v4340 = vmax.f32 %v4298, %v4324
        %v4341 = vmax.f32 %v4299, %v4325
        %v4342 = vmax.f32 %v4300, %v4326
        %v4343 = vmax.f32 %v4301, %v4327
        %v4344 = vmax.f32 %v4302, %v4328
        %v4345 = vmax.f32 %v4303, %v4329
        %v4346 = vmax.f32 %v4304, %v4330
        %v4347 = vld [vmem:[%s3] sm:$0xff]
        %v4349 = vlaneseq
        %v4350 = vshrl.u32 %v4349, 7
        %v4351 = vsub.s32 0, %v4350
        %v4352 = vrot.slane %v4347, %v4351
        %v4353 = vlaneseq
        %v4354 = vshrl.u32 %v4353, 7
        %v4355 = vsub.s32 1, %v4354
        %v4356 = vrot.slane %v4347, %v4355
        %v4357 = vlaneseq
        %v4358 = vshrl.u32 %v4357, 7
        %v4359 = vsub.s32 2, %v4358
        %v4360 = vrot.slane %v4347, %v4359
        %v4361 = vlaneseq
        %v4362 = vshrl.u32 %v4361, 7
        %v4363 = vsub.s32 3, %v4362
        %v4364 = vrot.slane %v4347, %v4363
        %v4365 = vlaneseq
        %v4366 = vshrl.u32 %v4365, 7
        %v4367 = vsub.s32 4, %v4366
        %v4368 = vrot.slane %v4347, %v4367
        %v4369 = vlaneseq
        %v4370 = vshrl.u32 %v4369, 7
        %v4371 = vsub.s32 5, %v4370
        %v4372 = vrot.slane %v4347, %v4371
        %v4373 = vlaneseq
        %v4374 = vshrl.u32 %v4373, 7
        %v4375 = vsub.s32 6, %v4374
        %v4376 = vrot.slane %v4347, %v4375
        %v4377 = vlaneseq
        %v4378 = vshrl.u32 %v4377, 7
        %v4379 = vsub.s32 7, %v4378
        %v4380 = vrot.slane %v4347, %v4379
        %v4389 = vmul.f32 %v4339, %v4352
        %v4390 = vmul.f32 %v4340, %v4356
        %v4391 = vmul.f32 %v4341, %v4360
        %v4392 = vmul.f32 %v4342, %v4364
        %v4393 = vmul.f32 %v4343, %v4368
        %v4394 = vmul.f32 %v4344, %v4372
        %v4395 = vmul.f32 %v4345, %v4376
        %v4396 = vmul.f32 %v4346, %v4380
        %4397 = vst [vmem:[#allocation3 + $0x8] sm:$0xff] %v4389
        %4398 = vst [vmem:[#allocation3 + $0x10] sm:$0xff] %v4390
        %4399 = vst [vmem:[#allocation3 + $0x18] sm:$0xff] %v4391
        %4400 = vst [vmem:[#allocation3 + $0x20] sm:$0xff] %v4392
        %4401 = vst [vmem:[#allocation3 + $0x28] sm:$0xff] %v4393
        %4402 = vst [vmem:[#allocation3 + $0x30] sm:$0xff] %v4394
        %4403 = vst [vmem:[#allocation3 + $0x38] sm:$0xff] %v4395
        %4404 = vst [vmem:[#allocation3 + $0x40] sm:$0xff] %v4396
        %v4405 = vld [vmem:[%s4] sm:$0xff]
        %v4406 = vld [vmem:[%s4 + $0x8] sm:$0xff]
        %v4407 = vld [vmem:[%s4 + $0x10] sm:$0xff]
        %v4408 = vld [vmem:[%s4 + $0x18] sm:$0xff]
        %v4409 = vld [vmem:[%s4 + $0x20] sm:$0xff]
        %v4410 = vld [vmem:[%s4 + $0x28] sm:$0xff]
        %v4411 = vld [vmem:[%s4 + $0x30] sm:$0xff]
        %v4412 = vld [vmem:[%s4 + $0x38] sm:$0xff]
        %v4413 = vld [vmem:[%s4 + $0x40] sm:$0xff]
        %v4414 = vld [vmem:[%s4 + $0x48] sm:$0xff]
        %v4415 = vld [vmem:[%s4 + $0x50] sm:$0xff]
        %v4416 = vld [vmem:[%s4 + $0x58] sm:$0xff]
        %v4417 = vld [vmem:[%s4 + $0x60] sm:$0xff]
        %v4418 = vld [vmem:[%s4 + $0x68] sm:$0xff]
        %v4419 = vld [vmem:[%s4 + $0x70] sm:$0xff]
        %v4420 = vld [vmem:[%s4 + $0x78] sm:$0xff]
        %v4421 = vld [vmem:[%s4 + $0x80] sm:$0xff]
        %v4422 = vld [vmem:[%s4 + $0x88] sm:$0xff]
        %v4423 = vld [vmem:[%s4 + $0x90] sm:$0xff]
        %v4424 = vld [vmem:[%s4 + $0x98] sm:$0xff]
        %v4425 = vld [vmem:[%s4 + $0xa0] sm:$0xff]
        %v4426 = vld [vmem:[%s4 + $0xa8] sm:$0xff]
        %v4427 = vld [vmem:[%s4 + $0xb0] sm:$0xff]
        %v4428 = vld [vmem:[%s4 + $0xb8] sm:$0xff]
        %v4429 = vld [vmem:[%s4 + $0xc0] sm:$0xff]
        %v4430 = vld [vmem:[%s4 + $0xc8] sm:$0xff]
        %v4431 = vld [vmem:[%s4 + $0xd0] sm:$0xff]
        %v4432 = vld [vmem:[%s4 + $0xd8] sm:$0xff]
        %v4433 = vld [vmem:[%s4 + $0xe0] sm:$0xff]
        %v4434 = vld [vmem:[%s4 + $0xe8] sm:$0xff]
        %v4435 = vld [vmem:[%s4 + $0xf0] sm:$0xff]
        %v4436 = vld [vmem:[%s4 + $0xf8] sm:$0xff]
        %v4437 = vld [vmem:[%s4 + $0x100] sm:$0xff]
        %v4438 = vld [vmem:[%s4 + $0x108] sm:$0xff]
        %v4439 = vld [vmem:[%s4 + $0x110] sm:$0xff]
        %v4440 = vld [vmem:[%s4 + $0x118] sm:$0xff]
        %v4441 = vld [vmem:[%s4 + $0x120] sm:$0xff]
        %v4442 = vld [vmem:[%s4 + $0x128] sm:$0xff]
        %v4443 = vld [vmem:[%s4 + $0x130] sm:$0xff]
        %v4444 = vld [vmem:[%s4 + $0x138] sm:$0xff]
        %v4445 = vld [vmem:[%s4 + $0x140] sm:$0xff]
        %v4446 = vld [vmem:[%s4 + $0x148] sm:$0xff]
        %v4447 = vld [vmem:[%s4 + $0x150] sm:$0xff]
        %v4448 = vld [vmem:[%s4 + $0x158] sm:$0xff]
        %v4449 = vld [vmem:[%s4 + $0x160] sm:$0xff]
        %v4450 = vld [vmem:[%s4 + $0x168] sm:$0xff]
        %v4451 = vld [vmem:[%s4 + $0x170] sm:$0xff]
        %v4452 = vld [vmem:[%s4 + $0x178] sm:$0xff]
        %v4453 = vld [vmem:[%s4 + $0x180] sm:$0xff]
        %v4454 = vld [vmem:[%s4 + $0x188] sm:$0xff]
        %v4455 = vld [vmem:[%s4 + $0x190] sm:$0xff]
        %v4456 = vld [vmem:[%s4 + $0x198] sm:$0xff]
        %v4457 = vld [vmem:[%s4 + $0x1a0] sm:$0xff]
        %v4458 = vld [vmem:[%s4 + $0x1a8] sm:$0xff]
        %v4459 = vld [vmem:[%s4 + $0x1b0] sm:$0xff]
        %v4460 = vld [vmem:[%s4 + $0x1b8] sm:$0xff]
        %v4461 = vld [vmem:[%s4 + $0x1c0] sm:$0xff]
        %v4462 = vld [vmem:[%s4 + $0x1c8] sm:$0xff]
        %v4463 = vld [vmem:[%s4 + $0x1d0] sm:$0xff]
        %v4464 = vld [vmem:[%s4 + $0x1d8] sm:$0xff]
        %v4465 = vld [vmem:[%s4 + $0x1e0] sm:$0xff]
        %v4466 = vld [vmem:[%s4 + $0x1e8] sm:$0xff]
        %v4467 = vld [vmem:[%s4 + $0x1f0] sm:$0xff]
        %v4468 = vld [vmem:[%s4 + $0x1f8] sm:$0xff]
        %v4469 = vld [vmem:[%s4 + $0x200] sm:$0xff]
        %v4470 = vld [vmem:[%s4 + $0x208] sm:$0xff]
        %v4471 = vld [vmem:[%s4 + $0x210] sm:$0xff]
        %v4472 = vld [vmem:[%s4 + $0x218] sm:$0xff]
        %v4473 = vld [vmem:[%s4 + $0x220] sm:$0xff]
        %v4474 = vld [vmem:[%s4 + $0x228] sm:$0xff]
        %v4475 = vld [vmem:[%s4 + $0x230] sm:$0xff]
        %v4476 = vld [vmem:[%s4 + $0x238] sm:$0xff]
        %v4477 = vld [vmem:[%s4 + $0x240] sm:$0xff]
        %v4478 = vld [vmem:[%s4 + $0x248] sm:$0xff]
        %v4479 = vld [vmem:[%s4 + $0x250] sm:$0xff]
        %v4480 = vld [vmem:[%s4 + $0x258] sm:$0xff]
        %v4481 = vld [vmem:[%s4 + $0x260] sm:$0xff]
        %v4482 = vld [vmem:[%s4 + $0x268] sm:$0xff]
        %v4483 = vld [vmem:[%s4 + $0x270] sm:$0xff]
        %v4484 = vld [vmem:[%s4 + $0x278] sm:$0xff]
        %v4485 = vld [vmem:[%s4 + $0x280] sm:$0xff]
        %v4486 = vld [vmem:[%s4 + $0x288] sm:$0xff]
        %v4487 = vld [vmem:[%s4 + $0x290] sm:$0xff]
        %v4488 = vld [vmem:[%s4 + $0x298] sm:$0xff]
        %v4489 = vld [vmem:[%s4 + $0x2a0] sm:$0xff]
        %v4490 = vld [vmem:[%s4 + $0x2a8] sm:$0xff]
        %v4491 = vld [vmem:[%s4 + $0x2b0] sm:$0xff]
        %v4492 = vld [vmem:[%s4 + $0x2b8] sm:$0xff]
        %v4493 = vld [vmem:[%s4 + $0x2c0] sm:$0xff]
        %v4494 = vld [vmem:[%s4 + $0x2c8] sm:$0xff]
        %v4495 = vld [vmem:[%s4 + $0x2d0] sm:$0xff]
        %v4496 = vld [vmem:[%s4 + $0x2d8] sm:$0xff]
        %v4497 = vld [vmem:[%s4 + $0x2e0] sm:$0xff]
        %v4498 = vld [vmem:[%s4 + $0x2e8] sm:$0xff]
        %v4499 = vld [vmem:[%s4 + $0x2f0] sm:$0xff]
        %v4500 = vld [vmem:[%s4 + $0x2f8] sm:$0xff]
        %v4501 = vld [vmem:[%s4 + $0x300] sm:$0xff]
        %v4502 = vld [vmem:[%s4 + $0x308] sm:$0xff]
        %v4503 = vld [vmem:[%s4 + $0x310] sm:$0xff]
        %v4504 = vld [vmem:[%s4 + $0x318] sm:$0xff]
        %v4505 = vld [vmem:[%s4 + $0x320] sm:$0xff]
        %v4506 = vld [vmem:[%s4 + $0x328] sm:$0xff]
        %v4507 = vld [vmem:[%s4 + $0x330] sm:$0xff]
        %v4508 = vld [vmem:[%s4 + $0x338] sm:$0xff]
        %v4509 = vld [vmem:[%s4 + $0x340] sm:$0xff]
        %v4510 = vld [vmem:[%s4 + $0x348] sm:$0xff]
        %v4511 = vld [vmem:[%s4 + $0x350] sm:$0xff]
        %v4512 = vld [vmem:[%s4 + $0x358] sm:$0xff]
        %v4513 = vld [vmem:[%s4 + $0x360] sm:$0xff]
        %v4514 = vld [vmem:[%s4 + $0x368] sm:$0xff]
        %v4515 = vld [vmem:[%s4 + $0x370] sm:$0xff]
        %v4516 = vld [vmem:[%s4 + $0x378] sm:$0xff]
        %v4517 = vlaneseq
        %v4518 = vshrl.u32 %v4517, 7
        %v4519 = vld [vmem:[#allocation3 + $0x8] sm:$0xff]
        %v4520 = vld [vmem:[#allocation3 + $0x10] sm:$0xff]
        %v4521 = vld [vmem:[#allocation3 + $0x18] sm:$0xff]
        %v4522 = vld [vmem:[#allocation3 + $0x20] sm:$0xff]
        %v4523 = vld [vmem:[#allocation3 + $0x28] sm:$0xff]
        %v4524 = vld [vmem:[#allocation3 + $0x30] sm:$0xff]
        %v4525 = vld [vmem:[#allocation3 + $0x38] sm:$0xff]
        %4526 = vmatprep.subr.mxu0 0.0
        %4527 = vmatpush1.msra.mxu0 %v4420
        %4528 = vmatprep.subr.mxu0 0.0
        %4529 = vmatpush1.msra.mxu0 %v4419
        %4530 = vmatprep.subr.mxu0 0.0
        %4531 = vmatpush1.msra.mxu0 %v4418
        %4532 = vmatprep.subr.mxu0 0.0
        %4533 = vmatpush1.msra.mxu0 %v4417
        %4534 = vmatprep.subr.mxu0 0.0
        %4535 = vmatpush1.msra.mxu0 %v4416
        %4536 = vmatprep.subr.mxu0 0.0
        %4537 = vmatpush1.msra.mxu0 %v4415
        %4538 = vmatprep.subr.mxu0 0.0
        %4539 = vmatpush1.msra.mxu0 %v4414
        %4540 = vmatprep.subr.mxu0 0.0
        %4541 = vmatpush1.msra.mxu0 %v4413
        %4542 = vmatprep.subr.mxu0 0.0
        %4543 = vmatpush1.msra.mxu0 %v4412
        %4544 = vmatprep.subr.mxu0 0.0
        %4545 = vmatpush1.msra.mxu0 %v4411
        %4546 = vmatprep.subr.mxu0 0.0
        %4547 = vmatpush1.msra.mxu0 %v4410
        %4548 = vmatprep.subr.mxu0 0.0
        %4549 = vmatpush1.msra.mxu0 %v4409
        %4550 = vmatprep.subr.mxu0 0.0
        %4551 = vmatpush1.msra.mxu0 %v4408
        %4552 = vmatprep.subr.mxu0 0.0
        %4553 = vmatpush1.msra.mxu0 %v4407
        %4554 = vmatprep.subr.mxu0 0.0
        %4555 = vmatpush1.msra.mxu0 %v4406
        %4556 = vmatprep.subr.mxu0 0.0
        %4557 = vmatpush1.msra.mxu0 %v4405
        %4558 = vmatprep.subr.mxu0 0.0
        %4559 = vmatpush2.msra.mxu0 %v4436
        %4560 = vmatprep.subr.mxu0 0.0
        %4561 = vmatpush2.msra.mxu0 %v4435
        %4562 = vmatprep.subr.mxu0 0.0
        %4563 = vmatpush2.msra.mxu0 %v4434
        %4564 = vmatprep.subr.mxu0 0.0
        %4565 = vmatpush2.msra.mxu0 %v4433
        %4566 = vmatprep.subr.mxu0 0.0
        %4567 = vmatpush2.msra.mxu0 %v4432
        %4568 = vmatprep.subr.mxu0 0.0
        %4569 = vmatpush2.msra.mxu0 %v4431
        %4570 = vmatprep.subr.mxu0 0.0
        %4571 = vmatpush2.msra.mxu0 %v4430
        %4572 = vmatprep.subr.mxu0 0.0
        %4573 = vmatpush2.msra.mxu0 %v4429
        %4574 = vmatprep.subr.mxu0 0.0
        %4575 = vmatpush2.msra.mxu0 %v4428
        %4576 = vmatprep.subr.mxu0 0.0
        %4577 = vmatpush2.msra.mxu0 %v4427
        %4578 = vmatprep.subr.mxu0 0.0
        %4579 = vmatpush2.msra.mxu0 %v4426
        %4580 = vmatprep.subr.mxu0 0.0
        %4581 = vmatpush2.msra.mxu0 %v4425
        %4582 = vmatprep.subr.mxu0 0.0
        %4583 = vmatpush2.msra.mxu0 %v4424
        %4584 = vmatprep.subr.mxu0 0.0
        %4585 = vmatpush2.msra.mxu0 %v4423
        %4586 = vmatprep.subr.mxu0 0.0
        %4587 = vmatpush2.msra.mxu0 %v4422
        %4588 = vmatprep.subr.mxu0 0.0
        %4589 = vmatpush2.msra.mxu0 %v4421
        %4590 = vmatprep.mubr.f32.mxu0 %v4520
        %4591 = vmatmul.mubr.f32.gmra.mxu0 %v4519
        %v4592 = vpop.f32.mrf.mxu0
        %v4593 = vadd.f32 0.0, %v4592
        %v4594 = vpop.f32.mrf.mxu0
        %4595 = vdwg.mxu0
        %4596 = vmatprep.subr.mxu0 0.0
        %4597 = vmatpush1.msra.mxu0 %v4452
        %4598 = vmatprep.subr.mxu0 0.0
        %4599 = vmatpush1.msra.mxu0 %v4451
        %4600 = vmatprep.subr.mxu0 0.0
        %4601 = vmatpush1.msra.mxu0 %v4450
        %4602 = vmatprep.subr.mxu0 0.0
        %4603 = vmatpush1.msra.mxu0 %v4449
        %4604 = vmatprep.subr.mxu0 0.0
        %4605 = vmatpush1.msra.mxu0 %v4448
        %4606 = vmatprep.subr.mxu0 0.0
        %4607 = vmatpush1.msra.mxu0 %v4447
        %4608 = vmatprep.subr.mxu0 0.0
        %4609 = vmatpush1.msra.mxu0 %v4446
        %4610 = vmatprep.subr.mxu0 0.0
        %4611 = vmatpush1.msra.mxu0 %v4445
        %4612 = vmatprep.subr.mxu0 0.0
        %4613 = vmatpush1.msra.mxu0 %v4444
        %4614 = vmatprep.subr.mxu0 0.0
        %4615 = vmatpush1.msra.mxu0 %v4443
        %4616 = vmatprep.subr.mxu0 0.0
        %4617 = vmatpush1.msra.mxu0 %v4442
        %4618 = vmatprep.subr.mxu0 0.0
        %4619 = vmatpush1.msra.mxu0 %v4441
        %4620 = vmatprep.subr.mxu0 0.0
        %4621 = vmatpush1.msra.mxu0 %v4440
        %4622 = vmatprep.subr.mxu0 0.0
        %4623 = vmatpush1.msra.mxu0 %v4439
        %4624 = vmatprep.subr.mxu0 0.0
        %4625 = vmatpush1.msra.mxu0 %v4438
        %4626 = vmatprep.subr.mxu0 0.0
        %4627 = vmatpush1.msra.mxu0 %v4437
        %4628 = vmatprep.subr.mxu0 0.0
        %4629 = vmatpush2.msra.mxu0 %v4468
        %4630 = vmatprep.subr.mxu0 0.0
        %4631 = vmatpush2.msra.mxu0 %v4467
        %4632 = vmatprep.subr.mxu0 0.0
        %4633 = vmatpush2.msra.mxu0 %v4466
        %4634 = vmatprep.subr.mxu0 0.0
        %4635 = vmatpush2.msra.mxu0 %v4465
        %4636 = vmatprep.subr.mxu0 0.0
        %4637 = vmatpush2.msra.mxu0 %v4464
        %4638 = vmatprep.subr.mxu0 0.0
        %4639 = vmatpush2.msra.mxu0 %v4463
        %4640 = vmatprep.subr.mxu0 0.0
        %4641 = vmatpush2.msra.mxu0 %v4462
        %4642 = vmatprep.subr.mxu0 0.0
        %4643 = vmatpush2.msra.mxu0 %v4461
        %4644 = vmatprep.subr.mxu0 0.0
        %4645 = vmatpush2.msra.mxu0 %v4460
        %4646 = vmatprep.subr.mxu0 0.0
        %4647 = vmatpush2.msra.mxu0 %v4459
        %4648 = vmatprep.subr.mxu0 0.0
        %4649 = vmatpush2.msra.mxu0 %v4458
        %4650 = vmatprep.subr.mxu0 0.0
        %4651 = vmatpush2.msra.mxu0 %v4457
        %4652 = vmatprep.subr.mxu0 0.0
        %4653 = vmatpush2.msra.mxu0 %v4456
        %4654 = vmatprep.subr.mxu0 0.0
        %4655 = vmatpush2.msra.mxu0 %v4455
        %4656 = vmatprep.subr.mxu0 0.0
        %4657 = vmatpush2.msra.mxu0 %v4454
        %4658 = vmatprep.subr.mxu0 0.0
        %4659 = vmatpush2.msra.mxu0 %v4453
        %4660 = vmatprep.mubr.f32.mxu0 %v4522
        %4661 = vmatmul.mubr.f32.gmra.mxu0 %v4521
        %v4662 = vpop.f32.mrf.mxu0
        %v4663 = vadd.f32 %v4593, %v4662
        %v4664 = vpop.f32.mrf.mxu0
        %4665 = vdwg.mxu0
        %4666 = vmatprep.subr.mxu0 0.0
        %4667 = vmatpush1.msra.mxu0 %v4484
        %4668 = vmatprep.subr.mxu0 0.0
        %4669 = vmatpush1.msra.mxu0 %v4483
        %4670 = vmatprep.subr.mxu0 0.0
        %4671 = vmatpush1.msra.mxu0 %v4482
        %4672 = vmatprep.subr.mxu0 0.0
        %4673 = vmatpush1.msra.mxu0 %v4481
        %4674 = vmatprep.subr.mxu0 0.0
        %4675 = vmatpush1.msra.mxu0 %v4480
        %4676 = vmatprep.subr.mxu0 0.0
        %4677 = vmatpush1.msra.mxu0 %v4479
        %4678 = vmatprep.subr.mxu0 0.0
        %4679 = vmatpush1.msra.mxu0 %v4478
        %4680 = vmatprep.subr.mxu0 0.0
        %4681 = vmatpush1.msra.mxu0 %v4477
        %4682 = vmatprep.subr.mxu0 0.0
        %4683 = vmatpush1.msra.mxu0 %v4476
        %4684 = vmatprep.subr.mxu0 0.0
        %4685 = vmatpush1.msra.mxu0 %v4475
        %4686 = vmatprep.subr.mxu0 0.0
        %4687 = vmatpush1.msra.mxu0 %v4474
        %4688 = vmatprep.subr.mxu0 0.0
        %4689 = vmatpush1.msra.mxu0 %v4473
        %4690 = vmatprep.subr.mxu0 0.0
        %4691 = vmatpush1.msra.mxu0 %v4472
        %4692 = vmatprep.subr.mxu0 0.0
        %4693 = vmatpush1.msra.mxu0 %v4471
        %4694 = vmatprep.subr.mxu0 0.0
        %4695 = vmatpush1.msra.mxu0 %v4470
        %4696 = vmatprep.subr.mxu0 0.0
        %4697 = vmatpush1.msra.mxu0 %v4469
        %4698 = vmatprep.subr.mxu0 0.0
        %4699 = vmatpush2.msra.mxu0 %v4500
        %4700 = vmatprep.subr.mxu0 0.0
        %4701 = vmatpush2.msra.mxu0 %v4499
        %4702 = vmatprep.subr.mxu0 0.0
        %4703 = vmatpush2.msra.mxu0 %v4498
        %4704 = vmatprep.subr.mxu0 0.0
        %4705 = vmatpush2.msra.mxu0 %v4497
        %4706 = vmatprep.subr.mxu0 0.0
        %4707 = vmatpush2.msra.mxu0 %v4496
        %4708 = vmatprep.subr.mxu0 0.0
        %4709 = vmatpush2.msra.mxu0 %v4495
        %4710 = vmatprep.subr.mxu0 0.0
        %4711 = vmatpush2.msra.mxu0 %v4494
        %4712 = vmatprep.subr.mxu0 0.0
        %4713 = vmatpush2.msra.mxu0 %v4493
        %4714 = vmatprep.subr.mxu0 0.0
        %4715 = vmatpush2.msra.mxu0 %v4492
        %4716 = vmatprep.subr.mxu0 0.0
        %4717 = vmatpush2.msra.mxu0 %v4491
        %4718 = vmatprep.subr.mxu0 0.0
        %4719 = vmatpush2.msra.mxu0 %v4490
        %4720 = vmatprep.subr.mxu0 0.0
        %4721 = vmatpush2.msra.mxu0 %v4489
        %4722 = vmatprep.subr.mxu0 0.0
        %4723 = vmatpush2.msra.mxu0 %v4488
        %4724 = vmatprep.subr.mxu0 0.0
        %4725 = vmatpush2.msra.mxu0 %v4487
        %4726 = vmatprep.subr.mxu0 0.0
        %4727 = vmatpush2.msra.mxu0 %v4486
        %4728 = vmatprep.subr.mxu0 0.0
        %4729 = vmatpush2.msra.mxu0 %v4485
        %4730 = vmatprep.mubr.f32.mxu0 %v4524
        %4731 = vmatmul.mubr.f32.gmra.mxu0 %v4523
        %v4732 = vpop.f32.mrf.mxu0
        %v4733 = vadd.f32 %v4663, %v4732
        %v4734 = vpop.f32.mrf.mxu0
        %4735 = vdwg.mxu0
        %4736 = vmatprep.subr.mxu0 0.0
        %4737 = vmatpush1.msra.mxu0 %v4516
        %4738 = vmatprep.subr.mxu0 0.0
        %4739 = vmatpush1.msra.mxu0 %v4515
        %4740 = vmatprep.subr.mxu0 0.0
        %4741 = vmatpush1.msra.mxu0 %v4514
        %4742 = vmatprep.subr.mxu0 0.0
        %4743 = vmatpush1.msra.mxu0 %v4513
        %4744 = vmatprep.subr.mxu0 0.0
        %4745 = vmatpush1.msra.mxu0 %v4512
        %4746 = vmatprep.subr.mxu0 0.0
        %4747 = vmatpush1.msra.mxu0 %v4511
        %4748 = vmatprep.subr.mxu0 0.0
        %4749 = vmatpush1.msra.mxu0 %v4510
        %4750 = vmatprep.subr.mxu0 0.0
        %4751 = vmatpush1.msra.mxu0 %v4509
        %4752 = vmatprep.subr.mxu0 0.0
        %4753 = vmatpush1.msra.mxu0 %v4508
        %4754 = vmatprep.subr.mxu0 0.0
        %4755 = vmatpush1.msra.mxu0 %v4507
        %4756 = vmatprep.subr.mxu0 0.0
        %4757 = vmatpush1.msra.mxu0 %v4506
        %4758 = vmatprep.subr.mxu0 0.0
        %4759 = vmatpush1.msra.mxu0 %v4505
        %4760 = vmatprep.subr.mxu0 0.0
        %4761 = vmatpush1.msra.mxu0 %v4504
        %4762 = vmatprep.subr.mxu0 0.0
        %4763 = vmatpush1.msra.mxu0 %v4503
        %4764 = vmatprep.subr.mxu0 0.0
        %4765 = vmatpush1.msra.mxu0 %v4502
        %4766 = vmatprep.subr.mxu0 0.0
        %4767 = vmatpush1.msra.mxu0 %v4501
        %4768 = vmatprep.subr.mxu0 0.0
        %4769 = vmatpush2.msra.mxu0 0.0
        %4770 = vmatprep.subr.mxu0 0.0
        %4771 = vmatpush2.msra.mxu0 0.0
        %4772 = vmatprep.subr.mxu0 0.0
        %4773 = vmatpush2.msra.mxu0 0.0
        %4774 = vmatprep.subr.mxu0 0.0
        %4775 = vmatpush2.msra.mxu0 0.0
        %4776 = vmatprep.subr.mxu0 0.0
        %4777 = vmatpush2.msra.mxu0 0.0
        %4778 = vmatprep.subr.mxu0 0.0
        %4779 = vmatpush2.msra.mxu0 0.0
        %4780 = vmatprep.subr.mxu0 0.0
        %4781 = vmatpush2.msra.mxu0 0.0
        %4782 = vmatprep.subr.mxu0 0.0
        %4783 = vmatpush2.msra.mxu0 0.0
        %4784 = vmatprep.subr.mxu0 0.0
        %4785 = vmatpush2.msra.mxu0 0.0
        %4786 = vmatprep.subr.mxu0 0.0
        %4787 = vmatpush2.msra.mxu0 0.0
        %4788 = vmatprep.subr.mxu0 0.0
        %4789 = vmatpush2.msra.mxu0 0.0
        %4790 = vmatprep.subr.mxu0 0.0
        %4791 = vmatpush2.msra.mxu0 0.0
        %4792 = vmatprep.subr.mxu0 0.0
        %4793 = vmatpush2.msra.mxu0 0.0
        %4794 = vmatprep.subr.mxu0 0.0
        %4795 = vmatpush2.msra.mxu0 0.0
        %4796 = vmatprep.subr.mxu0 0.0
        %4797 = vmatpush2.msra.mxu0 0.0
        %4798 = vmatprep.subr.mxu0 0.0
        %4799 = vmatpush2.msra.mxu0 0.0
        %4800 = vmatprep.mubr.f32.mxu0 0.0
        %4801 = vmatmul.mubr.f32.gmra.mxu0 %v4525
        %v4802 = vpop.f32.mrf.mxu0
        %v4803 = vadd.f32 %v4733, %v4802
        %v4804 = vpop.f32.mrf.mxu0
        %4805 = vdwg.mxu0
        %v4807 = vrot.slane %v4803, 1
        %4808 = vrot.lane.b32.xlu0 %v4807, 118
        %v4809 = vpop.permute.xlu0 %4808
        %v4811 = vadd.f32 %v4803, %v4809
        %v4812 = vrot.slane %v4803, 2
        %4813 = vrot.lane.b32.xlu0 %v4812, 108
        %v4814 = vpop.permute.xlu0 %4813
        %v4816 = vadd.f32 %v4811, %v4814
        %v4817 = vrot.slane %v4803, 3
        %4818 = vrot.lane.b32.xlu0 %v4817, 98
        %v4819 = vpop.permute.xlu0 %4818
        %v4821 = vadd.f32 %v4816, %v4819
        %v4822 = vrot.slane %v4803, 4
        %4823 = vrot.lane.b32.xlu0 %v4822, 88
        %v4824 = vpop.permute.xlu0 %4823
        %v4826 = vadd.f32 %v4821, %v4824
        %v4827 = vrot.slane %v4803, 5
        %4828 = vrot.lane.b32.xlu0 %v4827, 78
        %v4829 = vpop.permute.xlu0 %4828
        %v4831 = vadd.f32 %v4826, %v4829
        %v4832 = vrot.slane %v4803, 6
        %4833 = vrot.lane.b32.xlu0 %v4832, 68
        %v4834 = vpop.permute.xlu0 %4833
        %v4836 = vadd.f32 %v4831, %v4834
        %v4837 = vrot.slane %v4803, 7
        %4838 = vrot.lane.b32.xlu0 %v4837, 58
        %v4839 = vpop.permute.xlu0 %4838
        %v4841 = vadd.f32 %v4836, %v4839
        %vm4842 = vcmask 80896
        %v4843 = vsel %vm4842, %v4841, 0.0
        %vm4844 = vcmp.eq.s32.totalorder %v4518, 0
        %v4845 = vsel %vm4844, 1.0, 0.0
        %v4846 = vmul.f32 %v4845, %v4843
        %v4847 = vadd.f32 %v4846, 0.0
        %v4848 = vld [vmem:[%s5] sm:$0x1]
        %v4849 = vadd.f32 %v4847, %v4848
        %4850 = vst [vmem:[%s243] sm:$0x1] %v4849
        %s4851 = sand.u32 %s159, 1
        %s4852 = scalar_lea.sflag [#allocation6], %s4851
        %s4853 = sand.u32 %s159, 1
        %s4854 = scalar_lea.vmem [#allocation5], %s4853
        // Predicated region
        $region45: #{tpu_custom_call.1} parent=43 // pred_check
          %p4855 = pneg %p169
        $region46: #{tpu_custom_call.1} parent=43 // pred_check_branch
          %4857 = sbr.rel (%p4855) target = $region48
        $region47: #{tpu_custom_call.1} parent=43 // pred_region
          %s4859 = ssub.s32 16, 16
          %4860 = vsyncadd %s4852, %s4859
          %s4861 = smul.addr %s20, 16
          %s4862 = scalar_lea.hbm %s6, %s4861
          %s4864 = sshll.u32 %s4854, 4
          %s4865 = int_to_ptr.vmem [resolvable:$true] %s4864
          %4867 = dma.vmem_to_hbm [thread:$0]  %s4865, 16, %s4862, %s4852
        $region48: #{tpu_custom_call.1} parent=43 // pred_fallthru
          _
      $region44: #{tpu_custom_call.1} parent=5 // pred_fallthru
        _
      %p4868 = scmp.le.s32.totalorder 2, %s15
      // Predicated region
      $region49: #{tpu_custom_call.1} parent=5 // pred_check
        %p4869 = pneg %p4868
      $region50: #{tpu_custom_call.1} parent=5 // pred_check_branch
        %4871 = sbr.rel (%p4869) target = $region52
      $region51: #{tpu_custom_call.1} parent=5 // pred_region
        %s4872 = ssub.s32 %s15, 2
        // Predicated region
        $region53: #{tpu_custom_call.1} parent=51 // pred_check
          %p4873 = pneg %p175
        $region54: #{tpu_custom_call.1} parent=51 // pred_check_branch
          %4875 = sbr.rel (%p4873) target = $region56
        $region55: #{tpu_custom_call.1} parent=51 // pred_region
          %s4876 = sand.u32 %s160, 1
          %s4877 = scalar_lea.sflag [#allocation6], %s4876
          %s4878 = sand.u32 %s160, 1
          %s4879 = scalar_lea.vmem [#allocation5], %s4878
          %4880 = dma.done %s4877, 16
        $region56: #{tpu_custom_call.1} parent=51 // pred_fallthru
          _
      $region52: #{tpu_custom_call.1} parent=5 // pred_fallthru
        _
    $region6: #{tpu_custom_call.1} parent=1 // loop_footer
      %s19 = sadd.s32 1, %s15
    $region7: #{tpu_custom_call.1} parent=1 // loop_footer_branch
      %14 = sbr.rel target = $region3
    $region8: #{tpu_custom_call.1} parent=1 // loop_exit
      _
    %4881 = vsyncpa [#allocation6], 1
    %s4882 = scalar_lea.sflag [#allocation6], 1
    %4883 = vsyncpa %s4882, 1

</llo_original>
